<compile_context>
chip_gen: v6e
topology: v6e:2x2x1
jax: 0.10.0
libtpu: 0.0.40
codegen_flags: <defaults>
</compile_context>

<pallas_src>
import functools
import math

import jax
import jax.numpy as jnp
from jax.experimental import pallas as pl
from jax.experimental.pallas import tpu as pltpu


# ---------------------------- in-kernel helpers ----------------------------

def _relu(x):
    return jnp.maximum(x, 0.0)


def _shift_right(x):
    """y[:, l] = x[:, l - 1], zero at l == 0 (lane shift via concat)."""
    zero = jnp.zeros((x.shape[0], 1), x.dtype)
    return jnp.concatenate([zero, x[:, :-1]], axis=-1)


def _shift_left(x):
    """y[:, l] = x[:, l + 1], zero at l == L - 1."""
    zero = jnp.zeros((x.shape[0], 1), x.dtype)
    return jnp.concatenate([x[:, 1:], zero], axis=-1)


def _conv3(x, w, b):
    """K=3, stride-1, 'same' Conv1d in [C, L] layout.

    x: (Cin, L) bf16; w: (3, Cout, Cin) bf16 (tap 0 multiplies x[l-1]);
    b: (Cout, 1) f32.  Three per-tap MXU matmuls accumulated in f32.
    Returns (Cout, L) f32.
    """
    acc = jnp.dot(w[0], _shift_right(x), preferred_element_type=jnp.float32)
    acc = acc + jnp.dot(w[1], x, preferred_element_type=jnp.float32)
    acc = acc + jnp.dot(w[2], _shift_left(x), preferred_element_type=jnp.float32)
    return acc + b


def _zero_one(cond):
    return jnp.where(cond, 1.0, 0.0).astype(jnp.bfloat16)


# ---------------------------- Pallas kernels ----------------------------

def _encoder_kernel(x_ref, dw1, db1, dw2, db2,
                    fw1, fb1, fw2, fb2, fw3, fb3, o_ref, *, blocks, half):
    """Downsampler (conv+ReLU, conv+ReLU, maxpool) + full GlowFlow chain, fused."""
    bf16 = jnp.bfloat16
    # ---- Downsampler ----
    h = _relu(_conv3(x_ref[...], dw1[...], db1[...]))
    h = _relu(_conv3(h.astype(bf16), dw2[...], db2[...]))
    # MaxPool1d(3, 2, 1): window max (lane shifts) then even-lane selection.
    m = jnp.maximum(jnp.maximum(_shift_right(h), h), _shift_left(h))
    L = m.shape[1]
    Lo = L // 2
    li = jax.lax.broadcasted_iota(jnp.int32, (L, Lo), 0)
    ji = jax.lax.broadcasted_iota(jnp.int32, (L, Lo), 1)
    sel = _zero_one(li == 2 * ji)                                      # (L, Lo)
    x = jnp.dot(m.astype(bf16), sel, preferred_element_type=jnp.float32)  # (C, Lo)

    # ---- GlowFlow: `blocks` coupling blocks; activation never leaves VMEM ----
    # TODO(synk): GlowBlock's source was not in the provided excerpt; implemented
    # as the standard Glow affine coupling (scale = sigmoid(log_s + 2), additive
    # shift on the second half) driven by AffineInner(channels // 2 -> channels).
    xa = x[:half]                      # untransformed half (f32, feeds AffineInner)
    xa_b = xa.astype(bf16)
    xb = x[half:]                      # transformed half, carried in f32
    for blk in range(blocks):
        h1 = _relu(_conv3(xa_b, fw1[blk], fb1[blk]))                    # k=3
        h2 = _relu(jnp.dot(fw2[blk], h1.astype(bf16),                   # k=1
                           preferred_element_type=jnp.float32) + fb2[blk])
        st = _conv3(h2.astype(bf16), fw3[blk], fb3[blk])                # k=3, (C, Lo)
        log_s, t = st[:half], st[half:]
        s = jax.nn.sigmoid(log_s + 2.0)                                 # EUP
        xb = (xb + t) * s
    o_ref[...] = jnp.concatenate([xa, xb], axis=0).astype(o_ref.dtype)


def _decoder_kernel(*refs, has_next):
    """Upsampler (2x nearest + conv+ReLU + conv+ReLU) with the skip-sum fused.

    One grid cell handles one (branch, batch) pair; the branch axis selects the
    stacked p/s/e decoder weights via the BlockSpec index_map.
    """
    bf16 = jnp.bfloat16
    if has_next:
        x_ref, nxt_ref, w1, b1, w2, b2, o_ref = refs
    else:
        x_ref, w1, b1, w2, b2, o_ref = refs
    x = x_ref[...].astype(jnp.float32)
    if has_next:
        x = x + nxt_ref[...].astype(jnp.float32)       # p = x + p_n (fused)
    L = x.shape[1]
    # nn.Upsample(scale_factor=2), nearest: lane interleave via a tiny 0/1 matmul
    ri = jax.lax.broadcasted_iota(jnp.int32, (L, 2 * L), 0)
    ci = jax.lax.broadcasted_iota(jnp.int32, (L, 2 * L), 1)
    rep = _zero_one(jnp.logical_or(ci == 2 * ri, ci == 2 * ri + 1))     # (L, 2L)
    up = jnp.dot(x.astype(bf16), rep, preferred_element_type=jnp.float32)
    h = _relu(_conv3(up.astype(bf16), w1[...], b1[...]))
    h = _relu(_conv3(h.astype(bf16), w2[...], b2[...]))
    o_ref[...] = h.astype(o_ref.dtype)


def _final_kernel(x_ref, w_ref, b_ref, o_ref):
    """Final Conv1d(3, 1, 3, 1, 1) for one (branch, batch) pair, f32 output."""
    o_ref[...] = _conv3(x_ref[...], w_ref[...], b_ref[...]).astype(o_ref.dtype)


# ---------------------------- pallas_call wrappers ----------------------------

_VMEM_LIMIT = 32 * 1024 * 1024   # safe on all generations (v7x physical = 64 MiB)


def _cparams(n_axes):
    return pltpu.CompilerParams(
        dimension_semantics=("parallel",) * n_axes,
        vmem_limit_bytes=_VMEM_LIMIT)


def _wspec(shape):
    zeros = (0,) * len(shape)
    return pl.BlockSpec(shape, lambda *_, _z=zeros: _z)


def encoder(p_ds, p_flow, x):
    """Fused Downsampler + GlowFlow for one level. x: (N, Cin, L) bf16."""
    N, Cin, L = x.shape
    assert L % 2 == 0, "MaxPool1d(3,2,1) fast path assumes even L"
    C = p_ds["w1"].shape[1]
    blocks = p_flow["w1"].shape[0]
    half = C // 2
    Lo = L // 2
    kernel = functools.partial(_encoder_kernel, blocks=blocks, half=half)
    return pl.pallas_call(
        kernel,
        out_shape=jax.ShapeDtypeStruct((N, C, Lo), jnp.bfloat16),
        grid=(N,),
        in_specs=[
            pl.BlockSpec((None, Cin, L), lambda n: (n, 0, 0)),
            _wspec((3, C, Cin)), _wspec((C, 1)),
            _wspec((3, C, C)), _wspec((C, 1)),
            _wspec((blocks, 3, half, half)), _wspec((blocks, half, 1)),
            _wspec((blocks, half, half)), _wspec((blocks, half, 1)),
            _wspec((blocks, 3, C, half)), _wspec((blocks, C, 1)),
        ],
        out_specs=pl.BlockSpec((None, C, Lo), lambda n: (n, 0, 0)),
        compiler_params=_cparams(1),
    )(x, p_ds["w1"], p_ds["b1"], p_ds["w2"], p_ds["b2"],
      p_flow["w1"], p_flow["b1"], p_flow["w2"], p_flow["b2"],
      p_flow["w3"], p_flow["b3"])


def decoder(p_dec, x, nxt=None):
    """Fused 3-branch Upsampler decoder for one level.

    x: (N, C, L) flow output; nxt: optional (3, N, C, L) next-level decoder
    output (the skip-sum is done in-kernel).  Returns (3, N, Cdec, 2L).
    """
    N, C, L = x.shape
    Cdec = p_dec["w1"].shape[2]
    has_next = nxt is not None
    kernel = functools.partial(_decoder_kernel, has_next=has_next)
    in_specs = [pl.BlockSpec((None, C, L), lambda b, n: (n, 0, 0))]
    args = [x]
    if has_next:
        in_specs.append(pl.BlockSpec((None, None, C, L), lambda b, n: (b, n, 0, 0)))
        args.append(nxt)
    in_specs += [
        pl.BlockSpec((None, 3, Cdec, C), lambda b, n: (b, 0, 0, 0)),
        pl.BlockSpec((None, Cdec, 1), lambda b, n: (b, 0, 0)),
        pl.BlockSpec((None, 3, Cdec, Cdec), lambda b, n: (b, 0, 0, 0)),
        pl.BlockSpec((None, Cdec, 1), lambda b, n: (b, 0, 0)),
    ]
    args += [p_dec["w1"], p_dec["b1"], p_dec["w2"], p_dec["b2"]]
    return pl.pallas_call(
        kernel,
        out_shape=jax.ShapeDtypeStruct((3, N, Cdec, 2 * L), jnp.bfloat16),
        grid=(3, N),
        in_specs=in_specs,
        out_specs=pl.BlockSpec((None, None, Cdec, 2 * L), lambda b, n: (b, n, 0, 0)),
        compiler_params=_cparams(2),
    )(*args)


def final_conv(p_fin, x3):
    """Fused p/s/e final Conv1d(3, 1, 3, 1, 1). x3: (3, N, Cin, L)."""
    _, N, Cin, L = x3.shape
    out = pl.pallas_call(
        _final_kernel,
        out_shape=jax.ShapeDtypeStruct((3, N, 1, L), jnp.float32),
        grid=(3, N),
        in_specs=[
            pl.BlockSpec((None, None, Cin, L), lambda b, n: (b, n, 0, 0)),
            pl.BlockSpec((None, 3, 1, Cin), lambda b, n: (b, 0, 0, 0)),
            pl.BlockSpec((None, 1, 1), lambda b, n: (b, 0, 0)),
        ],
        out_specs=pl.BlockSpec((None, None, 1, L), lambda b, n: (b, n, 0, 0)),
        compiler_params=_cparams(2),
    )(x3, p_fin["w"], p_fin["b"])
    return out[0], out[1], out[2]


# ---------------------------- parameters ----------------------------

def _uniform(key, shape, bound, dtype):
    return jax.random.uniform(key, shape, jnp.float32, -bound, bound).astype(dtype)


def _conv3_params(key, cin, cout, stack=()):
    kw, kb = jax.random.split(key)
    bound = 1.0 / math.sqrt(cin * 3)
    w = _uniform(kw, stack + (3, cout, cin), bound, jnp.bfloat16)   # (.., tap, Cout, Cin)
    b = _uniform(kb, stack + (cout, 1), bound, jnp.float32)
    return w, b


def _conv1_params(key, cin, cout, stack=()):
    kw, kb = jax.random.split(key)
    bound = 1.0 / math.sqrt(cin)
    w = _uniform(kw, stack + (cout, cin), bound, jnp.bfloat16)
    b = _uniform(kb, stack + (cout, 1), bound, jnp.float32)
    return w, b


def init_glow_network(key, in_channels, levels, blocks):
    keys = iter(jax.random.split(key, levels * 7 + 1))
    params = {"ds": [], "flow": [], "dec": []}
    channels = in_channels
    for _ in range(levels):
        out_c = int(channels * 1.5)
        out_c -= out_c % 2
        half = out_c // 2
        dw1, db1 = _conv3_params(next(keys), channels, out_c)
        dw2, db2 = _conv3_params(next(keys), out_c, out_c)
        params["ds"].append({"w1": dw1, "b1": db1, "w2": dw2, "b2": db2})
        # GlowFlow: per-block weights stacked along a leading `blocks` dim.
        fw1, fb1 = _conv3_params(next(keys), half, half, stack=(blocks,))
        fw2, fb2 = _conv1_params(next(keys), half, half, stack=(blocks,))
        fw3, fb3 = _conv3_params(next(keys), half, out_c, stack=(blocks,))
        params["flow"].append({"w1": fw1, "b1": fb1, "w2": fw2, "b2": fb2,
                               "w3": fw3, "b3": fb3})
        # p / s / e decoder weights stacked along a leading branch dim of 3.
        uw1, ub1 = _conv3_params(next(keys), out_c, channels, stack=(3,))
        uw2, ub2 = _conv3_params(next(keys), channels, channels, stack=(3,))
        params["dec"].append({"w1": uw1, "b1": ub1, "w2": uw2, "b2": ub2})
        channels = out_c
    fw, fb = _conv3_params(next(keys), in_channels, 1, stack=(3,))
    params["final"] = {"w": fw, "b": fb}
    return params


# ---------------------------- forward pass ----------------------------

def level_forward(params, levels, i, x):
    x = encoder(params["ds"][i], params["flow"][i], x)          # (N, D_i, L_i/2)
    nxt = level_forward(params, levels, i + 1, x) if i < levels - 1 else None
    return decoder(params["dec"][i], x, nxt)                    # (3, N, C_i, L_i)


def glow_network(params, levels, x_ncl):
    # x_ncl: [N, C, L] (PyTorch layout) == internal [C, L]-on-lanes layout.
    x = x_ncl.astype(jnp.bfloat16)
    stacked = level_forward(params, levels, 0, x)               # (3, N, Cin, L)
    return final_conv(params["final"], stacked)                 # p, s, e: (N, 1, L)


# ---------------------------- main ----------------------------

if __name__ == "__main__":
    key = jax.random.PRNGKey(0)
    kp, kx = jax.random.split(key)

    in_channels, levels, blocks = 3, 2, 1
    N, L = 2, 16  # L must be divisible by 2 ** levels

    params = init_glow_network(kp, in_channels, levels, blocks)
    x = jax.random.normal(kx, (N, in_channels, L), jnp.float32)  # PyTorch NCL layout

    fwd = jax.jit(functools.partial(glow_network, params, levels))
    p, s, e = fwd(x)
    jax.block_until_ready((p, s, e))

    assert p.shape == (N, 1, L) and s.shape == (N, 1, L) and e.shape == (N, 1, L)
    assert all(bool(jnp.isfinite(t).all()) for t in (p, s, e))
    print("KERNEL_OK")
</pallas_src>

<mosaic_0001>
module attributes {stable_mosaic.version = 11 : i64} {
  func.func @_encoder_kernel(%arg0: i32, %arg1: memref<1x3x16xbf16, #tpu.memory_space<vmem>>, %arg2: memref<3x4x3xbf16, #tpu.memory_space<vmem>>, %arg3: memref<4x1xf32, #tpu.memory_space<vmem>>, %arg4: memref<3x4x4xbf16, #tpu.memory_space<vmem>>, %arg5: memref<4x1xf32, #tpu.memory_space<vmem>>, %arg6: memref<1x3x2x2xbf16, #tpu.memory_space<vmem>>, %arg7: memref<1x2x1xf32, #tpu.memory_space<vmem>>, %arg8: memref<1x2x2xbf16, #tpu.memory_space<vmem>>, %arg9: memref<1x2x1xf32, #tpu.memory_space<vmem>>, %arg10: memref<1x3x4x2xbf16, #tpu.memory_space<vmem>>, %arg11: memref<1x4x1xf32, #tpu.memory_space<vmem>>, %arg12: memref<1x4x8xbf16, #tpu.memory_space<vmem>>) attributes {dimension_semantics = [#tpu.dimension_semantics<parallel>], iteration_bounds = array<i64: 2>, scalar_prefetch = 0 : i64, scratch_operands = 0 : i64, tpu.core_type = #tpu.core_type<tc>, window_params = [{transform_indices = @transform_0, window_bounds = array<i64: 1, 3, 16>}, {pipeline_mode = #tpu.pipeline_mode<synchronous>, transform_indices = @transform_1, window_bounds = array<i64: 3, 4, 3>}, {pipeline_mode = #tpu.pipeline_mode<synchronous>, transform_indices = @transform_2, window_bounds = array<i64: 4, 1>}, {pipeline_mode = #tpu.pipeline_mode<synchronous>, transform_indices = @transform_3, window_bounds = array<i64: 3, 4, 4>}, {pipeline_mode = #tpu.pipeline_mode<synchronous>, transform_indices = @transform_4, window_bounds = array<i64: 4, 1>}, {pipeline_mode = #tpu.pipeline_mode<synchronous>, transform_indices = @transform_5, window_bounds = array<i64: 1, 3, 2, 2>}, {pipeline_mode = #tpu.pipeline_mode<synchronous>, transform_indices = @transform_6, window_bounds = array<i64: 1, 2, 1>}, {pipeline_mode = #tpu.pipeline_mode<synchronous>, transform_indices = @transform_7, window_bounds = array<i64: 1, 2, 2>}, {pipeline_mode = #tpu.pipeline_mode<synchronous>, transform_indices = @transform_8, window_bounds = array<i64: 1, 2, 1>}, {pipeline_mode = #tpu.pipeline_mode<synchronous>, transform_indices = @transform_9, window_bounds = array<i64: 1, 3, 4, 2>}, {pipeline_mode = #tpu.pipeline_mode<synchronous>, transform_indices = @transform_10, window_bounds = array<i64: 1, 4, 1>}, {transform_indices = @transform_11, window_bounds = array<i64: 1, 4, 8>}]} {
    %c0 = arith.constant 0 : index
    %c0_0 = arith.constant 0 : index
    %c0_1 = arith.constant 0 : index
    %0 = vector.load %arg1[%c0, %c0_0, %c0_1] : memref<1x3x16xbf16, #tpu.memory_space<vmem>>, vector<1x3x16xbf16>
    %1 = vector.shape_cast %0 : vector<1x3x16xbf16> to vector<3x16xbf16>
    %c0_2 = arith.constant 0 : index
    %c0_3 = arith.constant 0 : index
    %c0_4 = arith.constant 0 : index
    %2 = vector.load %arg2[%c0_2, %c0_3, %c0_4] : memref<3x4x3xbf16, #tpu.memory_space<vmem>>, vector<3x4x3xbf16>
    %c0_5 = arith.constant 0 : index
    %c0_6 = arith.constant 0 : index
    %3 = vector.load %arg3[%c0_5, %c0_6] : memref<4x1xf32, #tpu.memory_space<vmem>>, vector<4x1xf32>
    %4 = vector.extract_strided_slice %2 {offsets = [0, 0, 0], sizes = [1, 4, 3], strides = [1, 1, 1]} : vector<3x4x3xbf16> to vector<1x4x3xbf16>
    %5 = vector.shape_cast %4 : vector<1x4x3xbf16> to vector<4x3xbf16>
    %cst = arith.constant 0.000000e+00 : bf16
    %6 = vector.broadcast %cst : bf16 to vector<3x1xbf16>
    %7 = vector.extract_strided_slice %1 {offsets = [0, 0], sizes = [3, 15], strides = [1, 1]} : vector<3x16xbf16> to vector<3x15xbf16>
    %8 = tpu.concatenate %6, %7 in 1 : vector<3x1xbf16>, vector<3x15xbf16> -> vector<3x16xbf16>
    %cst_7 = arith.constant dense<0.000000e+00> : vector<4x16xf32>
    %9 = tpu.matmul %5, %8, %cst_7 {dimension_numbers = #tpu.dot_dimension_numbers<[1], [0], [0], [1], [0, 0, 1, 1], [], []>} : vector<4x3xbf16>, vector<3x16xbf16>, vector<4x16xf32> -> vector<4x16xf32>
    %10 = vector.extract_strided_slice %2 {offsets = [1, 0, 0], sizes = [1, 4, 3], strides = [1, 1, 1]} : vector<3x4x3xbf16> to vector<1x4x3xbf16>
    %11 = vector.shape_cast %10 : vector<1x4x3xbf16> to vector<4x3xbf16>
    %cst_8 = arith.constant dense<0.000000e+00> : vector<4x16xf32>
    %12 = tpu.matmul %11, %1, %cst_8 {dimension_numbers = #tpu.dot_dimension_numbers<[1], [0], [0], [1], [0, 0, 1, 1], [], []>} : vector<4x3xbf16>, vector<3x16xbf16>, vector<4x16xf32> -> vector<4x16xf32>
    %13 = arith.addf %9, %12 : vector<4x16xf32>
    %14 = vector.extract_strided_slice %2 {offsets = [2, 0, 0], sizes = [1, 4, 3], strides = [1, 1, 1]} : vector<3x4x3xbf16> to vector<1x4x3xbf16>
    %15 = vector.shape_cast %14 : vector<1x4x3xbf16> to vector<4x3xbf16>
    %cst_9 = arith.constant 0.000000e+00 : bf16
    %16 = vector.broadcast %cst_9 : bf16 to vector<3x1xbf16>
    %17 = vector.extract_strided_slice %1 {offsets = [0, 1], sizes = [3, 15], strides = [1, 1]} : vector<3x16xbf16> to vector<3x15xbf16>
    %18 = tpu.concatenate %17, %16 in 1 : vector<3x15xbf16>, vector<3x1xbf16> -> vector<3x16xbf16>
    %cst_10 = arith.constant dense<0.000000e+00> : vector<4x16xf32>
    %19 = tpu.matmul %15, %18, %cst_10 {dimension_numbers = #tpu.dot_dimension_numbers<[1], [0], [0], [1], [0, 0, 1, 1], [], []>} : vector<4x3xbf16>, vector<3x16xbf16>, vector<4x16xf32> -> vector<4x16xf32>
    %20 = arith.addf %13, %19 : vector<4x16xf32>
    %21 = vector.broadcast %3 : vector<4x1xf32> to vector<4x16xf32>
    %22 = arith.addf %20, %21 : vector<4x16xf32>
    %cst_11 = arith.constant 0.000000e+00 : f32
    %23 = vector.broadcast %cst_11 : f32 to vector<4x16xf32>
    %24 = arith.maximumf %22, %23 : vector<4x16xf32>
    %25 = arith.truncf %24 : vector<4x16xf32> to vector<4x16xbf16>
    %c0_12 = arith.constant 0 : index
    %c0_13 = arith.constant 0 : index
    %c0_14 = arith.constant 0 : index
    %26 = vector.load %arg4[%c0_12, %c0_13, %c0_14] : memref<3x4x4xbf16, #tpu.memory_space<vmem>>, vector<3x4x4xbf16>
    %c0_15 = arith.constant 0 : index
    %c0_16 = arith.constant 0 : index
    %27 = vector.load %arg5[%c0_15, %c0_16] : memref<4x1xf32, #tpu.memory_space<vmem>>, vector<4x1xf32>
    %28 = vector.extract_strided_slice %26 {offsets = [0, 0, 0], sizes = [1, 4, 4], strides = [1, 1, 1]} : vector<3x4x4xbf16> to vector<1x4x4xbf16>
    %29 = vector.shape_cast %28 : vector<1x4x4xbf16> to vector<4x4xbf16>
    %cst_17 = arith.constant 0.000000e+00 : bf16
    %30 = vector.broadcast %cst_17 : bf16 to vector<4x1xbf16>
    %31 = vector.extract_strided_slice %25 {offsets = [0, 0], sizes = [4, 15], strides = [1, 1]} : vector<4x16xbf16> to vector<4x15xbf16>
    %32 = tpu.concatenate %30, %31 in 1 : vector<4x1xbf16>, vector<4x15xbf16> -> vector<4x16xbf16>
    %cst_18 = arith.constant dense<0.000000e+00> : vector<4x16xf32>
    %33 = tpu.matmul %29, %32, %cst_18 {dimension_numbers = #tpu.dot_dimension_numbers<[1], [0], [0], [1], [0, 0, 1, 1], [], []>} : vector<4x4xbf16>, vector<4x16xbf16>, vector<4x16xf32> -> vector<4x16xf32>
    %34 = vector.extract_strided_slice %26 {offsets = [1, 0, 0], sizes = [1, 4, 4], strides = [1, 1, 1]} : vector<3x4x4xbf16> to vector<1x4x4xbf16>
    %35 = vector.shape_cast %34 : vector<1x4x4xbf16> to vector<4x4xbf16>
    %cst_19 = arith.constant dense<0.000000e+00> : vector<4x16xf32>
    %36 = tpu.matmul %35, %25, %cst_19 {dimension_numbers = #tpu.dot_dimension_numbers<[1], [0], [0], [1], [0, 0, 1, 1], [], []>} : vector<4x4xbf16>, vector<4x16xbf16>, vector<4x16xf32> -> vector<4x16xf32>
    %37 = arith.addf %33, %36 : vector<4x16xf32>
    %38 = vector.extract_strided_slice %26 {offsets = [2, 0, 0], sizes = [1, 4, 4], strides = [1, 1, 1]} : vector<3x4x4xbf16> to vector<1x4x4xbf16>
    %39 = vector.shape_cast %38 : vector<1x4x4xbf16> to vector<4x4xbf16>
    %cst_20 = arith.constant 0.000000e+00 : bf16
    %40 = vector.broadcast %cst_20 : bf16 to vector<4x1xbf16>
    %41 = vector.extract_strided_slice %25 {offsets = [0, 1], sizes = [4, 15], strides = [1, 1]} : vector<4x16xbf16> to vector<4x15xbf16>
    %42 = tpu.concatenate %41, %40 in 1 : vector<4x15xbf16>, vector<4x1xbf16> -> vector<4x16xbf16>
    %cst_21 = arith.constant dense<0.000000e+00> : vector<4x16xf32>
    %43 = tpu.matmul %39, %42, %cst_21 {dimension_numbers = #tpu.dot_dimension_numbers<[1], [0], [0], [1], [0, 0, 1, 1], [], []>} : vector<4x4xbf16>, vector<4x16xbf16>, vector<4x16xf32> -> vector<4x16xf32>
    %44 = arith.addf %37, %43 : vector<4x16xf32>
    %45 = vector.broadcast %27 : vector<4x1xf32> to vector<4x16xf32>
    %46 = arith.addf %44, %45 : vector<4x16xf32>
    %cst_22 = arith.constant 0.000000e+00 : f32
    %47 = vector.broadcast %cst_22 : f32 to vector<4x16xf32>
    %48 = arith.maximumf %46, %47 : vector<4x16xf32>
    %cst_23 = arith.constant 0.000000e+00 : f32
    %49 = vector.broadcast %cst_23 : f32 to vector<4x1xf32>
    %50 = vector.extract_strided_slice %48 {offsets = [0, 0], sizes = [4, 15], strides = [1, 1]} : vector<4x16xf32> to vector<4x15xf32>
    %51 = tpu.concatenate %49, %50 in 1 : vector<4x1xf32>, vector<4x15xf32> -> vector<4x16xf32>
    %52 = arith.maximumf %51, %48 : vector<4x16xf32>
    %cst_24 = arith.constant 0.000000e+00 : f32
    %53 = vector.broadcast %cst_24 : f32 to vector<4x1xf32>
    %54 = vector.extract_strided_slice %48 {offsets = [0, 1], sizes = [4, 15], strides = [1, 1]} : vector<4x16xf32> to vector<4x15xf32>
    %55 = tpu.concatenate %54, %53 in 1 : vector<4x15xf32>, vector<4x1xf32> -> vector<4x16xf32>
    %56 = arith.maximumf %52, %55 : vector<4x16xf32>
    %57 = tpu.iota {dimensions = array<i32: 0>} : vector<16x8xi32>
    %58 = tpu.iota {dimensions = array<i32: 1>} : vector<16x8xi32>
    %c2_i32 = arith.constant 2 : i32
    %59 = vector.broadcast %c2_i32 : i32 to vector<16x8xi32>
    %60 = arith.muli %59, %58 : vector<16x8xi32>
    %61 = arith.cmpi eq, %57, %60 : vector<16x8xi32>
    %cst_25 = arith.constant 1.000000e+00 : f32
    %cst_26 = arith.constant 0.000000e+00 : f32
    %62 = vector.broadcast %cst_25 : f32 to vector<16x8xf32>
    %63 = vector.broadcast %cst_26 : f32 to vector<16x8xf32>
    %64 = arith.select %61, %62, %63 : vector<16x8xi1>, vector<16x8xf32>
    %65 = arith.truncf %64 : vector<16x8xf32> to vector<16x8xbf16>
    %66 = arith.truncf %56 : vector<4x16xf32> to vector<4x16xbf16>
    %cst_27 = arith.constant dense<0.000000e+00> : vector<4x8xf32>
    %67 = tpu.matmul %66, %65, %cst_27 {dimension_numbers = #tpu.dot_dimension_numbers<[1], [0], [0], [1], [0, 0, 1, 1], [], []>} : vector<4x16xbf16>, vector<16x8xbf16>, vector<4x8xf32> -> vector<4x8xf32>
    %68 = vector.extract_strided_slice %67 {offsets = [0, 0], sizes = [2, 8], strides = [1, 1]} : vector<4x8xf32> to vector<2x8xf32>
    %69 = arith.truncf %68 : vector<2x8xf32> to vector<2x8xbf16>
    %70 = vector.extract_strided_slice %67 {offsets = [2, 0], sizes = [2, 8], strides = [1, 1]} : vector<4x8xf32> to vector<2x8xf32>
    %c0_28 = arith.constant 0 : index
    %c0_29 = arith.constant 0 : index
    %c0_30 = arith.constant 0 : index
    %c0_31 = arith.constant 0 : index
    %71 = vector.load %arg6[%c0_28, %c0_29, %c0_30, %c0_31] : memref<1x3x2x2xbf16, #tpu.memory_space<vmem>>, vector<1x3x2x2xbf16>
    %72 = vector.shape_cast %71 : vector<1x3x2x2xbf16> to vector<3x2x2xbf16>
    %c0_32 = arith.constant 0 : index
    %c0_33 = arith.constant 0 : index
    %c0_34 = arith.constant 0 : index
    %73 = vector.load %arg7[%c0_32, %c0_33, %c0_34] : memref<1x2x1xf32, #tpu.memory_space<vmem>>, vector<1x2x1xf32>
    %74 = vector.shape_cast %73 : vector<1x2x1xf32> to vector<2x1xf32>
    %75 = vector.extract_strided_slice %72 {offsets = [0, 0, 0], sizes = [1, 2, 2], strides = [1, 1, 1]} : vector<3x2x2xbf16> to vector<1x2x2xbf16>
    %76 = vector.shape_cast %75 : vector<1x2x2xbf16> to vector<2x2xbf16>
    %cst_35 = arith.constant 0.000000e+00 : bf16
    %77 = vector.broadcast %cst_35 : bf16 to vector<2x1xbf16>
    %78 = vector.extract_strided_slice %69 {offsets = [0, 0], sizes = [2, 7], strides = [1, 1]} : vector<2x8xbf16> to vector<2x7xbf16>
    %79 = tpu.concatenate %77, %78 in 1 : vector<2x1xbf16>, vector<2x7xbf16> -> vector<2x8xbf16>
    %cst_36 = arith.constant dense<0.000000e+00> : vector<2x8xf32>
    %80 = tpu.matmul %76, %79, %cst_36 {dimension_numbers = #tpu.dot_dimension_numbers<[1], [0], [0], [1], [0, 0, 1, 1], [], []>} : vector<2x2xbf16>, vector<2x8xbf16>, vector<2x8xf32> -> vector<2x8xf32>
    %81 = vector.extract_strided_slice %72 {offsets = [1, 0, 0], sizes = [1, 2, 2], strides = [1, 1, 1]} : vector<3x2x2xbf16> to vector<1x2x2xbf16>
    %82 = vector.shape_cast %81 : vector<1x2x2xbf16> to vector<2x2xbf16>
    %cst_37 = arith.constant dense<0.000000e+00> : vector<2x8xf32>
    %83 = tpu.matmul %82, %69, %cst_37 {dimension_numbers = #tpu.dot_dimension_numbers<[1], [0], [0], [1], [0, 0, 1, 1], [], []>} : vector<2x2xbf16>, vector<2x8xbf16>, vector<2x8xf32> -> vector<2x8xf32>
    %84 = arith.addf %80, %83 : vector<2x8xf32>
    %85 = vector.extract_strided_slice %72 {offsets = [2, 0, 0], sizes = [1, 2, 2], strides = [1, 1, 1]} : vector<3x2x2xbf16> to vector<1x2x2xbf16>
    %86 = vector.shape_cast %85 : vector<1x2x2xbf16> to vector<2x2xbf16>
    %cst_38 = arith.constant 0.000000e+00 : bf16
    %87 = vector.broadcast %cst_38 : bf16 to vector<2x1xbf16>
    %88 = vector.extract_strided_slice %69 {offsets = [0, 1], sizes = [2, 7], strides = [1, 1]} : vector<2x8xbf16> to vector<2x7xbf16>
    %89 = tpu.concatenate %88, %87 in 1 : vector<2x7xbf16>, vector<2x1xbf16> -> vector<2x8xbf16>
    %cst_39 = arith.constant dense<0.000000e+00> : vector<2x8xf32>
    %90 = tpu.matmul %86, %89, %cst_39 {dimension_numbers = #tpu.dot_dimension_numbers<[1], [0], [0], [1], [0, 0, 1, 1], [], []>} : vector<2x2xbf16>, vector<2x8xbf16>, vector<2x8xf32> -> vector<2x8xf32>
    %91 = arith.addf %84, %90 : vector<2x8xf32>
    %92 = vector.broadcast %74 : vector<2x1xf32> to vector<2x8xf32>
    %93 = arith.addf %91, %92 : vector<2x8xf32>
    %cst_40 = arith.constant 0.000000e+00 : f32
    %94 = vector.broadcast %cst_40 : f32 to vector<2x8xf32>
    %95 = arith.maximumf %93, %94 : vector<2x8xf32>
    %c0_41 = arith.constant 0 : index
    %c0_42 = arith.constant 0 : index
    %c0_43 = arith.constant 0 : index
    %96 = vector.load %arg8[%c0_41, %c0_42, %c0_43] : memref<1x2x2xbf16, #tpu.memory_space<vmem>>, vector<1x2x2xbf16>
    %97 = vector.shape_cast %96 : vector<1x2x2xbf16> to vector<2x2xbf16>
    %98 = arith.truncf %95 : vector<2x8xf32> to vector<2x8xbf16>
    %cst_44 = arith.constant dense<0.000000e+00> : vector<2x8xf32>
    %99 = tpu.matmul %97, %98, %cst_44 {dimension_numbers = #tpu.dot_dimension_numbers<[1], [0], [0], [1], [0, 0, 1, 1], [], []>} : vector<2x2xbf16>, vector<2x8xbf16>, vector<2x8xf32> -> vector<2x8xf32>
    %c0_45 = arith.constant 0 : index
    %c0_46 = arith.constant 0 : index
    %c0_47 = arith.constant 0 : index
    %100 = vector.load %arg9[%c0_45, %c0_46, %c0_47] : memref<1x2x1xf32, #tpu.memory_space<vmem>>, vector<1x2x1xf32>
    %101 = vector.shape_cast %100 : vector<1x2x1xf32> to vector<2x1xf32>
    %102 = vector.broadcast %101 : vector<2x1xf32> to vector<2x8xf32>
    %103 = arith.addf %99, %102 : vector<2x8xf32>
    %cst_48 = arith.constant 0.000000e+00 : f32
    %104 = vector.broadcast %cst_48 : f32 to vector<2x8xf32>
    %105 = arith.maximumf %103, %104 : vector<2x8xf32>
    %106 = arith.truncf %105 : vector<2x8xf32> to vector<2x8xbf16>
    %c0_49 = arith.constant 0 : index
    %c0_50 = arith.constant 0 : index
    %c0_51 = arith.constant 0 : index
    %c0_52 = arith.constant 0 : index
    %107 = vector.load %arg10[%c0_49, %c0_50, %c0_51, %c0_52] : memref<1x3x4x2xbf16, #tpu.memory_space<vmem>>, vector<1x3x4x2xbf16>
    %108 = vector.shape_cast %107 : vector<1x3x4x2xbf16> to vector<3x4x2xbf16>
    %c0_53 = arith.constant 0 : index
    %c0_54 = arith.constant 0 : index
    %c0_55 = arith.constant 0 : index
    %109 = vector.load %arg11[%c0_53, %c0_54, %c0_55] : memref<1x4x1xf32, #tpu.memory_space<vmem>>, vector<1x4x1xf32>
    %110 = vector.shape_cast %109 : vector<1x4x1xf32> to vector<4x1xf32>
    %111 = vector.extract_strided_slice %108 {offsets = [0, 0, 0], sizes = [1, 4, 2], strides = [1, 1, 1]} : vector<3x4x2xbf16> to vector<1x4x2xbf16>
    %112 = vector.shape_cast %111 : vector<1x4x2xbf16> to vector<4x2xbf16>
    %cst_56 = arith.constant 0.000000e+00 : bf16
    %113 = vector.broadcast %cst_56 : bf16 to vector<2x1xbf16>
    %114 = vector.extract_strided_slice %106 {offsets = [0, 0], sizes = [2, 7], strides = [1, 1]} : vector<2x8xbf16> to vector<2x7xbf16>
    %115 = tpu.concatenate %113, %114 in 1 : vector<2x1xbf16>, vector<2x7xbf16> -> vector<2x8xbf16>
    %cst_57 = arith.constant dense<0.000000e+00> : vector<4x8xf32>
    %116 = tpu.matmul %112, %115, %cst_57 {dimension_numbers = #tpu.dot_dimension_numbers<[1], [0], [0], [1], [0, 0, 1, 1], [], []>} : vector<4x2xbf16>, vector<2x8xbf16>, vector<4x8xf32> -> vector<4x8xf32>
    %117 = vector.extract_strided_slice %108 {offsets = [1, 0, 0], sizes = [1, 4, 2], strides = [1, 1, 1]} : vector<3x4x2xbf16> to vector<1x4x2xbf16>
    %118 = vector.shape_cast %117 : vector<1x4x2xbf16> to vector<4x2xbf16>
    %cst_58 = arith.constant dense<0.000000e+00> : vector<4x8xf32>
    %119 = tpu.matmul %118, %106, %cst_58 {dimension_numbers = #tpu.dot_dimension_numbers<[1], [0], [0], [1], [0, 0, 1, 1], [], []>} : vector<4x2xbf16>, vector<2x8xbf16>, vector<4x8xf32> -> vector<4x8xf32>
    %120 = arith.addf %116, %119 : vector<4x8xf32>
    %121 = vector.extract_strided_slice %108 {offsets = [2, 0, 0], sizes = [1, 4, 2], strides = [1, 1, 1]} : vector<3x4x2xbf16> to vector<1x4x2xbf16>
    %122 = vector.shape_cast %121 : vector<1x4x2xbf16> to vector<4x2xbf16>
    %cst_59 = arith.constant 0.000000e+00 : bf16
    %123 = vector.broadcast %cst_59 : bf16 to vector<2x1xbf16>
    %124 = vector.extract_strided_slice %106 {offsets = [0, 1], sizes = [2, 7], strides = [1, 1]} : vector<2x8xbf16> to vector<2x7xbf16>
    %125 = tpu.concatenate %124, %123 in 1 : vector<2x7xbf16>, vector<2x1xbf16> -> vector<2x8xbf16>
    %cst_60 = arith.constant dense<0.000000e+00> : vector<4x8xf32>
    %126 = tpu.matmul %122, %125, %cst_60 {dimension_numbers = #tpu.dot_dimension_numbers<[1], [0], [0], [1], [0, 0, 1, 1], [], []>} : vector<4x2xbf16>, vector<2x8xbf16>, vector<4x8xf32> -> vector<4x8xf32>
    %127 = arith.addf %120, %126 : vector<4x8xf32>
    %128 = vector.broadcast %110 : vector<4x1xf32> to vector<4x8xf32>
    %129 = arith.addf %127, %128 : vector<4x8xf32>
    %130 = vector.extract_strided_slice %129 {offsets = [0, 0], sizes = [2, 8], strides = [1, 1]} : vector<4x8xf32> to vector<2x8xf32>
    %131 = vector.extract_strided_slice %129 {offsets = [2, 0], sizes = [2, 8], strides = [1, 1]} : vector<4x8xf32> to vector<2x8xf32>
    %cst_61 = arith.constant 2.000000e+00 : f32
    %132 = vector.broadcast %cst_61 : f32 to vector<2x8xf32>
    %133 = arith.addf %130, %132 : vector<2x8xf32>
    %134 = arith.negf %133 : vector<2x8xf32>
    %135 = math.exp %134 : vector<2x8xf32>
    %cst_62 = arith.constant 1.000000e+00 : f32
    %136 = vector.broadcast %cst_62 : f32 to vector<2x8xf32>
    %137 = arith.addf %136, %135 : vector<2x8xf32>
    %138 = arith.divf %136, %137 : vector<2x8xf32>
    %139 = arith.addf %70, %131 : vector<2x8xf32>
    %140 = arith.mulf %139, %138 : vector<2x8xf32>
    %141 = tpu.concatenate %68, %140 in 0 : vector<2x8xf32>, vector<2x8xf32> -> vector<4x8xf32>
    %142 = arith.truncf %141 : vector<4x8xf32> to vector<4x8xbf16>
    %c0_63 = arith.constant 0 : index
    %c0_64 = arith.constant 0 : index
    %c0_65 = arith.constant 0 : index
    %143 = vector.load %arg12[%c0_63, %c0_64, %c0_65] : memref<1x4x8xbf16, #tpu.memory_space<vmem>>, vector<1x4x8xbf16>
    %144 = vector.shape_cast %143 : vector<1x4x8xbf16> to vector<4x8xbf16>
    %145 = vector.shape_cast %142 : vector<4x8xbf16> to vector<1x4x8xbf16>
    tpu.vector_store %arg12[%c0_63, %c0_64, %c0_65], %145 {strides = array<i32>} : memref<1x4x8xbf16, #tpu.memory_space<vmem>>, vector<1x4x8xbf16>,
    return
  }
  func.func @transform_0(%arg0: i32) -> (i32, i32, i32) {
    %c0_i32 = arith.constant 0 : i32
    %c0_i32_0 = arith.constant 0 : i32
    %c0_i32_1 = arith.constant 0 : i32
    return %arg0, %c0_i32, %c0_i32_0 : i32, i32, i32
  }
  func.func @transform_1(%arg0: i32) -> (i32, i32, i32) {
    %c0_i32 = arith.constant 0 : i32
    %c0_i32_0 = arith.constant 0 : i32
    %c0_i32_1 = arith.constant 0 : i32
    %c0_i32_2 = arith.constant 0 : i32
    return %c0_i32, %c0_i32_0, %c0_i32_1 : i32, i32, i32
  }
  func.func @transform_2(%arg0: i32) -> (i32, i32) {
    %c0_i32 = arith.constant 0 : i32
    %c0_i32_0 = arith.constant 0 : i32
    %c0_i32_1 = arith.constant 0 : i32
    return %c0_i32, %c0_i32_0 : i32, i32
  }
  func.func @transform_3(%arg0: i32) -> (i32, i32, i32) {
    %c0_i32 = arith.constant 0 : i32
    %c0_i32_0 = arith.constant 0 : i32
    %c0_i32_1 = arith.constant 0 : i32
    %c0_i32_2 = arith.constant 0 : i32
    return %c0_i32, %c0_i32_0, %c0_i32_1 : i32, i32, i32
  }
  func.func @transform_4(%arg0: i32) -> (i32, i32) {
    %c0_i32 = arith.constant 0 : i32
    %c0_i32_0 = arith.constant 0 : i32
    %c0_i32_1 = arith.constant 0 : i32
    return %c0_i32, %c0_i32_0 : i32, i32
  }
  func.func @transform_5(%arg0: i32) -> (i32, i32, i32, i32) {
    %c0_i32 = arith.constant 0 : i32
    %c0_i32_0 = arith.constant 0 : i32
    %c0_i32_1 = arith.constant 0 : i32
    %c0_i32_2 = arith.constant 0 : i32
    %c0_i32_3 = arith.constant 0 : i32
    return %c0_i32, %c0_i32_0, %c0_i32_1, %c0_i32_2 : i32, i32, i32, i32
  }
  func.func @transform_6(%arg0: i32) -> (i32, i32, i32) {
    %c0_i32 = arith.constant 0 : i32
    %c0_i32_0 = arith.constant 0 : i32
    %c0_i32_1 = arith.constant 0 : i32
    %c0_i32_2 = arith.constant 0 : i32
    return %c0_i32, %c0_i32_0, %c0_i32_1 : i32, i32, i32
  }
  func.func @transform_7(%arg0: i32) -> (i32, i32, i32) {
    %c0_i32 = arith.constant 0 : i32
    %c0_i32_0 = arith.constant 0 : i32
    %c0_i32_1 = arith.constant 0 : i32
    %c0_i32_2 = arith.constant 0 : i32
    return %c0_i32, %c0_i32_0, %c0_i32_1 : i32, i32, i32
  }
  func.func @transform_8(%arg0: i32) -> (i32, i32, i32) {
    %c0_i32 = arith.constant 0 : i32
    %c0_i32_0 = arith.constant 0 : i32
    %c0_i32_1 = arith.constant 0 : i32
    %c0_i32_2 = arith.constant 0 : i32
    return %c0_i32, %c0_i32_0, %c0_i32_1 : i32, i32, i32
  }
  func.func @transform_9(%arg0: i32) -> (i32, i32, i32, i32) {
    %c0_i32 = arith.constant 0 : i32
    %c0_i32_0 = arith.constant 0 : i32
    %c0_i32_1 = arith.constant 0 : i32
    %c0_i32_2 = arith.constant 0 : i32
    %c0_i32_3 = arith.constant 0 : i32
    return %c0_i32, %c0_i32_0, %c0_i32_1, %c0_i32_2 : i32, i32, i32, i32
  }
  func.func @transform_10(%arg0: i32) -> (i32, i32, i32) {
    %c0_i32 = arith.constant 0 : i32
    %c0_i32_0 = arith.constant 0 : i32
    %c0_i32_1 = arith.constant 0 : i32
    %c0_i32_2 = arith.constant 0 : i32
    return %c0_i32, %c0_i32_0, %c0_i32_1 : i32, i32, i32
  }
  func.func @transform_11(%arg0: i32) -> (i32, i32, i32) {
    %c0_i32 = arith.constant 0 : i32
    %c0_i32_0 = arith.constant 0 : i32
    %c0_i32_1 = arith.constant 0 : i32
    return %arg0, %c0_i32, %c0_i32_0 : i32, i32, i32
  }
}

module attributes {stable_mosaic.version = 11 : i64} {
  func.func @_encoder_kernel(%arg0: i32, %arg1: memref<1x4x8xbf16, #tpu.memory_space<vmem>>, %arg2: memref<3x6x4xbf16, #tpu.memory_space<vmem>>, %arg3: memref<6x1xf32, #tpu.memory_space<vmem>>, %arg4: memref<3x6x6xbf16, #tpu.memory_space<vmem>>, %arg5: memref<6x1xf32, #tpu.memory_space<vmem>>, %arg6: memref<1x3x3x3xbf16, #tpu.memory_space<vmem>>, %arg7: memref<1x3x1xf32, #tpu.memory_space<vmem>>, %arg8: memref<1x3x3xbf16, #tpu.memory_space<vmem>>, %arg9: memref<1x3x1xf32, #tpu.memory_space<vmem>>, %arg10: memref<1x3x6x3xbf16, #tpu.memory_space<vmem>>, %arg11: memref<1x6x1xf32, #tpu.memory_space<vmem>>, %arg12: memref<1x6x4xbf16, #tpu.memory_space<vmem>>) attributes {dimension_semantics = [#tpu.dimension_semantics<parallel>], iteration_bounds = array<i64: 2>, scalar_prefetch = 0 : i64, scratch_operands = 0 : i64, tpu.core_type = #tpu.core_type<tc>, window_params = [{transform_indices = @transform_0, window_bounds = array<i64: 1, 4, 8>}, {pipeline_mode = #tpu.pipeline_mode<synchronous>, transform_indices = @transform_1, window_bounds = array<i64: 3, 6, 4>}, {pipeline_mode = #tpu.pipeline_mode<synchronous>, transform_indices = @transform_2, window_bounds = array<i64: 6, 1>}, {pipeline_mode = #tpu.pipeline_mode<synchronous>, transform_indices = @transform_3, window_bounds = array<i64: 3, 6, 6>}, {pipeline_mode = #tpu.pipeline_mode<synchronous>, transform_indices = @transform_4, window_bounds = array<i64: 6, 1>}, {pipeline_mode = #tpu.pipeline_mode<synchronous>, transform_indices = @transform_5, window_bounds = array<i64: 1, 3, 3, 3>}, {pipeline_mode = #tpu.pipeline_mode<synchronous>, transform_indices = @transform_6, window_bounds = array<i64: 1, 3, 1>}, {pipeline_mode = #tpu.pipeline_mode<synchronous>, transform_indices = @transform_7, window_bounds = array<i64: 1, 3, 3>}, {pipeline_mode = #tpu.pipeline_mode<synchronous>, transform_indices = @transform_8, window_bounds = array<i64: 1, 3, 1>}, {pipeline_mode = #tpu.pipeline_mode<synchronous>, transform_indices = @transform_9, window_bounds = array<i64: 1, 3, 6, 3>}, {pipeline_mode = #tpu.pipeline_mode<synchronous>, transform_indices = @transform_10, window_bounds = array<i64: 1, 6, 1>}, {transform_indices = @transform_11, window_bounds = array<i64: 1, 6, 4>}]} {
    %c0 = arith.constant 0 : index
    %c0_0 = arith.constant 0 : index
    %c0_1 = arith.constant 0 : index
    %0 = vector.load %arg1[%c0, %c0_0, %c0_1] : memref<1x4x8xbf16, #tpu.memory_space<vmem>>, vector<1x4x8xbf16>
    %1 = vector.shape_cast %0 : vector<1x4x8xbf16> to vector<4x8xbf16>
    %c0_2 = arith.constant 0 : index
    %c0_3 = arith.constant 0 : index
    %c0_4 = arith.constant 0 : index
    %2 = vector.load %arg2[%c0_2, %c0_3, %c0_4] : memref<3x6x4xbf16, #tpu.memory_space<vmem>>, vector<3x6x4xbf16>
    %c0_5 = arith.constant 0 : index
    %c0_6 = arith.constant 0 : index
    %3 = vector.load %arg3[%c0_5, %c0_6] : memref<6x1xf32, #tpu.memory_space<vmem>>, vector<6x1xf32>
    %4 = vector.extract_strided_slice %2 {offsets = [0, 0, 0], sizes = [1, 6, 4], strides = [1, 1, 1]} : vector<3x6x4xbf16> to vector<1x6x4xbf16>
    %5 = vector.shape_cast %4 : vector<1x6x4xbf16> to vector<6x4xbf16>
    %cst = arith.constant 0.000000e+00 : bf16
    %6 = vector.broadcast %cst : bf16 to vector<4x1xbf16>
    %7 = vector.extract_strided_slice %1 {offsets = [0, 0], sizes = [4, 7], strides = [1, 1]} : vector<4x8xbf16> to vector<4x7xbf16>
    %8 = tpu.concatenate %6, %7 in 1 : vector<4x1xbf16>, vector<4x7xbf16> -> vector<4x8xbf16>
    %cst_7 = arith.constant dense<0.000000e+00> : vector<6x8xf32>
    %9 = tpu.matmul %5, %8, %cst_7 {dimension_numbers = #tpu.dot_dimension_numbers<[1], [0], [0], [1], [0, 0, 1, 1], [], []>} : vector<6x4xbf16>, vector<4x8xbf16>, vector<6x8xf32> -> vector<6x8xf32>
    %10 = vector.extract_strided_slice %2 {offsets = [1, 0, 0], sizes = [1, 6, 4], strides = [1, 1, 1]} : vector<3x6x4xbf16> to vector<1x6x4xbf16>
    %11 = vector.shape_cast %10 : vector<1x6x4xbf16> to vector<6x4xbf16>
    %cst_8 = arith.constant dense<0.000000e+00> : vector<6x8xf32>
    %12 = tpu.matmul %11, %1, %cst_8 {dimension_numbers = #tpu.dot_dimension_numbers<[1], [0], [0], [1], [0, 0, 1, 1], [], []>} : vector<6x4xbf16>, vector<4x8xbf16>, vector<6x8xf32> -> vector<6x8xf32>
    %13 = arith.addf %9, %12 : vector<6x8xf32>
    %14 = vector.extract_strided_slice %2 {offsets = [2, 0, 0], sizes = [1, 6, 4], strides = [1, 1, 1]} : vector<3x6x4xbf16> to vector<1x6x4xbf16>
    %15 = vector.shape_cast %14 : vector<1x6x4xbf16> to vector<6x4xbf16>
    %cst_9 = arith.constant 0.000000e+00 : bf16
    %16 = vector.broadcast %cst_9 : bf16 to vector<4x1xbf16>
    %17 = vector.extract_strided_slice %1 {offsets = [0, 1], sizes = [4, 7], strides = [1, 1]} : vector<4x8xbf16> to vector<4x7xbf16>
    %18 = tpu.concatenate %17, %16 in 1 : vector<4x7xbf16>, vector<4x1xbf16> -> vector<4x8xbf16>
    %cst_10 = arith.constant dense<0.000000e+00> : vector<6x8xf32>
    %19 = tpu.matmul %15, %18, %cst_10 {dimension_numbers = #tpu.dot_dimension_numbers<[1], [0], [0], [1], [0, 0, 1, 1], [], []>} : vector<6x4xbf16>, vector<4x8xbf16>, vector<6x8xf32> -> vector<6x8xf32>
    %20 = arith.addf %13, %19 : vector<6x8xf32>
    %21 = vector.broadcast %3 : vector<6x1xf32> to vector<6x8xf32>
    %22 = arith.addf %20, %21 : vector<6x8xf32>
    %cst_11 = arith.constant 0.000000e+00 : f32
    %23 = vector.broadcast %cst_11 : f32 to vector<6x8xf32>
    %24 = arith.maximumf %22, %23 : vector<6x8xf32>
    %25 = arith.truncf %24 : vector<6x8xf32> to vector<6x8xbf16>
    %c0_12 = arith.constant 0 : index
    %c0_13 = arith.constant 0 : index
    %c0_14 = arith.constant 0 : index
    %26 = vector.load %arg4[%c0_12, %c0_13, %c0_14] : memref<3x6x6xbf16, #tpu.memory_space<vmem>>, vector<3x6x6xbf16>
    %c0_15 = arith.constant 0 : index
    %c0_16 = arith.constant 0 : index
    %27 = vector.load %arg5[%c0_15, %c0_16] : memref<6x1xf32, #tpu.memory_space<vmem>>, vector<6x1xf32>
    %28 = vector.extract_strided_slice %26 {offsets = [0, 0, 0], sizes = [1, 6, 6], strides = [1, 1, 1]} : vector<3x6x6xbf16> to vector<1x6x6xbf16>
    %29 = vector.shape_cast %28 : vector<1x6x6xbf16> to vector<6x6xbf16>
    %cst_17 = arith.constant 0.000000e+00 : bf16
    %30 = vector.broadcast %cst_17 : bf16 to vector<6x1xbf16>
    %31 = vector.extract_strided_slice %25 {offsets = [0, 0], sizes = [6, 7], strides = [1, 1]} : vector<6x8xbf16> to vector<6x7xbf16>
    %32 = tpu.concatenate %30, %31 in 1 : vector<6x1xbf16>, vector<6x7xbf16> -> vector<6x8xbf16>
    %cst_18 = arith.constant dense<0.000000e+00> : vector<6x8xf32>
    %33 = tpu.matmul %29, %32, %cst_18 {dimension_numbers = #tpu.dot_dimension_numbers<[1], [0], [0], [1], [0, 0, 1, 1], [], []>} : vector<6x6xbf16>, vector<6x8xbf16>, vector<6x8xf32> -> vector<6x8xf32>
    %34 = vector.extract_strided_slice %26 {offsets = [1, 0, 0], sizes = [1, 6, 6], strides = [1, 1, 1]} : vector<3x6x6xbf16> to vector<1x6x6xbf16>
    %35 = vector.shape_cast %34 : vector<1x6x6xbf16> to vector<6x6xbf16>
    %cst_19 = arith.constant dense<0.000000e+00> : vector<6x8xf32>
    %36 = tpu.matmul %35, %25, %cst_19 {dimension_numbers = #tpu.dot_dimension_numbers<[1], [0], [0], [1], [0, 0, 1, 1], [], []>} : vector<6x6xbf16>, vector<6x8xbf16>, vector<6x8xf32> -> vector<6x8xf32>
    %37 = arith.addf %33, %36 : vector<6x8xf32>
    %38 = vector.extract_strided_slice %26 {offsets = [2, 0, 0], sizes = [1, 6, 6], strides = [1, 1, 1]} : vector<3x6x6xbf16> to vector<1x6x6xbf16>
    %39 = vector.shape_cast %38 : vector<1x6x6xbf16> to vector<6x6xbf16>
    %cst_20 = arith.constant 0.000000e+00 : bf16
    %40 = vector.broadcast %cst_20 : bf16 to vector<6x1xbf16>
    %41 = vector.extract_strided_slice %25 {offsets = [0, 1], sizes = [6, 7], strides = [1, 1]} : vector<6x8xbf16> to vector<6x7xbf16>
    %42 = tpu.concatenate %41, %40 in 1 : vector<6x7xbf16>, vector<6x1xbf16> -> vector<6x8xbf16>
    %cst_21 = arith.constant dense<0.000000e+00> : vector<6x8xf32>
    %43 = tpu.matmul %39, %42, %cst_21 {dimension_numbers = #tpu.dot_dimension_numbers<[1], [0], [0], [1], [0, 0, 1, 1], [], []>} : vector<6x6xbf16>, vector<6x8xbf16>, vector<6x8xf32> -> vector<6x8xf32>
    %44 = arith.addf %37, %43 : vector<6x8xf32>
    %45 = vector.broadcast %27 : vector<6x1xf32> to vector<6x8xf32>
    %46 = arith.addf %44, %45 : vector<6x8xf32>
    %cst_22 = arith.constant 0.000000e+00 : f32
    %47 = vector.broadcast %cst_22 : f32 to vector<6x8xf32>
    %48 = arith.maximumf %46, %47 : vector<6x8xf32>
    %cst_23 = arith.constant 0.000000e+00 : f32
    %49 = vector.broadcast %cst_23 : f32 to vector<6x1xf32>
    %50 = vector.extract_strided_slice %48 {offsets = [0, 0], sizes = [6, 7], strides = [1, 1]} : vector<6x8xf32> to vector<6x7xf32>
    %51 = tpu.concatenate %49, %50 in 1 : vector<6x1xf32>, vector<6x7xf32> -> vector<6x8xf32>
    %52 = arith.maximumf %51, %48 : vector<6x8xf32>
    %cst_24 = arith.constant 0.000000e+00 : f32
    %53 = vector.broadcast %cst_24 : f32 to vector<6x1xf32>
    %54 = vector.extract_strided_slice %48 {offsets = [0, 1], sizes = [6, 7], strides = [1, 1]} : vector<6x8xf32> to vector<6x7xf32>
    %55 = tpu.concatenate %54, %53 in 1 : vector<6x7xf32>, vector<6x1xf32> -> vector<6x8xf32>
    %56 = arith.maximumf %52, %55 : vector<6x8xf32>
    %57 = tpu.iota {dimensions = array<i32: 0>} : vector<8x4xi32>
    %58 = tpu.iota {dimensions = array<i32: 1>} : vector<8x4xi32>
    %c2_i32 = arith.constant 2 : i32
    %59 = vector.broadcast %c2_i32 : i32 to vector<8x4xi32>
    %60 = arith.muli %59, %58 : vector<8x4xi32>
    %61 = arith.cmpi eq, %57, %60 : vector<8x4xi32>
    %cst_25 = arith.constant 1.000000e+00 : f32
    %cst_26 = arith.constant 0.000000e+00 : f32
    %62 = vector.broadcast %cst_25 : f32 to vector<8x4xf32>
    %63 = vector.broadcast %cst_26 : f32 to vector<8x4xf32>
    %64 = arith.select %61, %62, %63 : vector<8x4xi1>, vector<8x4xf32>
    %65 = arith.truncf %64 : vector<8x4xf32> to vector<8x4xbf16>
    %66 = arith.truncf %56 : vector<6x8xf32> to vector<6x8xbf16>
    %cst_27 = arith.constant dense<0.000000e+00> : vector<6x4xf32>
    %67 = tpu.matmul %66, %65, %cst_27 {dimension_numbers = #tpu.dot_dimension_numbers<[1], [0], [0], [1], [0, 0, 1, 1], [], []>} : vector<6x8xbf16>, vector<8x4xbf16>, vector<6x4xf32> -> vector<6x4xf32>
    %68 = vector.extract_strided_slice %67 {offsets = [0, 0], sizes = [3, 4], strides = [1, 1]} : vector<6x4xf32> to vector<3x4xf32>
    %69 = arith.truncf %68 : vector<3x4xf32> to vector<3x4xbf16>
    %70 = vector.extract_strided_slice %67 {offsets = [3, 0], sizes = [3, 4], strides = [1, 1]} : vector<6x4xf32> to vector<3x4xf32>
    %c0_28 = arith.constant 0 : index
    %c0_29 = arith.constant 0 : index
    %c0_30 = arith.constant 0 : index
    %c0_31 = arith.constant 0 : index
    %71 = vector.load %arg6[%c0_28, %c0_29, %c0_30, %c0_31] : memref<1x3x3x3xbf16, #tpu.memory_space<vmem>>, vector<1x3x3x3xbf16>
    %72 = vector.shape_cast %71 : vector<1x3x3x3xbf16> to vector<3x3x3xbf16>
    %c0_32 = arith.constant 0 : index
    %c0_33 = arith.constant 0 : index
    %c0_34 = arith.constant 0 : index
    %73 = vector.load %arg7[%c0_32, %c0_33, %c0_34] : memref<1x3x1xf32, #tpu.memory_space<vmem>>, vector<1x3x1xf32>
    %74 = vector.shape_cast %73 : vector<1x3x1xf32> to vector<3x1xf32>
    %75 = vector.extract_strided_slice %72 {offsets = [0, 0, 0], sizes = [1, 3, 3], strides = [1, 1, 1]} : vector<3x3x3xbf16> to vector<1x3x3xbf16>
    %76 = vector.shape_cast %75 : vector<1x3x3xbf16> to vector<3x3xbf16>
    %cst_35 = arith.constant 0.000000e+00 : bf16
    %77 = vector.broadcast %cst_35 : bf16 to vector<3x1xbf16>
    %78 = vector.extract_strided_slice %69 {offsets = [0, 0], sizes = [3, 3], strides = [1, 1]} : vector<3x4xbf16> to vector<3x3xbf16>
    %79 = tpu.concatenate %77, %78 in 1 : vector<3x1xbf16>, vector<3x3xbf16> -> vector<3x4xbf16>
    %cst_36 = arith.constant dense<0.000000e+00> : vector<3x4xf32>
    %80 = tpu.matmul %76, %79, %cst_36 {dimension_numbers = #tpu.dot_dimension_numbers<[1], [0], [0], [1], [0, 0, 1, 1], [], []>} : vector<3x3xbf16>, vector<3x4xbf16>, vector<3x4xf32> -> vector<3x4xf32>
    %81 = vector.extract_strided_slice %72 {offsets = [1, 0, 0], sizes = [1, 3, 3], strides = [1, 1, 1]} : vector<3x3x3xbf16> to vector<1x3x3xbf16>
    %82 = vector.shape_cast %81 : vector<1x3x3xbf16> to vector<3x3xbf16>
    %cst_37 = arith.constant dense<0.000000e+00> : vector<3x4xf32>
    %83 = tpu.matmul %82, %69, %cst_37 {dimension_numbers = #tpu.dot_dimension_numbers<[1], [0], [0], [1], [0, 0, 1, 1], [], []>} : vector<3x3xbf16>, vector<3x4xbf16>, vector<3x4xf32> -> vector<3x4xf32>
    %84 = arith.addf %80, %83 : vector<3x4xf32>
    %85 = vector.extract_strided_slice %72 {offsets = [2, 0, 0], sizes = [1, 3, 3], strides = [1, 1, 1]} : vector<3x3x3xbf16> to vector<1x3x3xbf16>
    %86 = vector.shape_cast %85 : vector<1x3x3xbf16> to vector<3x3xbf16>
    %cst_38 = arith.constant 0.000000e+00 : bf16
    %87 = vector.broadcast %cst_38 : bf16 to vector<3x1xbf16>
    %88 = vector.extract_strided_slice %69 {offsets = [0, 1], sizes = [3, 3], strides = [1, 1]} : vector<3x4xbf16> to vector<3x3xbf16>
    %89 = tpu.concatenate %88, %87 in 1 : vector<3x3xbf16>, vector<3x1xbf16> -> vector<3x4xbf16>
    %cst_39 = arith.constant dense<0.000000e+00> : vector<3x4xf32>
    %90 = tpu.matmul %86, %89, %cst_39 {dimension_numbers = #tpu.dot_dimension_numbers<[1], [0], [0], [1], [0, 0, 1, 1], [], []>} : vector<3x3xbf16>, vector<3x4xbf16>, vector<3x4xf32> -> vector<3x4xf32>
    %91 = arith.addf %84, %90 : vector<3x4xf32>
    %92 = vector.broadcast %74 : vector<3x1xf32> to vector<3x4xf32>
    %93 = arith.addf %91, %92 : vector<3x4xf32>
    %cst_40 = arith.constant 0.000000e+00 : f32
    %94 = vector.broadcast %cst_40 : f32 to vector<3x4xf32>
    %95 = arith.maximumf %93, %94 : vector<3x4xf32>
    %c0_41 = arith.constant 0 : index
    %c0_42 = arith.constant 0 : index
    %c0_43 = arith.constant 0 : index
    %96 = vector.load %arg8[%c0_41, %c0_42, %c0_43] : memref<1x3x3xbf16, #tpu.memory_space<vmem>>, vector<1x3x3xbf16>
    %97 = vector.shape_cast %96 : vector<1x3x3xbf16> to vector<3x3xbf16>
    %98 = arith.truncf %95 : vector<3x4xf32> to vector<3x4xbf16>
    %cst_44 = arith.constant dense<0.000000e+00> : vector<3x4xf32>
    %99 = tpu.matmul %97, %98, %cst_44 {dimension_numbers = #tpu.dot_dimension_numbers<[1], [0], [0], [1], [0, 0, 1, 1], [], []>} : vector<3x3xbf16>, vector<3x4xbf16>, vector<3x4xf32> -> vector<3x4xf32>
    %c0_45 = arith.constant 0 : index
    %c0_46 = arith.constant 0 : index
    %c0_47 = arith.constant 0 : index
    %100 = vector.load %arg9[%c0_45, %c0_46, %c0_47] : memref<1x3x1xf32, #tpu.memory_space<vmem>>, vector<1x3x1xf32>
    %101 = vector.shape_cast %100 : vector<1x3x1xf32> to vector<3x1xf32>
    %102 = vector.broadcast %101 : vector<3x1xf32> to vector<3x4xf32>
    %103 = arith.addf %99, %102 : vector<3x4xf32>
    %cst_48 = arith.constant 0.000000e+00 : f32
    %104 = vector.broadcast %cst_48 : f32 to vector<3x4xf32>
    %105 = arith.maximumf %103, %104 : vector<3x4xf32>
    %106 = arith.truncf %105 : vector<3x4xf32> to vector<3x4xbf16>
    %c0_49 = arith.constant 0 : index
    %c0_50 = arith.constant 0 : index
    %c0_51 = arith.constant 0 : index
    %c0_52 = arith.constant 0 : index
    %107 = vector.load %arg10[%c0_49, %c0_50, %c0_51, %c0_52] : memref<1x3x6x3xbf16, #tpu.memory_space<vmem>>, vector<1x3x6x3xbf16>
    %108 = vector.shape_cast %107 : vector<1x3x6x3xbf16> to vector<3x6x3xbf16>
    %c0_53 = arith.constant 0 : index
    %c0_54 = arith.constant 0 : index
    %c0_55 = arith.constant 0 : index
    %109 = vector.load %arg11[%c0_53, %c0_54, %c0_55] : memref<1x6x1xf32, #tpu.memory_space<vmem>>, vector<1x6x1xf32>
    %110 = vector.shape_cast %109 : vector<1x6x1xf32> to vector<6x1xf32>
    %111 = vector.extract_strided_slice %108 {offsets = [0, 0, 0], sizes = [1, 6, 3], strides = [1, 1, 1]} : vector<3x6x3xbf16> to vector<1x6x3xbf16>
    %112 = vector.shape_cast %111 : vector<1x6x3xbf16> to vector<6x3xbf16>
    %cst_56 = arith.constant 0.000000e+00 : bf16
    %113 = vector.broadcast %cst_56 : bf16 to vector<3x1xbf16>
    %114 = vector.extract_strided_slice %106 {offsets = [0, 0], sizes = [3, 3], strides = [1, 1]} : vector<3x4xbf16> to vector<3x3xbf16>
    %115 = tpu.concatenate %113, %114 in 1 : vector<3x1xbf16>, vector<3x3xbf16> -> vector<3x4xbf16>
    %cst_57 = arith.constant dense<0.000000e+00> : vector<6x4xf32>
    %116 = tpu.matmul %112, %115, %cst_57 {dimension_numbers = #tpu.dot_dimension_numbers<[1], [0], [0], [1], [0, 0, 1, 1], [], []>} : vector<6x3xbf16>, vector<3x4xbf16>, vector<6x4xf32> -> vector<6x4xf32>
    %117 = vector.extract_strided_slice %108 {offsets = [1, 0, 0], sizes = [1, 6, 3], strides = [1, 1, 1]} : vector<3x6x3xbf16> to vector<1x6x3xbf16>
    %118 = vector.shape_cast %117 : vector<1x6x3xbf16> to vector<6x3xbf16>
    %cst_58 = arith.constant dense<0.000000e+00> : vector<6x4xf32>
    %119 = tpu.matmul %118, %106, %cst_58 {dimension_numbers = #tpu.dot_dimension_numbers<[1], [0], [0], [1], [0, 0, 1, 1], [], []>} : vector<6x3xbf16>, vector<3x4xbf16>, vector<6x4xf32> -> vector<6x4xf32>
    %120 = arith.addf %116, %119 : vector<6x4xf32>
    %121 = vector.extract_strided_slice %108 {offsets = [2, 0, 0], sizes = [1, 6, 3], strides = [1, 1, 1]} : vector<3x6x3xbf16> to vector<1x6x3xbf16>
    %122 = vector.shape_cast %121 : vector<1x6x3xbf16> to vector<6x3xbf16>
    %cst_59 = arith.constant 0.000000e+00 : bf16
    %123 = vector.broadcast %cst_59 : bf16 to vector<3x1xbf16>
    %124 = vector.extract_strided_slice %106 {offsets = [0, 1], sizes = [3, 3], strides = [1, 1]} : vector<3x4xbf16> to vector<3x3xbf16>
    %125 = tpu.concatenate %124, %123 in 1 : vector<3x3xbf16>, vector<3x1xbf16> -> vector<3x4xbf16>
    %cst_60 = arith.constant dense<0.000000e+00> : vector<6x4xf32>
    %126 = tpu.matmul %122, %125, %cst_60 {dimension_numbers = #tpu.dot_dimension_numbers<[1], [0], [0], [1], [0, 0, 1, 1], [], []>} : vector<6x3xbf16>, vector<3x4xbf16>, vector<6x4xf32> -> vector<6x4xf32>
    %127 = arith.addf %120, %126 : vector<6x4xf32>
    %128 = vector.broadcast %110 : vector<6x1xf32> to vector<6x4xf32>
    %129 = arith.addf %127, %128 : vector<6x4xf32>
    %130 = vector.extract_strided_slice %129 {offsets = [0, 0], sizes = [3, 4], strides = [1, 1]} : vector<6x4xf32> to vector<3x4xf32>
    %131 = vector.extract_strided_slice %129 {offsets = [3, 0], sizes = [3, 4], strides = [1, 1]} : vector<6x4xf32> to vector<3x4xf32>
    %cst_61 = arith.constant 2.000000e+00 : f32
    %132 = vector.broadcast %cst_61 : f32 to vector<3x4xf32>
    %133 = arith.addf %130, %132 : vector<3x4xf32>
    %134 = arith.negf %133 : vector<3x4xf32>
    %135 = math.exp %134 : vector<3x4xf32>
    %cst_62 = arith.constant 1.000000e+00 : f32
    %136 = vector.broadcast %cst_62 : f32 to vector<3x4xf32>
    %137 = arith.addf %136, %135 : vector<3x4xf32>
    %138 = arith.divf %136, %137 : vector<3x4xf32>
    %139 = arith.addf %70, %131 : vector<3x4xf32>
    %140 = arith.mulf %139, %138 : vector<3x4xf32>
    %141 = tpu.concatenate %68, %140 in 0 : vector<3x4xf32>, vector<3x4xf32> -> vector<6x4xf32>
    %142 = arith.truncf %141 : vector<6x4xf32> to vector<6x4xbf16>
    %c0_63 = arith.constant 0 : index
    %c0_64 = arith.constant 0 : index
    %c0_65 = arith.constant 0 : index
    %143 = vector.load %arg12[%c0_63, %c0_64, %c0_65] : memref<1x6x4xbf16, #tpu.memory_space<vmem>>, vector<1x6x4xbf16>
    %144 = vector.shape_cast %143 : vector<1x6x4xbf16> to vector<6x4xbf16>
    %145 = vector.shape_cast %142 : vector<6x4xbf16> to vector<1x6x4xbf16>
    tpu.vector_store %arg12[%c0_63, %c0_64, %c0_65], %145 {strides = array<i32>} : memref<1x6x4xbf16, #tpu.memory_space<vmem>>, vector<1x6x4xbf16>,
    return
  }
  func.func @transform_0(%arg0: i32) -> (i32, i32, i32) {
    %c0_i32 = arith.constant 0 : i32
    %c0_i32_0 = arith.constant 0 : i32
    %c0_i32_1 = arith.constant 0 : i32
    return %arg0, %c0_i32, %c0_i32_0 : i32, i32, i32
  }
  func.func @transform_1(%arg0: i32) -> (i32, i32, i32) {
    %c0_i32 = arith.constant 0 : i32
    %c0_i32_0 = arith.constant 0 : i32
    %c0_i32_1 = arith.constant 0 : i32
    %c0_i32_2 = arith.constant 0 : i32
    return %c0_i32, %c0_i32_0, %c0_i32_1 : i32, i32, i32
  }
  func.func @transform_2(%arg0: i32) -> (i32, i32) {
    %c0_i32 = arith.constant 0 : i32
    %c0_i32_0 = arith.constant 0 : i32
    %c0_i32_1 = arith.constant 0 : i32
    return %c0_i32, %c0_i32_0 : i32, i32
  }
  func.func @transform_3(%arg0: i32) -> (i32, i32, i32) {
    %c0_i32 = arith.constant 0 : i32
    %c0_i32_0 = arith.constant 0 : i32
    %c0_i32_1 = arith.constant 0 : i32
    %c0_i32_2 = arith.constant 0 : i32
    return %c0_i32, %c0_i32_0, %c0_i32_1 : i32, i32, i32
  }
  func.func @transform_4(%arg0: i32) -> (i32, i32) {
    %c0_i32 = arith.constant 0 : i32
    %c0_i32_0 = arith.constant 0 : i32
    %c0_i32_1 = arith.constant 0 : i32
    return %c0_i32, %c0_i32_0 : i32, i32
  }
  func.func @transform_5(%arg0: i32) -> (i32, i32, i32, i32) {
    %c0_i32 = arith.constant 0 : i32
    %c0_i32_0 = arith.constant 0 : i32
    %c0_i32_1 = arith.constant 0 : i32
    %c0_i32_2 = arith.constant 0 : i32
    %c0_i32_3 = arith.constant 0 : i32
    return %c0_i32, %c0_i32_0, %c0_i32_1, %c0_i32_2 : i32, i32, i32, i32
  }
  func.func @transform_6(%arg0: i32) -> (i32, i32, i32) {
    %c0_i32 = arith.constant 0 : i32
    %c0_i32_0 = arith.constant 0 : i32
    %c0_i32_1 = arith.constant 0 : i32
    %c0_i32_2 = arith.constant 0 : i32
    return %c0_i32, %c0_i32_0, %c0_i32_1 : i32, i32, i32
  }
  func.func @transform_7(%arg0: i32) -> (i32, i32, i32) {
    %c0_i32 = arith.constant 0 : i32
    %c0_i32_0 = arith.constant 0 : i32
    %c0_i32_1 = arith.constant 0 : i32
    %c0_i32_2 = arith.constant 0 : i32
    return %c0_i32, %c0_i32_0, %c0_i32_1 : i32, i32, i32
  }
  func.func @transform_8(%arg0: i32) -> (i32, i32, i32) {
    %c0_i32 = arith.constant 0 : i32
    %c0_i32_0 = arith.constant 0 : i32
    %c0_i32_1 = arith.constant 0 : i32
    %c0_i32_2 = arith.constant 0 : i32
    return %c0_i32, %c0_i32_0, %c0_i32_1 : i32, i32, i32
  }
  func.func @transform_9(%arg0: i32) -> (i32, i32, i32, i32) {
    %c0_i32 = arith.constant 0 : i32
    %c0_i32_0 = arith.constant 0 : i32
    %c0_i32_1 = arith.constant 0 : i32
    %c0_i32_2 = arith.constant 0 : i32
    %c0_i32_3 = arith.constant 0 : i32
    return %c0_i32, %c0_i32_0, %c0_i32_1, %c0_i32_2 : i32, i32, i32, i32
  }
  func.func @transform_10(%arg0: i32) -> (i32, i32, i32) {
    %c0_i32 = arith.constant 0 : i32
    %c0_i32_0 = arith.constant 0 : i32
    %c0_i32_1 = arith.constant 0 : i32
    %c0_i32_2 = arith.constant 0 : i32
    return %c0_i32, %c0_i32_0, %c0_i32_1 : i32, i32, i32
  }
  func.func @transform_11(%arg0: i32) -> (i32, i32, i32) {
    %c0_i32 = arith.constant 0 : i32
    %c0_i32_0 = arith.constant 0 : i32
    %c0_i32_1 = arith.constant 0 : i32
    return %arg0, %c0_i32, %c0_i32_0 : i32, i32, i32
  }
}

module attributes {stable_mosaic.version = 11 : i64} {
  func.func @_decoder_kernel(%arg0: i32, %arg1: i32, %arg2: memref<1x6x4xbf16, #tpu.memory_space<vmem>>, %arg3: memref<1x3x4x6xbf16, #tpu.memory_space<vmem>>, %arg4: memref<1x4x1xf32, #tpu.memory_space<vmem>>, %arg5: memref<1x3x4x4xbf16, #tpu.memory_space<vmem>>, %arg6: memref<1x4x1xf32, #tpu.memory_space<vmem>>, %arg7: memref<1x1x4x8xbf16, #tpu.memory_space<vmem>>) attributes {dimension_semantics = [#tpu.dimension_semantics<parallel>, #tpu.dimension_semantics<parallel>], iteration_bounds = array<i64: 3, 2>, scalar_prefetch = 0 : i64, scratch_operands = 0 : i64, tpu.core_type = #tpu.core_type<tc>, window_params = [{transform_indices = @transform_0, window_bounds = array<i64: 1, 6, 4>}, {transform_indices = @transform_1, window_bounds = array<i64: 1, 3, 4, 6>}, {transform_indices = @transform_2, window_bounds = array<i64: 1, 4, 1>}, {transform_indices = @transform_3, window_bounds = array<i64: 1, 3, 4, 4>}, {transform_indices = @transform_4, window_bounds = array<i64: 1, 4, 1>}, {transform_indices = @transform_5, window_bounds = array<i64: 1, 1, 4, 8>}]} {
    %c0 = arith.constant 0 : index
    %c0_0 = arith.constant 0 : index
    %c0_1 = arith.constant 0 : index
    %0 = vector.load %arg2[%c0, %c0_0, %c0_1] : memref<1x6x4xbf16, #tpu.memory_space<vmem>>, vector<1x6x4xbf16>
    %1 = vector.shape_cast %0 : vector<1x6x4xbf16> to vector<6x4xbf16>
    %2 = arith.extf %1 : vector<6x4xbf16> to vector<6x4xf32>
    %3 = tpu.iota {dimensions = array<i32: 0>} : vector<4x8xi32>
    %4 = tpu.iota {dimensions = array<i32: 1>} : vector<4x8xi32>
    %c2_i32 = arith.constant 2 : i32
    %5 = vector.broadcast %c2_i32 : i32 to vector<4x8xi32>
    %6 = arith.muli %5, %3 : vector<4x8xi32>
    %7 = arith.cmpi eq, %4, %6 : vector<4x8xi32>
    %c2_i32_2 = arith.constant 2 : i32
    %8 = vector.broadcast %c2_i32_2 : i32 to vector<4x8xi32>
    %9 = arith.muli %8, %3 : vector<4x8xi32>
    %c1_i32 = arith.constant 1 : i32
    %10 = vector.broadcast %c1_i32 : i32 to vector<4x8xi32>
    %11 = arith.addi %9, %10 : vector<4x8xi32>
    %12 = arith.cmpi eq, %4, %11 : vector<4x8xi32>
    %13 = arith.ori %7, %12 : vector<4x8xi1>
    %cst = arith.constant 1.000000e+00 : f32
    %cst_3 = arith.constant 0.000000e+00 : f32
    %14 = vector.broadcast %cst : f32 to vector<4x8xf32>
    %15 = vector.broadcast %cst_3 : f32 to vector<4x8xf32>
    %16 = arith.select %13, %14, %15 : vector<4x8xi1>, vector<4x8xf32>
    %17 = arith.truncf %16 : vector<4x8xf32> to vector<4x8xbf16>
    %18 = arith.truncf %2 : vector<6x4xf32> to vector<6x4xbf16>
    %cst_4 = arith.constant dense<0.000000e+00> : vector<6x8xf32>
    %19 = tpu.matmul %18, %17, %cst_4 {dimension_numbers = #tpu.dot_dimension_numbers<[1], [0], [0], [1], [0, 0, 1, 1], [], []>} : vector<6x4xbf16>, vector<4x8xbf16>, vector<6x8xf32> -> vector<6x8xf32>
    %20 = arith.truncf %19 : vector<6x8xf32> to vector<6x8xbf16>
    %c0_5 = arith.constant 0 : index
    %c0_6 = arith.constant 0 : index
    %c0_7 = arith.constant 0 : index
    %c0_8 = arith.constant 0 : index
    %21 = vector.load %arg3[%c0_5, %c0_6, %c0_7, %c0_8] : memref<1x3x4x6xbf16, #tpu.memory_space<vmem>>, vector<1x3x4x6xbf16>
    %22 = vector.shape_cast %21 : vector<1x3x4x6xbf16> to vector<3x4x6xbf16>
    %c0_9 = arith.constant 0 : index
    %c0_10 = arith.constant 0 : index
    %c0_11 = arith.constant 0 : index
    %23 = vector.load %arg4[%c0_9, %c0_10, %c0_11] : memref<1x4x1xf32, #tpu.memory_space<vmem>>, vector<1x4x1xf32>
    %24 = vector.shape_cast %23 : vector<1x4x1xf32> to vector<4x1xf32>
    %25 = vector.extract_strided_slice %22 {offsets = [0, 0, 0], sizes = [1, 4, 6], strides = [1, 1, 1]} : vector<3x4x6xbf16> to vector<1x4x6xbf16>
    %26 = vector.shape_cast %25 : vector<1x4x6xbf16> to vector<4x6xbf16>
    %cst_12 = arith.constant 0.000000e+00 : bf16
    %27 = vector.broadcast %cst_12 : bf16 to vector<6x1xbf16>
    %28 = vector.extract_strided_slice %20 {offsets = [0, 0], sizes = [6, 7], strides = [1, 1]} : vector<6x8xbf16> to vector<6x7xbf16>
    %29 = tpu.concatenate %27, %28 in 1 : vector<6x1xbf16>, vector<6x7xbf16> -> vector<6x8xbf16>
    %cst_13 = arith.constant dense<0.000000e+00> : vector<4x8xf32>
    %30 = tpu.matmul %26, %29, %cst_13 {dimension_numbers = #tpu.dot_dimension_numbers<[1], [0], [0], [1], [0, 0, 1, 1], [], []>} : vector<4x6xbf16>, vector<6x8xbf16>, vector<4x8xf32> -> vector<4x8xf32>
    %31 = vector.extract_strided_slice %22 {offsets = [1, 0, 0], sizes = [1, 4, 6], strides = [1, 1, 1]} : vector<3x4x6xbf16> to vector<1x4x6xbf16>
    %32 = vector.shape_cast %31 : vector<1x4x6xbf16> to vector<4x6xbf16>
    %cst_14 = arith.constant dense<0.000000e+00> : vector<4x8xf32>
    %33 = tpu.matmul %32, %20, %cst_14 {dimension_numbers = #tpu.dot_dimension_numbers<[1], [0], [0], [1], [0, 0, 1, 1], [], []>} : vector<4x6xbf16>, vector<6x8xbf16>, vector<4x8xf32> -> vector<4x8xf32>
    %34 = arith.addf %30, %33 : vector<4x8xf32>
    %35 = vector.extract_strided_slice %22 {offsets = [2, 0, 0], sizes = [1, 4, 6], strides = [1, 1, 1]} : vector<3x4x6xbf16> to vector<1x4x6xbf16>
    %36 = vector.shape_cast %35 : vector<1x4x6xbf16> to vector<4x6xbf16>
    %cst_15 = arith.constant 0.000000e+00 : bf16
    %37 = vector.broadcast %cst_15 : bf16 to vector<6x1xbf16>
    %38 = vector.extract_strided_slice %20 {offsets = [0, 1], sizes = [6, 7], strides = [1, 1]} : vector<6x8xbf16> to vector<6x7xbf16>
    %39 = tpu.concatenate %38, %37 in 1 : vector<6x7xbf16>, vector<6x1xbf16> -> vector<6x8xbf16>
    %cst_16 = arith.constant dense<0.000000e+00> : vector<4x8xf32>
    %40 = tpu.matmul %36, %39, %cst_16 {dimension_numbers = #tpu.dot_dimension_numbers<[1], [0], [0], [1], [0, 0, 1, 1], [], []>} : vector<4x6xbf16>, vector<6x8xbf16>, vector<4x8xf32> -> vector<4x8xf32>
    %41 = arith.addf %34, %40 : vector<4x8xf32>
    %42 = vector.broadcast %24 : vector<4x1xf32> to vector<4x8xf32>
    %43 = arith.addf %41, %42 : vector<4x8xf32>
    %cst_17 = arith.constant 0.000000e+00 : f32
    %44 = vector.broadcast %cst_17 : f32 to vector<4x8xf32>
    %45 = arith.maximumf %43, %44 : vector<4x8xf32>
    %46 = arith.truncf %45 : vector<4x8xf32> to vector<4x8xbf16>
    %c0_18 = arith.constant 0 : index
    %c0_19 = arith.constant 0 : index
    %c0_20 = arith.constant 0 : index
    %c0_21 = arith.constant 0 : index
    %47 = vector.load %arg5[%c0_18, %c0_19, %c0_20, %c0_21] : memref<1x3x4x4xbf16, #tpu.memory_space<vmem>>, vector<1x3x4x4xbf16>
    %48 = vector.shape_cast %47 : vector<1x3x4x4xbf16> to vector<3x4x4xbf16>
    %c0_22 = arith.constant 0 : index
    %c0_23 = arith.constant 0 : index
    %c0_24 = arith.constant 0 : index
    %49 = vector.load %arg6[%c0_22, %c0_23, %c0_24] : memref<1x4x1xf32, #tpu.memory_space<vmem>>, vector<1x4x1xf32>
    %50 = vector.shape_cast %49 : vector<1x4x1xf32> to vector<4x1xf32>
    %51 = vector.extract_strided_slice %48 {offsets = [0, 0, 0], sizes = [1, 4, 4], strides = [1, 1, 1]} : vector<3x4x4xbf16> to vector<1x4x4xbf16>
    %52 = vector.shape_cast %51 : vector<1x4x4xbf16> to vector<4x4xbf16>
    %cst_25 = arith.constant 0.000000e+00 : bf16
    %53 = vector.broadcast %cst_25 : bf16 to vector<4x1xbf16>
    %54 = vector.extract_strided_slice %46 {offsets = [0, 0], sizes = [4, 7], strides = [1, 1]} : vector<4x8xbf16> to vector<4x7xbf16>
    %55 = tpu.concatenate %53, %54 in 1 : vector<4x1xbf16>, vector<4x7xbf16> -> vector<4x8xbf16>
    %cst_26 = arith.constant dense<0.000000e+00> : vector<4x8xf32>
    %56 = tpu.matmul %52, %55, %cst_26 {dimension_numbers = #tpu.dot_dimension_numbers<[1], [0], [0], [1], [0, 0, 1, 1], [], []>} : vector<4x4xbf16>, vector<4x8xbf16>, vector<4x8xf32> -> vector<4x8xf32>
    %57 = vector.extract_strided_slice %48 {offsets = [1, 0, 0], sizes = [1, 4, 4], strides = [1, 1, 1]} : vector<3x4x4xbf16> to vector<1x4x4xbf16>
    %58 = vector.shape_cast %57 : vector<1x4x4xbf16> to vector<4x4xbf16>
    %cst_27 = arith.constant dense<0.000000e+00> : vector<4x8xf32>
    %59 = tpu.matmul %58, %46, %cst_27 {dimension_numbers = #tpu.dot_dimension_numbers<[1], [0], [0], [1], [0, 0, 1, 1], [], []>} : vector<4x4xbf16>, vector<4x8xbf16>, vector<4x8xf32> -> vector<4x8xf32>
    %60 = arith.addf %56, %59 : vector<4x8xf32>
    %61 = vector.extract_strided_slice %48 {offsets = [2, 0, 0], sizes = [1, 4, 4], strides = [1, 1, 1]} : vector<3x4x4xbf16> to vector<1x4x4xbf16>
    %62 = vector.shape_cast %61 : vector<1x4x4xbf16> to vector<4x4xbf16>
    %cst_28 = arith.constant 0.000000e+00 : bf16
    %63 = vector.broadcast %cst_28 : bf16 to vector<4x1xbf16>
    %64 = vector.extract_strided_slice %46 {offsets = [0, 1], sizes = [4, 7], strides = [1, 1]} : vector<4x8xbf16> to vector<4x7xbf16>
    %65 = tpu.concatenate %64, %63 in 1 : vector<4x7xbf16>, vector<4x1xbf16> -> vector<4x8xbf16>
    %cst_29 = arith.constant dense<0.000000e+00> : vector<4x8xf32>
    %66 = tpu.matmul %62, %65, %cst_29 {dimension_numbers = #tpu.dot_dimension_numbers<[1], [0], [0], [1], [0, 0, 1, 1], [], []>} : vector<4x4xbf16>, vector<4x8xbf16>, vector<4x8xf32> -> vector<4x8xf32>
    %67 = arith.addf %60, %66 : vector<4x8xf32>
    %68 = vector.broadcast %50 : vector<4x1xf32> to vector<4x8xf32>
    %69 = arith.addf %67, %68 : vector<4x8xf32>
    %cst_30 = arith.constant 0.000000e+00 : f32
    %70 = vector.broadcast %cst_30 : f32 to vector<4x8xf32>
    %71 = arith.maximumf %69, %70 : vector<4x8xf32>
    %72 = arith.truncf %71 : vector<4x8xf32> to vector<4x8xbf16>
    %c0_31 = arith.constant 0 : index
    %c0_32 = arith.constant 0 : index
    %c0_33 = arith.constant 0 : index
    %c0_34 = arith.constant 0 : index
    %73 = vector.load %arg7[%c0_31, %c0_32, %c0_33, %c0_34] : memref<1x1x4x8xbf16, #tpu.memory_space<vmem>>, vector<1x1x4x8xbf16>
    %74 = vector.shape_cast %73 : vector<1x1x4x8xbf16> to vector<4x8xbf16>
    %75 = vector.shape_cast %72 : vector<4x8xbf16> to vector<1x1x4x8xbf16>
    tpu.vector_store %arg7[%c0_31, %c0_32, %c0_33, %c0_34], %75 {strides = array<i32>} : memref<1x1x4x8xbf16, #tpu.memory_space<vmem>>, vector<1x1x4x8xbf16>,
    return
  }
  func.func @transform_0(%arg0: i32, %arg1: i32) -> (i32, i32, i32) {
    %c0_i32 = arith.constant 0 : i32
    %c0_i32_0 = arith.constant 0 : i32
    %c0_i32_1 = arith.constant 0 : i32
    return %arg1, %c0_i32, %c0_i32_0 : i32, i32, i32
  }
  func.func @transform_1(%arg0: i32, %arg1: i32) -> (i32, i32, i32, i32) {
    %c0_i32 = arith.constant 0 : i32
    %c0_i32_0 = arith.constant 0 : i32
    %c0_i32_1 = arith.constant 0 : i32
    %c0_i32_2 = arith.constant 0 : i32
    return %arg0, %c0_i32, %c0_i32_0, %c0_i32_1 : i32, i32, i32, i32
  }
  func.func @transform_2(%arg0: i32, %arg1: i32) -> (i32, i32, i32) {
    %c0_i32 = arith.constant 0 : i32
    %c0_i32_0 = arith.constant 0 : i32
    %c0_i32_1 = arith.constant 0 : i32
    return %arg0, %c0_i32, %c0_i32_0 : i32, i32, i32
  }
  func.func @transform_3(%arg0: i32, %arg1: i32) -> (i32, i32, i32, i32) {
    %c0_i32 = arith.constant 0 : i32
    %c0_i32_0 = arith.constant 0 : i32
    %c0_i32_1 = arith.constant 0 : i32
    %c0_i32_2 = arith.constant 0 : i32
    return %arg0, %c0_i32, %c0_i32_0, %c0_i32_1 : i32, i32, i32, i32
  }
  func.func @transform_4(%arg0: i32, %arg1: i32) -> (i32, i32, i32) {
    %c0_i32 = arith.constant 0 : i32
    %c0_i32_0 = arith.constant 0 : i32
    %c0_i32_1 = arith.constant 0 : i32
    return %arg0, %c0_i32, %c0_i32_0 : i32, i32, i32
  }
  func.func @transform_5(%arg0: i32, %arg1: i32) -> (i32, i32, i32, i32) {
    %c0_i32 = arith.constant 0 : i32
    %c0_i32_0 = arith.constant 0 : i32
    %c0_i32_1 = arith.constant 0 : i32
    return %arg0, %arg1, %c0_i32, %c0_i32_0 : i32, i32, i32, i32
  }
}

module attributes {stable_mosaic.version = 11 : i64} {
  func.func @_decoder_kernel(%arg0: i32, %arg1: i32, %arg2: memref<1x4x8xbf16, #tpu.memory_space<vmem>>, %arg3: memref<1x1x4x8xbf16, #tpu.memory_space<vmem>>, %arg4: memref<1x3x3x4xbf16, #tpu.memory_space<vmem>>, %arg5: memref<1x3x1xf32, #tpu.memory_space<vmem>>, %arg6: memref<1x3x3x3xbf16, #tpu.memory_space<vmem>>, %arg7: memref<1x3x1xf32, #tpu.memory_space<vmem>>, %arg8: memref<1x1x3x16xbf16, #tpu.memory_space<vmem>>) attributes {dimension_semantics = [#tpu.dimension_semantics<parallel>, #tpu.dimension_semantics<parallel>], iteration_bounds = array<i64: 3, 2>, scalar_prefetch = 0 : i64, scratch_operands = 0 : i64, tpu.core_type = #tpu.core_type<tc>, window_params = [{transform_indices = @transform_0, window_bounds = array<i64: 1, 4, 8>}, {transform_indices = @transform_1, window_bounds = array<i64: 1, 1, 4, 8>}, {transform_indices = @transform_2, window_bounds = array<i64: 1, 3, 3, 4>}, {transform_indices = @transform_3, window_bounds = array<i64: 1, 3, 1>}, {transform_indices = @transform_4, window_bounds = array<i64: 1, 3, 3, 3>}, {transform_indices = @transform_5, window_bounds = array<i64: 1, 3, 1>}, {transform_indices = @transform_6, window_bounds = array<i64: 1, 1, 3, 16>}]} {
    %c0 = arith.constant 0 : index
    %c0_0 = arith.constant 0 : index
    %c0_1 = arith.constant 0 : index
    %0 = vector.load %arg2[%c0, %c0_0, %c0_1] : memref<1x4x8xbf16, #tpu.memory_space<vmem>>, vector<1x4x8xbf16>
    %1 = vector.shape_cast %0 : vector<1x4x8xbf16> to vector<4x8xbf16>
    %2 = arith.extf %1 : vector<4x8xbf16> to vector<4x8xf32>
    %c0_2 = arith.constant 0 : index
    %c0_3 = arith.constant 0 : index
    %c0_4 = arith.constant 0 : index
    %c0_5 = arith.constant 0 : index
    %3 = vector.load %arg3[%c0_2, %c0_3, %c0_4, %c0_5] : memref<1x1x4x8xbf16, #tpu.memory_space<vmem>>, vector<1x1x4x8xbf16>
    %4 = vector.shape_cast %3 : vector<1x1x4x8xbf16> to vector<4x8xbf16>
    %5 = arith.extf %4 : vector<4x8xbf16> to vector<4x8xf32>
    %6 = arith.addf %2, %5 : vector<4x8xf32>
    %7 = tpu.iota {dimensions = array<i32: 0>} : vector<8x16xi32>
    %8 = tpu.iota {dimensions = array<i32: 1>} : vector<8x16xi32>
    %c2_i32 = arith.constant 2 : i32
    %9 = vector.broadcast %c2_i32 : i32 to vector<8x16xi32>
    %10 = arith.muli %9, %7 : vector<8x16xi32>
    %11 = arith.cmpi eq, %8, %10 : vector<8x16xi32>
    %c2_i32_6 = arith.constant 2 : i32
    %12 = vector.broadcast %c2_i32_6 : i32 to vector<8x16xi32>
    %13 = arith.muli %12, %7 : vector<8x16xi32>
    %c1_i32 = arith.constant 1 : i32
    %14 = vector.broadcast %c1_i32 : i32 to vector<8x16xi32>
    %15 = arith.addi %13, %14 : vector<8x16xi32>
    %16 = arith.cmpi eq, %8, %15 : vector<8x16xi32>
    %17 = arith.ori %11, %16 : vector<8x16xi1>
    %cst = arith.constant 1.000000e+00 : f32
    %cst_7 = arith.constant 0.000000e+00 : f32
    %18 = vector.broadcast %cst : f32 to vector<8x16xf32>
    %19 = vector.broadcast %cst_7 : f32 to vector<8x16xf32>
    %20 = arith.select %17, %18, %19 : vector<8x16xi1>, vector<8x16xf32>
    %21 = arith.truncf %20 : vector<8x16xf32> to vector<8x16xbf16>
    %22 = arith.truncf %6 : vector<4x8xf32> to vector<4x8xbf16>
    %cst_8 = arith.constant dense<0.000000e+00> : vector<4x16xf32>
    %23 = tpu.matmul %22, %21, %cst_8 {dimension_numbers = #tpu.dot_dimension_numbers<[1], [0], [0], [1], [0, 0, 1, 1], [], []>} : vector<4x8xbf16>, vector<8x16xbf16>, vector<4x16xf32> -> vector<4x16xf32>
    %24 = arith.truncf %23 : vector<4x16xf32> to vector<4x16xbf16>
    %c0_9 = arith.constant 0 : index
    %c0_10 = arith.constant 0 : index
    %c0_11 = arith.constant 0 : index
    %c0_12 = arith.constant 0 : index
    %25 = vector.load %arg4[%c0_9, %c0_10, %c0_11, %c0_12] : memref<1x3x3x4xbf16, #tpu.memory_space<vmem>>, vector<1x3x3x4xbf16>
    %26 = vector.shape_cast %25 : vector<1x3x3x4xbf16> to vector<3x3x4xbf16>
    %c0_13 = arith.constant 0 : index
    %c0_14 = arith.constant 0 : index
    %c0_15 = arith.constant 0 : index
    %27 = vector.load %arg5[%c0_13, %c0_14, %c0_15] : memref<1x3x1xf32, #tpu.memory_space<vmem>>, vector<1x3x1xf32>
    %28 = vector.shape_cast %27 : vector<1x3x1xf32> to vector<3x1xf32>
    %29 = vector.extract_strided_slice %26 {offsets = [0, 0, 0], sizes = [1, 3, 4], strides = [1, 1, 1]} : vector<3x3x4xbf16> to vector<1x3x4xbf16>
    %30 = vector.shape_cast %29 : vector<1x3x4xbf16> to vector<3x4xbf16>
    %cst_16 = arith.constant 0.000000e+00 : bf16
    %31 = vector.broadcast %cst_16 : bf16 to vector<4x1xbf16>
    %32 = vector.extract_strided_slice %24 {offsets = [0, 0], sizes = [4, 15], strides = [1, 1]} : vector<4x16xbf16> to vector<4x15xbf16>
    %33 = tpu.concatenate %31, %32 in 1 : vector<4x1xbf16>, vector<4x15xbf16> -> vector<4x16xbf16>
    %cst_17 = arith.constant dense<0.000000e+00> : vector<3x16xf32>
    %34 = tpu.matmul %30, %33, %cst_17 {dimension_numbers = #tpu.dot_dimension_numbers<[1], [0], [0], [1], [0, 0, 1, 1], [], []>} : vector<3x4xbf16>, vector<4x16xbf16>, vector<3x16xf32> -> vector<3x16xf32>
    %35 = vector.extract_strided_slice %26 {offsets = [1, 0, 0], sizes = [1, 3, 4], strides = [1, 1, 1]} : vector<3x3x4xbf16> to vector<1x3x4xbf16>
    %36 = vector.shape_cast %35 : vector<1x3x4xbf16> to vector<3x4xbf16>
    %cst_18 = arith.constant dense<0.000000e+00> : vector<3x16xf32>
    %37 = tpu.matmul %36, %24, %cst_18 {dimension_numbers = #tpu.dot_dimension_numbers<[1], [0], [0], [1], [0, 0, 1, 1], [], []>} : vector<3x4xbf16>, vector<4x16xbf16>, vector<3x16xf32> -> vector<3x16xf32>
    %38 = arith.addf %34, %37 : vector<3x16xf32>
    %39 = vector.extract_strided_slice %26 {offsets = [2, 0, 0], sizes = [1, 3, 4], strides = [1, 1, 1]} : vector<3x3x4xbf16> to vector<1x3x4xbf16>
    %40 = vector.shape_cast %39 : vector<1x3x4xbf16> to vector<3x4xbf16>
    %cst_19 = arith.constant 0.000000e+00 : bf16
    %41 = vector.broadcast %cst_19 : bf16 to vector<4x1xbf16>
    %42 = vector.extract_strided_slice %24 {offsets = [0, 1], sizes = [4, 15], strides = [1, 1]} : vector<4x16xbf16> to vector<4x15xbf16>
    %43 = tpu.concatenate %42, %41 in 1 : vector<4x15xbf16>, vector<4x1xbf16> -> vector<4x16xbf16>
    %cst_20 = arith.constant dense<0.000000e+00> : vector<3x16xf32>
    %44 = tpu.matmul %40, %43, %cst_20 {dimension_numbers = #tpu.dot_dimension_numbers<[1], [0], [0], [1], [0, 0, 1, 1], [], []>} : vector<3x4xbf16>, vector<4x16xbf16>, vector<3x16xf32> -> vector<3x16xf32>
    %45 = arith.addf %38, %44 : vector<3x16xf32>
    %46 = vector.broadcast %28 : vector<3x1xf32> to vector<3x16xf32>
    %47 = arith.addf %45, %46 : vector<3x16xf32>
    %cst_21 = arith.constant 0.000000e+00 : f32
    %48 = vector.broadcast %cst_21 : f32 to vector<3x16xf32>
    %49 = arith.maximumf %47, %48 : vector<3x16xf32>
    %50 = arith.truncf %49 : vector<3x16xf32> to vector<3x16xbf16>
    %c0_22 = arith.constant 0 : index
    %c0_23 = arith.constant 0 : index
    %c0_24 = arith.constant 0 : index
    %c0_25 = arith.constant 0 : index
    %51 = vector.load %arg6[%c0_22, %c0_23, %c0_24, %c0_25] : memref<1x3x3x3xbf16, #tpu.memory_space<vmem>>, vector<1x3x3x3xbf16>
    %52 = vector.shape_cast %51 : vector<1x3x3x3xbf16> to vector<3x3x3xbf16>
    %c0_26 = arith.constant 0 : index
    %c0_27 = arith.constant 0 : index
    %c0_28 = arith.constant 0 : index
    %53 = vector.load %arg7[%c0_26, %c0_27, %c0_28] : memref<1x3x1xf32, #tpu.memory_space<vmem>>, vector<1x3x1xf32>
    %54 = vector.shape_cast %53 : vector<1x3x1xf32> to vector<3x1xf32>
    %55 = vector.extract_strided_slice %52 {offsets = [0, 0, 0], sizes = [1, 3, 3], strides = [1, 1, 1]} : vector<3x3x3xbf16> to vector<1x3x3xbf16>
    %56 = vector.shape_cast %55 : vector<1x3x3xbf16> to vector<3x3xbf16>
    %cst_29 = arith.constant 0.000000e+00 : bf16
    %57 = vector.broadcast %cst_29 : bf16 to vector<3x1xbf16>
    %58 = vector.extract_strided_slice %50 {offsets = [0, 0], sizes = [3, 15], strides = [1, 1]} : vector<3x16xbf16> to vector<3x15xbf16>
    %59 = tpu.concatenate %57, %58 in 1 : vector<3x1xbf16>, vector<3x15xbf16> -> vector<3x16xbf16>
    %cst_30 = arith.constant dense<0.000000e+00> : vector<3x16xf32>
    %60 = tpu.matmul %56, %59, %cst_30 {dimension_numbers = #tpu.dot_dimension_numbers<[1], [0], [0], [1], [0, 0, 1, 1], [], []>} : vector<3x3xbf16>, vector<3x16xbf16>, vector<3x16xf32> -> vector<3x16xf32>
    %61 = vector.extract_strided_slice %52 {offsets = [1, 0, 0], sizes = [1, 3, 3], strides = [1, 1, 1]} : vector<3x3x3xbf16> to vector<1x3x3xbf16>
    %62 = vector.shape_cast %61 : vector<1x3x3xbf16> to vector<3x3xbf16>
    %cst_31 = arith.constant dense<0.000000e+00> : vector<3x16xf32>
    %63 = tpu.matmul %62, %50, %cst_31 {dimension_numbers = #tpu.dot_dimension_numbers<[1], [0], [0], [1], [0, 0, 1, 1], [], []>} : vector<3x3xbf16>, vector<3x16xbf16>, vector<3x16xf32> -> vector<3x16xf32>
    %64 = arith.addf %60, %63 : vector<3x16xf32>
    %65 = vector.extract_strided_slice %52 {offsets = [2, 0, 0], sizes = [1, 3, 3], strides = [1, 1, 1]} : vector<3x3x3xbf16> to vector<1x3x3xbf16>
    %66 = vector.shape_cast %65 : vector<1x3x3xbf16> to vector<3x3xbf16>
    %cst_32 = arith.constant 0.000000e+00 : bf16
    %67 = vector.broadcast %cst_32 : bf16 to vector<3x1xbf16>
    %68 = vector.extract_strided_slice %50 {offsets = [0, 1], sizes = [3, 15], strides = [1, 1]} : vector<3x16xbf16> to vector<3x15xbf16>
    %69 = tpu.concatenate %68, %67 in 1 : vector<3x15xbf16>, vector<3x1xbf16> -> vector<3x16xbf16>
    %cst_33 = arith.constant dense<0.000000e+00> : vector<3x16xf32>
    %70 = tpu.matmul %66, %69, %cst_33 {dimension_numbers = #tpu.dot_dimension_numbers<[1], [0], [0], [1], [0, 0, 1, 1], [], []>} : vector<3x3xbf16>, vector<3x16xbf16>, vector<3x16xf32> -> vector<3x16xf32>
    %71 = arith.addf %64, %70 : vector<3x16xf32>
    %72 = vector.broadcast %54 : vector<3x1xf32> to vector<3x16xf32>
    %73 = arith.addf %71, %72 : vector<3x16xf32>
    %cst_34 = arith.constant 0.000000e+00 : f32
    %74 = vector.broadcast %cst_34 : f32 to vector<3x16xf32>
    %75 = arith.maximumf %73, %74 : vector<3x16xf32>
    %76 = arith.truncf %75 : vector<3x16xf32> to vector<3x16xbf16>
    %c0_35 = arith.constant 0 : index
    %c0_36 = arith.constant 0 : index
    %c0_37 = arith.constant 0 : index
    %c0_38 = arith.constant 0 : index
    %77 = vector.load %arg8[%c0_35, %c0_36, %c0_37, %c0_38] : memref<1x1x3x16xbf16, #tpu.memory_space<vmem>>, vector<1x1x3x16xbf16>
    %78 = vector.shape_cast %77 : vector<1x1x3x16xbf16> to vector<3x16xbf16>
    %79 = vector.shape_cast %76 : vector<3x16xbf16> to vector<1x1x3x16xbf16>
    tpu.vector_store %arg8[%c0_35, %c0_36, %c0_37, %c0_38], %79 {strides = array<i32>} : memref<1x1x3x16xbf16, #tpu.memory_space<vmem>>, vector<1x1x3x16xbf16>,
    return
  }
  func.func @transform_0(%arg0: i32, %arg1: i32) -> (i32, i32, i32) {
    %c0_i32 = arith.constant 0 : i32
    %c0_i32_0 = arith.constant 0 : i32
    %c0_i32_1 = arith.constant 0 : i32
    return %arg1, %c0_i32, %c0_i32_0 : i32, i32, i32
  }
  func.func @transform_1(%arg0: i32, %arg1: i32) -> (i32, i32, i32, i32) {
    %c0_i32 = arith.constant 0 : i32
    %c0_i32_0 = arith.constant 0 : i32
    %c0_i32_1 = arith.constant 0 : i32
    return %arg0, %arg1, %c0_i32, %c0_i32_0 : i32, i32, i32, i32
  }
  func.func @transform_2(%arg0: i32, %arg1: i32) -> (i32, i32, i32, i32) {
    %c0_i32 = arith.constant 0 : i32
    %c0_i32_0 = arith.constant 0 : i32
    %c0_i32_1 = arith.constant 0 : i32
    %c0_i32_2 = arith.constant 0 : i32
    return %arg0, %c0_i32, %c0_i32_0, %c0_i32_1 : i32, i32, i32, i32
  }
  func.func @transform_3(%arg0: i32, %arg1: i32) -> (i32, i32, i32) {
    %c0_i32 = arith.constant 0 : i32
    %c0_i32_0 = arith.constant 0 : i32
    %c0_i32_1 = arith.constant 0 : i32
    return %arg0, %c0_i32, %c0_i32_0 : i32, i32, i32
  }
  func.func @transform_4(%arg0: i32, %arg1: i32) -> (i32, i32, i32, i32) {
    %c0_i32 = arith.constant 0 : i32
    %c0_i32_0 = arith.constant 0 : i32
    %c0_i32_1 = arith.constant 0 : i32
    %c0_i32_2 = arith.constant 0 : i32
    return %arg0, %c0_i32, %c0_i32_0, %c0_i32_1 : i32, i32, i32, i32
  }
  func.func @transform_5(%arg0: i32, %arg1: i32) -> (i32, i32, i32) {
    %c0_i32 = arith.constant 0 : i32
    %c0_i32_0 = arith.constant 0 : i32
    %c0_i32_1 = arith.constant 0 : i32
    return %arg0, %c0_i32, %c0_i32_0 : i32, i32, i32
  }
  func.func @transform_6(%arg0: i32, %arg1: i32) -> (i32, i32, i32, i32) {
    %c0_i32 = arith.constant 0 : i32
    %c0_i32_0 = arith.constant 0 : i32
    %c0_i32_1 = arith.constant 0 : i32
    return %arg0, %arg1, %c0_i32, %c0_i32_0 : i32, i32, i32, i32
  }
}

module attributes {stable_mosaic.version = 11 : i64} {
  func.func @_final_kernel(%arg0: i32, %arg1: i32, %arg2: memref<1x1x3x16xbf16, #tpu.memory_space<vmem>>, %arg3: memref<1x3x1x3xbf16, #tpu.memory_space<vmem>>, %arg4: memref<1x1x1xf32, #tpu.memory_space<vmem>>, %arg5: memref<1x1x1x16xf32, #tpu.memory_space<vmem>>) attributes {dimension_semantics = [#tpu.dimension_semantics<parallel>, #tpu.dimension_semantics<parallel>], iteration_bounds = array<i64: 3, 2>, scalar_prefetch = 0 : i64, scratch_operands = 0 : i64, tpu.core_type = #tpu.core_type<tc>, window_params = [{transform_indices = @transform_0, window_bounds = array<i64: 1, 1, 3, 16>}, {transform_indices = @transform_1, window_bounds = array<i64: 1, 3, 1, 3>}, {transform_indices = @transform_2, window_bounds = array<i64: 1, 1, 1>}, {transform_indices = @transform_3, window_bounds = array<i64: 1, 1, 1, 16>}]} {
    %c0 = arith.constant 0 : index
    %c0_0 = arith.constant 0 : index
    %c0_1 = arith.constant 0 : index
    %c0_2 = arith.constant 0 : index
    %0 = vector.load %arg2[%c0, %c0_0, %c0_1, %c0_2] : memref<1x1x3x16xbf16, #tpu.memory_space<vmem>>, vector<1x1x3x16xbf16>
    %1 = vector.shape_cast %0 : vector<1x1x3x16xbf16> to vector<3x16xbf16>
    %c0_3 = arith.constant 0 : index
    %c0_4 = arith.constant 0 : index
    %c0_5 = arith.constant 0 : index
    %c0_6 = arith.constant 0 : index
    %2 = vector.load %arg3[%c0_3, %c0_4, %c0_5, %c0_6] : memref<1x3x1x3xbf16, #tpu.memory_space<vmem>>, vector<1x3x1x3xbf16>
    %3 = vector.shape_cast %2 : vector<1x3x1x3xbf16> to vector<3x1x3xbf16>
    %c0_7 = arith.constant 0 : index
    %c0_8 = arith.constant 0 : index
    %c0_9 = arith.constant 0 : index
    %4 = vector.load %arg4[%c0_7, %c0_8, %c0_9] : memref<1x1x1xf32, #tpu.memory_space<vmem>>, vector<1x1x1xf32>
    %5 = vector.shape_cast %4 : vector<1x1x1xf32> to vector<1x1xf32>
    %6 = vector.extract_strided_slice %3 {offsets = [0, 0, 0], sizes = [1, 1, 3], strides = [1, 1, 1]} : vector<3x1x3xbf16> to vector<1x1x3xbf16>
    %7 = vector.shape_cast %6 : vector<1x1x3xbf16> to vector<1x3xbf16>
    %cst = arith.constant 0.000000e+00 : bf16
    %8 = vector.broadcast %cst : bf16 to vector<3x1xbf16>
    %9 = vector.extract_strided_slice %1 {offsets = [0, 0], sizes = [3, 15], strides = [1, 1]} : vector<3x16xbf16> to vector<3x15xbf16>
    %10 = tpu.concatenate %8, %9 in 1 : vector<3x1xbf16>, vector<3x15xbf16> -> vector<3x16xbf16>
    %cst_10 = arith.constant dense<0.000000e+00> : vector<1x16xf32>
    %11 = tpu.matmul %7, %10, %cst_10 {dimension_numbers = #tpu.dot_dimension_numbers<[1], [0], [0], [1], [0, 0, 1, 1], [], []>} : vector<1x3xbf16>, vector<3x16xbf16>, vector<1x16xf32> -> vector<1x16xf32>
    %12 = vector.extract_strided_slice %3 {offsets = [1, 0, 0], sizes = [1, 1, 3], strides = [1, 1, 1]} : vector<3x1x3xbf16> to vector<1x1x3xbf16>
    %13 = vector.shape_cast %12 : vector<1x1x3xbf16> to vector<1x3xbf16>
    %cst_11 = arith.constant dense<0.000000e+00> : vector<1x16xf32>
    %14 = tpu.matmul %13, %1, %cst_11 {dimension_numbers = #tpu.dot_dimension_numbers<[1], [0], [0], [1], [0, 0, 1, 1], [], []>} : vector<1x3xbf16>, vector<3x16xbf16>, vector<1x16xf32> -> vector<1x16xf32>
    %15 = arith.addf %11, %14 : vector<1x16xf32>
    %16 = vector.extract_strided_slice %3 {offsets = [2, 0, 0], sizes = [1, 1, 3], strides = [1, 1, 1]} : vector<3x1x3xbf16> to vector<1x1x3xbf16>
    %17 = vector.shape_cast %16 : vector<1x1x3xbf16> to vector<1x3xbf16>
    %cst_12 = arith.constant 0.000000e+00 : bf16
    %18 = vector.broadcast %cst_12 : bf16 to vector<3x1xbf16>
    %19 = vector.extract_strided_slice %1 {offsets = [0, 1], sizes = [3, 15], strides = [1, 1]} : vector<3x16xbf16> to vector<3x15xbf16>
    %20 = tpu.concatenate %19, %18 in 1 : vector<3x15xbf16>, vector<3x1xbf16> -> vector<3x16xbf16>
    %cst_13 = arith.constant dense<0.000000e+00> : vector<1x16xf32>
    %21 = tpu.matmul %17, %20, %cst_13 {dimension_numbers = #tpu.dot_dimension_numbers<[1], [0], [0], [1], [0, 0, 1, 1], [], []>} : vector<1x3xbf16>, vector<3x16xbf16>, vector<1x16xf32> -> vector<1x16xf32>
    %22 = arith.addf %15, %21 : vector<1x16xf32>
    %23 = vector.broadcast %5 : vector<1x1xf32> to vector<1x16xf32>
    %24 = arith.addf %22, %23 : vector<1x16xf32>
    %c0_14 = arith.constant 0 : index
    %c0_15 = arith.constant 0 : index
    %c0_16 = arith.constant 0 : index
    %c0_17 = arith.constant 0 : index
    %25 = vector.load %arg5[%c0_14, %c0_15, %c0_16, %c0_17] : memref<1x1x1x16xf32, #tpu.memory_space<vmem>>, vector<1x1x1x16xf32>
    %26 = vector.shape_cast %25 : vector<1x1x1x16xf32> to vector<1x16xf32>
    %27 = vector.shape_cast %24 : vector<1x16xf32> to vector<1x1x1x16xf32>
    tpu.vector_store %arg5[%c0_14, %c0_15, %c0_16, %c0_17], %27 {strides = array<i32>} : memref<1x1x1x16xf32, #tpu.memory_space<vmem>>, vector<1x1x1x16xf32>,
    return
  }
  func.func @transform_0(%arg0: i32, %arg1: i32) -> (i32, i32, i32, i32) {
    %c0_i32 = arith.constant 0 : i32
    %c0_i32_0 = arith.constant 0 : i32
    %c0_i32_1 = arith.constant 0 : i32
    return %arg0, %arg1, %c0_i32, %c0_i32_0 : i32, i32, i32, i32
  }
  func.func @transform_1(%arg0: i32, %arg1: i32) -> (i32, i32, i32, i32) {
    %c0_i32 = arith.constant 0 : i32
    %c0_i32_0 = arith.constant 0 : i32
    %c0_i32_1 = arith.constant 0 : i32
    %c0_i32_2 = arith.constant 0 : i32
    return %arg0, %c0_i32, %c0_i32_0, %c0_i32_1 : i32, i32, i32, i32
  }
  func.func @transform_2(%arg0: i32, %arg1: i32) -> (i32, i32, i32) {
    %c0_i32 = arith.constant 0 : i32
    %c0_i32_0 = arith.constant 0 : i32
    %c0_i32_1 = arith.constant 0 : i32
    return %arg0, %c0_i32, %c0_i32_0 : i32, i32, i32
  }
  func.func @transform_3(%arg0: i32, %arg1: i32) -> (i32, i32, i32, i32) {
    %c0_i32 = arith.constant 0 : i32
    %c0_i32_0 = arith.constant 0 : i32
    %c0_i32_1 = arith.constant 0 : i32
    return %arg0, %arg1, %c0_i32, %c0_i32_0 : i32, i32, i32, i32
  }
}

</mosaic_0001>

<llo_original>
// kernel: glow_network.7
$region0: #{glow_network.7}
  #allocation0 [shape = 'u32[]', space=smem, size = 0x4, offset = 0x4, fixed_abs, tag = 'smem constant byte address 0x4 - core index']
  #allocation1 [shape = 'u32[144,128]{1,0:T(1,128)}', space=vmem, size = 0x12000, scoped, tag = 'internal scratch']
  %s0 = inlined_call_operand.vmem [shape: bf16[2,6,4], index: 0, kind: input, shape index: {}]
  %s1 = inlined_call_operand.vmem [shape: bf16[3,3,4,6], index: 1, kind: input, shape index: {}]
  %s2 = inlined_call_operand.vmem [shape: f32[3,4,1], index: 2, kind: input, shape index: {}]
  %s3 = inlined_call_operand.vmem [shape: bf16[3,3,4,4], index: 3, kind: input, shape index: {}]
  %s4 = inlined_call_operand.vmem [shape: f32[3,4,1], index: 4, kind: input, shape index: {}]
  %s5 = inlined_call_operand.vmem [shape: bf16[3,2,4,8], index: 5, kind: output, shape index: {}]
  %s6 = sld [smem:[#allocation0]]
  $region53: #{glow_network.7} parent=0
    _
  %s8 = ssub.s32 1, %s6
  %s9 = scalar_select 0, %s8, %s6
  loop: start=0, step=1, limit=8
  $region2: #{glow_network.7} parent=0 // loop_pre_header
    _
  $region3: #{glow_network.7} parent=0 // loop_header
    %s11 = sphi 0, %s15
    %p12 = scmp.ge.s32.totalorder %s11, 8
    %s18 = sphi 0, %s30
    %s19 = sphi 0, %s26
    %s20 = sphi 0, %s18
    %s21 = sphi 0, %s19
    %s22 = sphi 0, %s20
    %s23 = sphi 0, %s21
    %s33 = sphi 0, %s35
    %s36 = sphi 0, %s33
    %s37 = sphi 0, %s36
    %s53 = sphi 0, %s37
    %s59 = sphi 0, %s61
    %s62 = sphi 0, %s59
    %s63 = sphi 0, %s62
    %s79 = sphi 0, %s63
    %s85 = sphi 0, %s87
    %s88 = sphi 0, %s85
    %s89 = sphi 0, %s88
    %s105 = sphi 0, %s89
    %s111 = sphi 0, %s113
    %s114 = sphi 0, %s111
    %s115 = sphi 0, %s114
    %s131 = sphi 0, %s115
    %s137 = sphi 0, %s139
    %s140 = sphi 0, %s137
    %s141 = sphi 0, %s140
    %s157 = sphi 0, %s141
    %s165 = sphi 0, %s167
    %s168 = sphi 0, %s165
    %s169 = sphi 0, %s168
    %s185 = sphi 0, %s169
  $region4: #{glow_network.7} parent=0 // loop_header_branch
    %14 = sbr.rel (%p12) target = $region8
  $region5: #{glow_network.7} parent=0 // loop_body
    %s16 = ssub.s32 %s11, 1
    %s17 = ssub.s32 %s11, 2
    %s24 = sadd.s32 1, %s19
    %p25 = scmp.ge.s32.totalorder %s24, 2
    %s26 = scalar_select %p25, 0, %s24
    %s27 = sadd.s32 1, %s18
    %s28 = scalar_select %p25, %s27, %s18
    %p29 = scmp.ge.s32.totalorder %s28, 3
    %s30 = scalar_select %p29, 0, %s28
    %s31 = ssub.s32 %s19, %s26
    %p32 = scmp.eq.s32.totalorder %s31, 0
    %s34 = sadd.s32 %s33, 1
    %s35 = scalar_select %p32, %s33, %s34
    %p38 = pneg %p32
    %p39 = scmp.eq.s32.totalorder %s11, 5
    %p40 = por %p38, %p39
    %p41 = scmp.ne.s32.totalorder %s33, %s36
    %p42 = scmp.eq.s32.totalorder %s11, 0
    %p43 = por %p41, %p42
    %p44 = scmp.ne.s32.totalorder %s33, %s36
    %p45 = scmp.eq.s32.totalorder %s16, 5
    %p46 = por %p44, %p45
    %p47 = scmp.ne.s32.totalorder %s36, %s37
    %p48 = scmp.eq.s32.totalorder %s16, 0
    %p49 = por %p47, %p48
    %p50 = scmp.ne.s32.totalorder %s36, %s37
    %p51 = scmp.eq.s32.totalorder %s17, 5
    %p52 = por %p50, %p51
    %p54 = scmp.ne.s32.totalorder %s37, %s53
    %p55 = scmp.eq.s32.totalorder %s17, 0
    %p56 = por %p54, %p55
    %s57 = ssub.s32 %s18, %s30
    %p58 = scmp.eq.s32.totalorder %s57, 0
    %s60 = sadd.s32 %s59, 1
    %s61 = scalar_select %p58, %s59, %s60
    %p64 = pneg %p58
    %p65 = scmp.eq.s32.totalorder %s11, 5
    %p66 = por %p64, %p65
    %p67 = scmp.ne.s32.totalorder %s59, %s62
    %p68 = scmp.eq.s32.totalorder %s11, 0
    %p69 = por %p67, %p68
    %p70 = scmp.ne.s32.totalorder %s59, %s62
    %p71 = scmp.eq.s32.totalorder %s16, 5
    %p72 = por %p70, %p71
    %p73 = scmp.ne.s32.totalorder %s62, %s63
    %p74 = scmp.eq.s32.totalorder %s16, 0
    %p75 = por %p73, %p74
    %p76 = scmp.ne.s32.totalorder %s62, %s63
    %p77 = scmp.eq.s32.totalorder %s17, 5
    %p78 = por %p76, %p77
    %p80 = scmp.ne.s32.totalorder %s63, %s79
    %p81 = scmp.eq.s32.totalorder %s17, 0
    %p82 = por %p80, %p81
    %s83 = ssub.s32 %s18, %s30
    %p84 = scmp.eq.s32.totalorder %s83, 0
    %s86 = sadd.s32 %s85, 1
    %s87 = scalar_select %p84, %s85, %s86
    %p90 = pneg %p84
    %p91 = scmp.eq.s32.totalorder %s11, 5
    %p92 = por %p90, %p91
    %p93 = scmp.ne.s32.totalorder %s85, %s88
    %p94 = scmp.eq.s32.totalorder %s11, 0
    %p95 = por %p93, %p94
    %p96 = scmp.ne.s32.totalorder %s85, %s88
    %p97 = scmp.eq.s32.totalorder %s16, 5
    %p98 = por %p96, %p97
    %p99 = scmp.ne.s32.totalorder %s88, %s89
    %p100 = scmp.eq.s32.totalorder %s16, 0
    %p101 = por %p99, %p100
    %p102 = scmp.ne.s32.totalorder %s88, %s89
    %p103 = scmp.eq.s32.totalorder %s17, 5
    %p104 = por %p102, %p103
    %p106 = scmp.ne.s32.totalorder %s89, %s105
    %p107 = scmp.eq.s32.totalorder %s17, 0
    %p108 = por %p106, %p107
    %s109 = ssub.s32 %s18, %s30
    %p110 = scmp.eq.s32.totalorder %s109, 0
    %s112 = sadd.s32 %s111, 1
    %s113 = scalar_select %p110, %s111, %s112
    %p116 = pneg %p110
    %p117 = scmp.eq.s32.totalorder %s11, 5
    %p118 = por %p116, %p117
    %p119 = scmp.ne.s32.totalorder %s111, %s114
    %p120 = scmp.eq.s32.totalorder %s11, 0
    %p121 = por %p119, %p120
    %p122 = scmp.ne.s32.totalorder %s111, %s114
    %p123 = scmp.eq.s32.totalorder %s16, 5
    %p124 = por %p122, %p123
    %p125 = scmp.ne.s32.totalorder %s114, %s115
    %p126 = scmp.eq.s32.totalorder %s16, 0
    %p127 = por %p125, %p126
    %p128 = scmp.ne.s32.totalorder %s114, %s115
    %p129 = scmp.eq.s32.totalorder %s17, 5
    %p130 = por %p128, %p129
    %p132 = scmp.ne.s32.totalorder %s115, %s131
    %p133 = scmp.eq.s32.totalorder %s17, 0
    %p134 = por %p132, %p133
    %s135 = ssub.s32 %s18, %s30
    %p136 = scmp.eq.s32.totalorder %s135, 0
    %s138 = sadd.s32 %s137, 1
    %s139 = scalar_select %p136, %s137, %s138
    %p142 = pneg %p136
    %p143 = scmp.eq.s32.totalorder %s11, 5
    %p144 = por %p142, %p143
    %p145 = scmp.ne.s32.totalorder %s137, %s140
    %p146 = scmp.eq.s32.totalorder %s11, 0
    %p147 = por %p145, %p146
    %p148 = scmp.ne.s32.totalorder %s137, %s140
    %p149 = scmp.eq.s32.totalorder %s16, 5
    %p150 = por %p148, %p149
    %p151 = scmp.ne.s32.totalorder %s140, %s141
    %p152 = scmp.eq.s32.totalorder %s16, 0
    %p153 = por %p151, %p152
    %p154 = scmp.ne.s32.totalorder %s140, %s141
    %p155 = scmp.eq.s32.totalorder %s17, 5
    %p156 = por %p154, %p155
    %p158 = scmp.ne.s32.totalorder %s141, %s157
    %p159 = scmp.eq.s32.totalorder %s17, 0
    %p160 = por %p158, %p159
    %s161 = ssub.s32 %s18, %s30
    %s162 = ssub.s32 %s19, %s26
    %s163 = sor.u32 %s161, %s162
    %p164 = scmp.eq.s32.totalorder %s163, 0
    %s166 = sadd.s32 %s165, 1
    %s167 = scalar_select %p164, %s165, %s166
    %p170 = pneg %p164
    %p171 = scmp.eq.s32.totalorder %s11, 5
    %p172 = por %p170, %p171
    %p173 = scmp.ne.s32.totalorder %s165, %s168
    %p174 = scmp.eq.s32.totalorder %s11, 0
    %p175 = por %p173, %p174
    %p176 = scmp.ne.s32.totalorder %s165, %s168
    %p177 = scmp.eq.s32.totalorder %s16, 5
    %p178 = por %p176, %p177
    %p179 = scmp.ne.s32.totalorder %s168, %s169
    %p180 = scmp.eq.s32.totalorder %s16, 0
    %p181 = por %p179, %p180
    %p182 = scmp.ne.s32.totalorder %s168, %s169
    %p183 = scmp.eq.s32.totalorder %s17, 5
    %p184 = por %p182, %p183
    %p186 = scmp.ne.s32.totalorder %s169, %s185
    %p187 = scmp.eq.s32.totalorder %s17, 0
    %p188 = por %p186, %p187
    %p189 = scmp.le.s32.totalorder 1, %s11
    %p190 = scmp.lt.s32.totalorder %s11, 7
    %p191 = pnand %p189, %p190
    %p192 = pneg %p191
    // Predicated region
    $region9: #{glow_network.7} parent=5 // pred_check
      _
    $region10: #{glow_network.7} parent=5 // pred_check_branch
      %194 = sbr.rel (%p191) target = $region12
    $region11: #{glow_network.7} parent=5 // pred_region
      %s195 = ssub.s32 %s11, 1
    $region12: #{glow_network.7} parent=5 // pred_fallthru
      _
    %p196 = scmp.lt.s32.totalorder %s11, 6
    // Predicated region
    $region13: #{glow_network.7} parent=5 // pred_check
      %p197 = pneg %p196
    $region14: #{glow_network.7} parent=5 // pred_check_branch
      %199 = sbr.rel (%p197) target = $region16
    $region15: #{glow_network.7} parent=5 // pred_region
      // Predicated region
      $region17: #{glow_network.7} parent=15 // pred_check
        %p200 = pneg %p43
      $region18: #{glow_network.7} parent=15 // pred_check_branch
        %202 = sbr.rel (%p200) target = $region20
      $region19: #{glow_network.7} parent=15 // pred_region
        %p203 = scmp.lt.s32.totalorder %s19, 1
        %s204 = scalar_select %p203, %s19, 1
        %s205 = smul.addr %s204, 4
        %s206 = scalar_lea.vmem %s0, %s205
      $region20: #{glow_network.7} parent=15 // pred_fallthru
        _
      // Predicated region
      $region21: #{glow_network.7} parent=15 // pred_check
        %p207 = pneg %p69
      $region22: #{glow_network.7} parent=15 // pred_check_branch
        %209 = sbr.rel (%p207) target = $region24
      $region23: #{glow_network.7} parent=15 // pred_region
        %p210 = scmp.lt.s32.totalorder %s18, 2
        %s211 = scalar_select %p210, %s18, 2
        %s212 = smul.addr %s211, 3
        %s213 = smul.addr %s212, 2
        %s214 = scalar_lea.vmem %s1, %s213
      $region24: #{glow_network.7} parent=15 // pred_fallthru
        _
      // Predicated region
      $region25: #{glow_network.7} parent=15 // pred_check
        %p215 = pneg %p95
      $region26: #{glow_network.7} parent=15 // pred_check_branch
        %217 = sbr.rel (%p215) target = $region28
      $region27: #{glow_network.7} parent=15 // pred_region
        %p218 = scmp.lt.s32.totalorder %s18, 2
        %s219 = scalar_select %p218, %s18, 2
        %s220 = smul.addr %s219, 4
        %s221 = scalar_lea.vmem %s2, %s220
      $region28: #{glow_network.7} parent=15 // pred_fallthru
        _
      // Predicated region
      $region29: #{glow_network.7} parent=15 // pred_check
        %p222 = pneg %p121
      $region30: #{glow_network.7} parent=15 // pred_check_branch
        %224 = sbr.rel (%p222) target = $region32
      $region31: #{glow_network.7} parent=15 // pred_region
        %p225 = scmp.lt.s32.totalorder %s18, 2
        %s226 = scalar_select %p225, %s18, 2
        %s227 = smul.addr %s226, 3
        %s228 = smul.addr %s227, 2
        %s229 = scalar_lea.vmem %s3, %s228
      $region32: #{glow_network.7} parent=15 // pred_fallthru
        _
      // Predicated region
      $region33: #{glow_network.7} parent=15 // pred_check
        %p230 = pneg %p147
      $region34: #{glow_network.7} parent=15 // pred_check_branch
        %232 = sbr.rel (%p230) target = $region36
      $region35: #{glow_network.7} parent=15 // pred_region
        %p233 = scmp.lt.s32.totalorder %s18, 2
        %s234 = scalar_select %p233, %s18, 2
        %s235 = smul.addr %s234, 4
        %s236 = scalar_lea.vmem %s4, %s235
      $region36: #{glow_network.7} parent=15 // pred_fallthru
        _
    $region16: #{glow_network.7} parent=5 // pred_fallthru
      _
    %p237 = scmp.le.s32.totalorder 1, %s11
    %p238 = scmp.lt.s32.totalorder %s11, 7
    %p239 = pnand %p237, %p238
    %p240 = pneg %p239
    // Predicated region
    $region37: #{glow_network.7} parent=5 // pred_check
      _
    $region38: #{glow_network.7} parent=5 // pred_check_branch
      %242 = sbr.rel (%p239) target = $region40
    $region39: #{glow_network.7} parent=5 // pred_region
      %s243 = ssub.s32 %s11, 1
      %p244 = scmp.lt.s32.totalorder %s21, 1
      %s245 = scalar_select %p244, %s21, 1
      %s246 = smul.addr %s245, 4
      %s247 = scalar_lea.vmem %s0, %s246
      %p248 = pneg %p49
      %p249 = pneg %p46
      %p250 = scmp.lt.s32.totalorder %s20, 2
      %s251 = scalar_select %p250, %s20, 2
      %s252 = smul.addr %s251, 3
      %s253 = smul.addr %s252, 2
      %s254 = scalar_lea.vmem %s1, %s253
      %p255 = pneg %p75
      %p256 = pneg %p72
      %p257 = scmp.lt.s32.totalorder %s20, 2
      %s258 = scalar_select %p257, %s20, 2
      %s259 = smul.addr %s258, 4
      %s260 = scalar_lea.vmem %s2, %s259
      %p261 = pneg %p101
      %p262 = pneg %p98
      %p263 = scmp.lt.s32.totalorder %s20, 2
      %s264 = scalar_select %p263, %s20, 2
      %s265 = smul.addr %s264, 3
      %s266 = smul.addr %s265, 2
      %s267 = scalar_lea.vmem %s3, %s266
      %p268 = pneg %p127
      %p269 = pneg %p124
      %p270 = scmp.lt.s32.totalorder %s20, 2
      %s271 = scalar_select %p270, %s20, 2
      %s272 = smul.addr %s271, 4
      %s273 = scalar_lea.vmem %s4, %s272
      %p274 = pneg %p153
      %p275 = pneg %p150
      %p276 = pneg %p181
      %p277 = pneg %p178
      %p278 = scmp.lt.s32.totalorder %s20, 2
      %s279 = scalar_select %p278, %s20, 2
      %p280 = scmp.lt.s32.totalorder %s21, 1
      %s281 = scalar_select %p280, %s21, 1
      %s282 = smul.addr %s279, 2
      %s283 = sadd.s32 %s281, %s282
      %s284 = smul.addr %s283, 2
      %s285 = scalar_lea.vmem %s5, %s284
      %p286 = scmp.lt.s32.totalorder %s21, 1
      %s287 = scalar_select %p286, %s21, 1
      %s288 = smul.addr %s287, 4
      %s289 = scalar_lea.vmem %s0, %s288
      %p290 = scmp.lt.s32.totalorder %s20, 2
      %s291 = scalar_select %p290, %s20, 2
      %s292 = smul.addr %s291, 3
      %s293 = smul.addr %s292, 2
      %s294 = scalar_lea.vmem %s1, %s293
      %p295 = scmp.lt.s32.totalorder %s20, 2
      %s296 = scalar_select %p295, %s20, 2
      %s297 = smul.addr %s296, 4
      %s298 = scalar_lea.vmem %s2, %s297
      %p299 = scmp.lt.s32.totalorder %s20, 2
      %s300 = scalar_select %p299, %s20, 2
      %s301 = smul.addr %s300, 3
      %s302 = smul.addr %s301, 2
      %s303 = scalar_lea.vmem %s3, %s302
      %p304 = scmp.lt.s32.totalorder %s20, 2
      %s305 = scalar_select %p304, %s20, 2
      %s306 = smul.addr %s305, 4
      %s307 = scalar_lea.vmem %s4, %s306
      %p308 = scmp.lt.s32.totalorder %s20, 2
      %s309 = scalar_select %p308, %s20, 2
      %p310 = scmp.lt.s32.totalorder %s21, 1
      %s311 = scalar_select %p310, %s21, 1
      %s312 = smul.addr %s309, 2
      %s313 = sadd.s32 %s311, %s312
      %s314 = smul.addr %s313, 2
      %s315 = scalar_lea.vmem %s5, %s314
      %v317 = vld [vmem:[%s289] sm:$0x7]
      %v318 = vlaneseq
      %v319 = vshrl.u32 %v318, 7
      %v320 = vlaneseq
      %v321 = vand.u32 %v320, 127
      %v322 = vmul.u32 %v319, 2
      %vm323 = vcmp.eq.s32.totalorder %v321, %v322
      %v324 = vadd.s32 %v322, 1
      %vm325 = vcmp.eq.s32.totalorder %v321, %v324
      %vm326 = vmor %vm323, %vm325
      %v327 = vsel %vm326, 1.0, 0.0
      %v328 = vpack.c.bf16 %v327, %v327
      %vm329 = vcmask 31744
      %v331 = vsel %vm329, %v317, 0
      %vm333 = vcmask 1041408
      %v335 = vsel %vm333, %v328, 0
      %337 = vmatprep.subr.bf16.mxu0 0
      %338 = vmatpush1.bf16.msra.mxu0 0
      %339 = vmatprep.subr.bf16.mxu0 0
      %340 = vmatpush1.bf16.msra.mxu0 0
      %341 = vmatprep.subr.bf16.mxu0 0
      %342 = vmatpush1.bf16.msra.mxu0 0
      %343 = vmatprep.subr.bf16.mxu0 0
      %344 = vmatpush1.bf16.msra.mxu0 0
      %345 = vmatprep.subr.bf16.mxu0 0
      %346 = vmatpush1.bf16.msra.mxu0 0
      %347 = vmatprep.subr.bf16.mxu0 0
      %348 = vmatpush1.bf16.msra.mxu0 0
      %349 = vmatprep.subr.bf16.mxu0 0
      %350 = vmatpush1.bf16.msra.mxu0 0
      %351 = vmatprep.subr.bf16.mxu0 0
      %352 = vmatpush1.bf16.msra.mxu0 %v335
      %353 = vmatprep.subr.bf16.mxu0 0
      %354 = vmatpush2.bf16.msra.mxu0 0
      %355 = vmatprep.subr.bf16.mxu0 0
      %356 = vmatpush2.bf16.msra.mxu0 0
      %357 = vmatprep.subr.bf16.mxu0 0
      %358 = vmatpush2.bf16.msra.mxu0 0
      %359 = vmatprep.subr.bf16.mxu0 0
      %360 = vmatpush2.bf16.msra.mxu0 0
      %361 = vmatprep.subr.bf16.mxu0 0
      %362 = vmatpush2.bf16.msra.mxu0 0
      %363 = vmatprep.subr.bf16.mxu0 0
      %364 = vmatpush2.bf16.msra.mxu0 0
      %365 = vmatprep.subr.bf16.mxu0 0
      %366 = vmatpush2.bf16.msra.mxu0 0
      %367 = vmatprep.subr.bf16.mxu0 0
      %368 = vmatpush2.bf16.msra.mxu0 0
      %369 = vmatprep.mubr.bf16.mxu0 0
      %370 = vmatmul.mubr.bf16.gmra.mxu0 %v331
      %v371 = vpop.f32.mrf.mxu0
      %v372 = vadd.f32 0.0, %v371
      %v373 = vpop.f32.mrf.mxu0
      %v374 = vpop.f32.mrf.mxu0
      %v375 = vpop.f32.mrf.mxu0
      %376 = vdwg.mxu0
      %v377 = vpack.c.bf16 %v372, %v372
      %v378 = vld [vmem:[%s294] sm:$0x3]
      %v379 = vld [vmem:[%s294 + $0x2] sm:$0x3]
      %v380 = vld [vmem:[%s294 + $0x4] sm:$0x3]
      %v381 = vld [vmem:[%s298] sm:$0xf]
      %383 = vrot.lane.b32.xlu0 %v377, 1
      %v384 = vpop.permute.xlu0 %383
      %vm385 = vcmask 7168
      %v388 = vsel %vm385, 0, %v384
      %vm389 = vcmask 48128
      %v391 = vsel %vm389, %v379, 0
      %vm393 = vcmask 1042432
      %v395 = vsel %vm393, %v377, 0
      %397 = vmatprep.subr.bf16.mxu0 0
      %398 = vmatpush1.bf16.msra.mxu0 0
      %399 = vmatprep.subr.bf16.mxu0 0
      %400 = vmatpush1.bf16.msra.mxu0 0
      %401 = vmatprep.subr.bf16.mxu0 0
      %402 = vmatpush1.bf16.msra.mxu0 0
      %403 = vmatprep.subr.bf16.mxu0 0
      %404 = vmatpush1.bf16.msra.mxu0 0
      %405 = vmatprep.subr.bf16.mxu0 0
      %406 = vmatpush1.bf16.msra.mxu0 0
      %407 = vmatprep.subr.bf16.mxu0 0
      %408 = vmatpush1.bf16.msra.mxu0 0
      %409 = vmatprep.subr.bf16.mxu0 0
      %410 = vmatpush1.bf16.msra.mxu0 0
      %411 = vmatprep.subr.bf16.mxu0 0
      %412 = vmatpush1.bf16.msra.mxu0 %v395
      %413 = vmatprep.subr.bf16.mxu0 0
      %414 = vmatpush2.bf16.msra.mxu0 0
      %415 = vmatprep.subr.bf16.mxu0 0
      %416 = vmatpush2.bf16.msra.mxu0 0
      %417 = vmatprep.subr.bf16.mxu0 0
      %418 = vmatpush2.bf16.msra.mxu0 0
      %419 = vmatprep.subr.bf16.mxu0 0
      %420 = vmatpush2.bf16.msra.mxu0 0
      %421 = vmatprep.subr.bf16.mxu0 0
      %422 = vmatpush2.bf16.msra.mxu0 0
      %423 = vmatprep.subr.bf16.mxu0 0
      %424 = vmatpush2.bf16.msra.mxu0 0
      %425 = vmatprep.subr.bf16.mxu0 0
      %426 = vmatpush2.bf16.msra.mxu0 0
      %427 = vmatprep.subr.bf16.mxu0 0
      %428 = vmatpush2.bf16.msra.mxu0 0
      %429 = vmatprep.mubr.bf16.mxu0 0
      %430 = vmatmul.mubr.bf16.gmra.mxu0 %v391
      %v431 = vpop.f32.mrf.mxu0
      %v432 = vadd.f32 0.0, %v431
      %v433 = vpop.f32.mrf.mxu0
      %v434 = vpop.f32.mrf.mxu0
      %v435 = vpop.f32.mrf.mxu0
      %436 = vdwg.mxu0
      %v438 = vsel %vm389, %v378, 0
      %v440 = vsel %vm393, %v388, 0
      %442 = vmatprep.subr.bf16.mxu0 0
      %443 = vmatpush1.bf16.msra.mxu0 0
      %444 = vmatprep.subr.bf16.mxu0 0
      %445 = vmatpush1.bf16.msra.mxu0 0
      %446 = vmatprep.subr.bf16.mxu0 0
      %447 = vmatpush1.bf16.msra.mxu0 0
      %448 = vmatprep.subr.bf16.mxu0 0
      %449 = vmatpush1.bf16.msra.mxu0 0
      %450 = vmatprep.subr.bf16.mxu0 0
      %451 = vmatpush1.bf16.msra.mxu0 0
      %452 = vmatprep.subr.bf16.mxu0 0
      %453 = vmatpush1.bf16.msra.mxu0 0
      %454 = vmatprep.subr.bf16.mxu0 0
      %455 = vmatpush1.bf16.msra.mxu0 0
      %456 = vmatprep.subr.bf16.mxu0 0
      %457 = vmatpush1.bf16.msra.mxu0 %v440
      %458 = vmatprep.subr.bf16.mxu0 0
      %459 = vmatpush2.bf16.msra.mxu0 0
      %460 = vmatprep.subr.bf16.mxu0 0
      %461 = vmatpush2.bf16.msra.mxu0 0
      %462 = vmatprep.subr.bf16.mxu0 0
      %463 = vmatpush2.bf16.msra.mxu0 0
      %464 = vmatprep.subr.bf16.mxu0 0
      %465 = vmatpush2.bf16.msra.mxu0 0
      %466 = vmatprep.subr.bf16.mxu0 0
      %467 = vmatpush2.bf16.msra.mxu0 0
      %468 = vmatprep.subr.bf16.mxu0 0
      %469 = vmatpush2.bf16.msra.mxu0 0
      %470 = vmatprep.subr.bf16.mxu0 0
      %471 = vmatpush2.bf16.msra.mxu0 0
      %472 = vmatprep.subr.bf16.mxu0 0
      %473 = vmatpush2.bf16.msra.mxu0 0
      %474 = vmatprep.mubr.bf16.mxu0 0
      %475 = vmatmul.mubr.bf16.gmra.mxu0 %v438
      %v476 = vpop.f32.mrf.mxu0
      %v477 = vadd.f32 %v432, %v476
      %v478 = vpop.f32.mrf.mxu0
      %v479 = vpop.f32.mrf.mxu0
      %v480 = vpop.f32.mrf.mxu0
      %481 = vdwg.mxu0
      %482 = vrot.lane.b32.xlu0 %v377, 127
      %v483 = vpop.permute.xlu0 %482
      %vm484 = vcmask 56320
      %v486 = vsel %vm484, %v483, 0
      %v488 = vsel %vm389, %v380, 0
      %v490 = vsel %vm393, %v486, 0
      %492 = vmatprep.subr.bf16.mxu0 0
      %493 = vmatpush1.bf16.msra.mxu0 0
      %494 = vmatprep.subr.bf16.mxu0 0
      %495 = vmatpush1.bf16.msra.mxu0 0
      %496 = vmatprep.subr.bf16.mxu0 0
      %497 = vmatpush1.bf16.msra.mxu0 0
      %498 = vmatprep.subr.bf16.mxu0 0
      %499 = vmatpush1.bf16.msra.mxu0 0
      %500 = vmatprep.subr.bf16.mxu0 0
      %501 = vmatpush1.bf16.msra.mxu0 0
      %502 = vmatprep.subr.bf16.mxu0 0
      %503 = vmatpush1.bf16.msra.mxu0 0
      %504 = vmatprep.subr.bf16.mxu0 0
      %505 = vmatpush1.bf16.msra.mxu0 0
      %506 = vmatprep.subr.bf16.mxu0 0
      %507 = vmatpush1.bf16.msra.mxu0 %v490
      %508 = vmatprep.subr.bf16.mxu0 0
      %509 = vmatpush2.bf16.msra.mxu0 0
      %510 = vmatprep.subr.bf16.mxu0 0
      %511 = vmatpush2.bf16.msra.mxu0 0
      %512 = vmatprep.subr.bf16.mxu0 0
      %513 = vmatpush2.bf16.msra.mxu0 0
      %514 = vmatprep.subr.bf16.mxu0 0
      %515 = vmatpush2.bf16.msra.mxu0 0
      %516 = vmatprep.subr.bf16.mxu0 0
      %517 = vmatpush2.bf16.msra.mxu0 0
      %518 = vmatprep.subr.bf16.mxu0 0
      %519 = vmatpush2.bf16.msra.mxu0 0
      %520 = vmatprep.subr.bf16.mxu0 0
      %521 = vmatpush2.bf16.msra.mxu0 0
      %522 = vmatprep.subr.bf16.mxu0 0
      %523 = vmatpush2.bf16.msra.mxu0 0
      %524 = vmatprep.mubr.bf16.mxu0 0
      %525 = vmatmul.mubr.bf16.gmra.mxu0 %v488
      %v526 = vpop.f32.mrf.mxu0
      %v527 = vadd.f32 0.0, %v526
      %v528 = vpop.f32.mrf.mxu0
      %v529 = vpop.f32.mrf.mxu0
      %v530 = vpop.f32.mrf.mxu0
      %531 = vdwg.mxu0
      %v532 = vadd.f32 %v477, %v527
      %534 = vset.pattern.permute.xlu0 0
      %535 = vperm.xlu0 %534, %v381
      %v536 = vpop.permute.xlu0 %535
      %v538 = vadd.f32 %v532, %v536
      %v539 = vmax.f32 %v538, 0.0
      %v540 = vpack.c.bf16 %v539, %v539
      %v541 = vld [vmem:[%s303] sm:$0x3]
      %v542 = vld [vmem:[%s303 + $0x2] sm:$0x3]
      %v543 = vld [vmem:[%s303 + $0x4] sm:$0x3]
      %v544 = vld [vmem:[%s307] sm:$0xf]
      %546 = vrot.lane.b32.xlu0 %v540, 1
      %v547 = vpop.permute.xlu0 %546
      %v549 = vsel %vm385, 0, %v547
      %v551 = vsel %vm329, %v542, 0
      %v554 = vsel %vm333, %v540, 0
      %556 = vmatprep.subr.bf16.mxu0 0
      %557 = vmatpush1.bf16.msra.mxu0 0
      %558 = vmatprep.subr.bf16.mxu0 0
      %559 = vmatpush1.bf16.msra.mxu0 0
      %560 = vmatprep.subr.bf16.mxu0 0
      %561 = vmatpush1.bf16.msra.mxu0 0
      %562 = vmatprep.subr.bf16.mxu0 0
      %563 = vmatpush1.bf16.msra.mxu0 0
      %564 = vmatprep.subr.bf16.mxu0 0
      %565 = vmatpush1.bf16.msra.mxu0 0
      %566 = vmatprep.subr.bf16.mxu0 0
      %567 = vmatpush1.bf16.msra.mxu0 0
      %568 = vmatprep.subr.bf16.mxu0 0
      %569 = vmatpush1.bf16.msra.mxu0 0
      %570 = vmatprep.subr.bf16.mxu0 0
      %571 = vmatpush1.bf16.msra.mxu0 %v554
      %572 = vmatprep.subr.bf16.mxu0 0
      %573 = vmatpush2.bf16.msra.mxu0 0
      %574 = vmatprep.subr.bf16.mxu0 0
      %575 = vmatpush2.bf16.msra.mxu0 0
      %576 = vmatprep.subr.bf16.mxu0 0
      %577 = vmatpush2.bf16.msra.mxu0 0
      %578 = vmatprep.subr.bf16.mxu0 0
      %579 = vmatpush2.bf16.msra.mxu0 0
      %580 = vmatprep.subr.bf16.mxu0 0
      %581 = vmatpush2.bf16.msra.mxu0 0
      %582 = vmatprep.subr.bf16.mxu0 0
      %583 = vmatpush2.bf16.msra.mxu0 0
      %584 = vmatprep.subr.bf16.mxu0 0
      %585 = vmatpush2.bf16.msra.mxu0 0
      %586 = vmatprep.subr.bf16.mxu0 0
      %587 = vmatpush2.bf16.msra.mxu0 0
      %588 = vmatprep.mubr.bf16.mxu0 0
      %589 = vmatmul.mubr.bf16.gmra.mxu0 %v551
      %v590 = vpop.f32.mrf.mxu0
      %v591 = vadd.f32 0.0, %v590
      %v592 = vpop.f32.mrf.mxu0
      %v593 = vpop.f32.mrf.mxu0
      %v594 = vpop.f32.mrf.mxu0
      %595 = vdwg.mxu0
      %v597 = vsel %vm329, %v541, 0
      %v599 = vsel %vm333, %v549, 0
      %601 = vmatprep.subr.bf16.mxu0 0
      %602 = vmatpush1.bf16.msra.mxu0 0
      %603 = vmatprep.subr.bf16.mxu0 0
      %604 = vmatpush1.bf16.msra.mxu0 0
      %605 = vmatprep.subr.bf16.mxu0 0
      %606 = vmatpush1.bf16.msra.mxu0 0
      %607 = vmatprep.subr.bf16.mxu0 0
      %608 = vmatpush1.bf16.msra.mxu0 0
      %609 = vmatprep.subr.bf16.mxu0 0
      %610 = vmatpush1.bf16.msra.mxu0 0
      %611 = vmatprep.subr.bf16.mxu0 0
      %612 = vmatpush1.bf16.msra.mxu0 0
      %613 = vmatprep.subr.bf16.mxu0 0
      %614 = vmatpush1.bf16.msra.mxu0 0
      %615 = vmatprep.subr.bf16.mxu0 0
      %616 = vmatpush1.bf16.msra.mxu0 %v599
      %617 = vmatprep.subr.bf16.mxu0 0
      %618 = vmatpush2.bf16.msra.mxu0 0
      %619 = vmatprep.subr.bf16.mxu0 0
      %620 = vmatpush2.bf16.msra.mxu0 0
      %621 = vmatprep.subr.bf16.mxu0 0
      %622 = vmatpush2.bf16.msra.mxu0 0
      %623 = vmatprep.subr.bf16.mxu0 0
      %624 = vmatpush2.bf16.msra.mxu0 0
      %625 = vmatprep.subr.bf16.mxu0 0
      %626 = vmatpush2.bf16.msra.mxu0 0
      %627 = vmatprep.subr.bf16.mxu0 0
      %628 = vmatpush2.bf16.msra.mxu0 0
      %629 = vmatprep.subr.bf16.mxu0 0
      %630 = vmatpush2.bf16.msra.mxu0 0
      %631 = vmatprep.subr.bf16.mxu0 0
      %632 = vmatpush2.bf16.msra.mxu0 0
      %633 = vmatprep.mubr.bf16.mxu0 0
      %634 = vmatmul.mubr.bf16.gmra.mxu0 %v597
      %v635 = vpop.f32.mrf.mxu0
      %v636 = vadd.f32 %v591, %v635
      %v637 = vpop.f32.mrf.mxu0
      %v638 = vpop.f32.mrf.mxu0
      %v639 = vpop.f32.mrf.mxu0
      %640 = vdwg.mxu0
      %641 = vrot.lane.b32.xlu0 %v540, 127
      %v642 = vpop.permute.xlu0 %641
      %v644 = vsel %vm484, %v642, 0
      %v646 = vsel %vm329, %v543, 0
      %v648 = vsel %vm333, %v644, 0
      %650 = vmatprep.subr.bf16.mxu0 0
      %651 = vmatpush1.bf16.msra.mxu0 0
      %652 = vmatprep.subr.bf16.mxu0 0
      %653 = vmatpush1.bf16.msra.mxu0 0
      %654 = vmatprep.subr.bf16.mxu0 0
      %655 = vmatpush1.bf16.msra.mxu0 0
      %656 = vmatprep.subr.bf16.mxu0 0
      %657 = vmatpush1.bf16.msra.mxu0 0
      %658 = vmatprep.subr.bf16.mxu0 0
      %659 = vmatpush1.bf16.msra.mxu0 0
      %660 = vmatprep.subr.bf16.mxu0 0
      %661 = vmatpush1.bf16.msra.mxu0 0
      %662 = vmatprep.subr.bf16.mxu0 0
      %663 = vmatpush1.bf16.msra.mxu0 0
      %664 = vmatprep.subr.bf16.mxu0 0
      %665 = vmatpush1.bf16.msra.mxu0 %v648
      %666 = vmatprep.subr.bf16.mxu0 0
      %667 = vmatpush2.bf16.msra.mxu0 0
      %668 = vmatprep.subr.bf16.mxu0 0
      %669 = vmatpush2.bf16.msra.mxu0 0
      %670 = vmatprep.subr.bf16.mxu0 0
      %671 = vmatpush2.bf16.msra.mxu0 0
      %672 = vmatprep.subr.bf16.mxu0 0
      %673 = vmatpush2.bf16.msra.mxu0 0
      %674 = vmatprep.subr.bf16.mxu0 0
      %675 = vmatpush2.bf16.msra.mxu0 0
      %676 = vmatprep.subr.bf16.mxu0 0
      %677 = vmatpush2.bf16.msra.mxu0 0
      %678 = vmatprep.subr.bf16.mxu0 0
      %679 = vmatpush2.bf16.msra.mxu0 0
      %680 = vmatprep.subr.bf16.mxu0 0
      %681 = vmatpush2.bf16.msra.mxu0 0
      %682 = vmatprep.mubr.bf16.mxu0 0
      %683 = vmatmul.mubr.bf16.gmra.mxu0 %v646
      %v684 = vpop.f32.mrf.mxu0
      %v685 = vadd.f32 0.0, %v684
      %v686 = vpop.f32.mrf.mxu0
      %v687 = vpop.f32.mrf.mxu0
      %v688 = vpop.f32.mrf.mxu0
      %689 = vdwg.mxu0
      %v690 = vadd.f32 %v636, %v685
      %692 = vset.pattern.permute.xlu0 0
      %693 = vperm.xlu0 %692, %v544
      %v694 = vpop.permute.xlu0 %693
      %v696 = vadd.f32 %v690, %v694
      %v697 = vmax.f32 %v696, 0.0
      %v698 = vpack.c.bf16 %v697, %v697
      %vm699 = vcmask 58368
      %700 = vst.msk [vmem:[%s315] sm:$0x3] %vm699, %v698
      %p701 = scmp.lt.s32.totalorder %s20, 2
      %s702 = scalar_select %p701, %s20, 2
      %p703 = scmp.lt.s32.totalorder %s21, 1
      %s704 = scalar_select %p703, %s21, 1
      %s705 = smul.addr %s702, 2
      %s706 = sadd.s32 %s704, %s705
      %s707 = smul.addr %s706, 2
      %s708 = scalar_lea.vmem %s5, %s707
      // Predicated region
      $region41: #{glow_network.7} parent=39 // pred_check
        %p709 = pneg %p178
      $region42: #{glow_network.7} parent=39 // pred_check_branch
        %711 = sbr.rel (%p709) target = $region44
      $region43: #{glow_network.7} parent=39 // pred_region
        _
      $region44: #{glow_network.7} parent=39 // pred_fallthru
        _
    $region40: #{glow_network.7} parent=5 // pred_fallthru
      _
    %p712 = scmp.le.s32.totalorder 2, %s11
    // Predicated region
    $region45: #{glow_network.7} parent=5 // pred_check
      %p713 = pneg %p712
    $region46: #{glow_network.7} parent=5 // pred_check_branch
      %715 = sbr.rel (%p713) target = $region48
    $region47: #{glow_network.7} parent=5 // pred_region
      %s716 = ssub.s32 %s11, 2
      // Predicated region
      $region49: #{glow_network.7} parent=47 // pred_check
        %p717 = pneg %p184
      $region50: #{glow_network.7} parent=47 // pred_check_branch
        %719 = sbr.rel (%p717) target = $region52
      $region51: #{glow_network.7} parent=47 // pred_region
        %p720 = scmp.lt.s32.totalorder %s22, 2
        %s721 = scalar_select %p720, %s22, 2
        %p722 = scmp.lt.s32.totalorder %s23, 1
        %s723 = scalar_select %p722, %s23, 1
        %s724 = smul.addr %s721, 2
        %s725 = sadd.s32 %s723, %s724
        %s726 = smul.addr %s725, 2
        %s727 = scalar_lea.vmem %s5, %s726
      $region52: #{glow_network.7} parent=47 // pred_fallthru
        _
    $region48: #{glow_network.7} parent=5 // pred_fallthru
      _
  $region6: #{glow_network.7} parent=0 // loop_footer
    %s15 = sadd.s32 1, %s11
  $region7: #{glow_network.7} parent=0 // loop_footer_branch
    %10 = sbr.rel target = $region3
  $region8: #{glow_network.7} parent=0 // loop_exit
    _

// kernel: glow_network.8
$region0: #{glow_network.8}
  #allocation0 [shape = 'u32[]', space=smem, size = 0x4, offset = 0x4, fixed_abs, tag = 'smem constant byte address 0x4 - core index']
  #allocation1 [shape = 'u32[144,128]{1,0:T(1,128)}', space=vmem, size = 0x12000, scoped, tag = 'internal scratch']
  %s0 = inlined_call_operand.vmem [shape: bf16[2,4,8], index: 0, kind: input, shape index: {}]
  %s1 = inlined_call_operand.vmem [shape: bf16[3,2,4,8], index: 1, kind: input, shape index: {}]
  %s2 = inlined_call_operand.vmem [shape: bf16[3,3,3,4], index: 2, kind: input, shape index: {}]
  %s3 = inlined_call_operand.vmem [shape: f32[3,3,1], index: 3, kind: input, shape index: {}]
  %s4 = inlined_call_operand.vmem [shape: bf16[3,3,3,3], index: 4, kind: input, shape index: {}]
  %s5 = inlined_call_operand.vmem [shape: f32[3,3,1], index: 5, kind: input, shape index: {}]
  %s6 = inlined_call_operand.vmem [shape: bf16[3,2,3,16], index: 6, kind: output, shape index: {}]
  %s7 = sld [smem:[#allocation0]]
  $region57: #{glow_network.8} parent=0
    _
  %s9 = ssub.s32 1, %s7
  %s10 = scalar_select 0, %s9, %s7
  loop: start=0, step=1, limit=8
  $region2: #{glow_network.8} parent=0 // loop_pre_header
    _
  $region3: #{glow_network.8} parent=0 // loop_header
    %s12 = sphi 0, %s16
    %p13 = scmp.ge.s32.totalorder %s12, 8
    %s19 = sphi 0, %s31
    %s20 = sphi 0, %s27
    %s21 = sphi 0, %s19
    %s22 = sphi 0, %s20
    %s23 = sphi 0, %s21
    %s24 = sphi 0, %s22
    %s34 = sphi 0, %s36
    %s37 = sphi 0, %s34
    %s38 = sphi 0, %s37
    %s54 = sphi 0, %s38
    %s62 = sphi 0, %s64
    %s65 = sphi 0, %s62
    %s66 = sphi 0, %s65
    %s82 = sphi 0, %s66
    %s88 = sphi 0, %s90
    %s91 = sphi 0, %s88
    %s92 = sphi 0, %s91
    %s108 = sphi 0, %s92
    %s114 = sphi 0, %s116
    %s117 = sphi 0, %s114
    %s118 = sphi 0, %s117
    %s134 = sphi 0, %s118
    %s140 = sphi 0, %s142
    %s143 = sphi 0, %s140
    %s144 = sphi 0, %s143
    %s160 = sphi 0, %s144
    %s166 = sphi 0, %s168
    %s169 = sphi 0, %s166
    %s170 = sphi 0, %s169
    %s186 = sphi 0, %s170
    %s194 = sphi 0, %s196
    %s197 = sphi 0, %s194
    %s198 = sphi 0, %s197
    %s214 = sphi 0, %s198
  $region4: #{glow_network.8} parent=0 // loop_header_branch
    %15 = sbr.rel (%p13) target = $region8
  $region5: #{glow_network.8} parent=0 // loop_body
    %s17 = ssub.s32 %s12, 1
    %s18 = ssub.s32 %s12, 2
    %s25 = sadd.s32 1, %s20
    %p26 = scmp.ge.s32.totalorder %s25, 2
    %s27 = scalar_select %p26, 0, %s25
    %s28 = sadd.s32 1, %s19
    %s29 = scalar_select %p26, %s28, %s19
    %p30 = scmp.ge.s32.totalorder %s29, 3
    %s31 = scalar_select %p30, 0, %s29
    %s32 = ssub.s32 %s20, %s27
    %p33 = scmp.eq.s32.totalorder %s32, 0
    %s35 = sadd.s32 %s34, 1
    %s36 = scalar_select %p33, %s34, %s35
    %p39 = pneg %p33
    %p40 = scmp.eq.s32.totalorder %s12, 5
    %p41 = por %p39, %p40
    %p42 = scmp.ne.s32.totalorder %s34, %s37
    %p43 = scmp.eq.s32.totalorder %s12, 0
    %p44 = por %p42, %p43
    %p45 = scmp.ne.s32.totalorder %s34, %s37
    %p46 = scmp.eq.s32.totalorder %s17, 5
    %p47 = por %p45, %p46
    %p48 = scmp.ne.s32.totalorder %s37, %s38
    %p49 = scmp.eq.s32.totalorder %s17, 0
    %p50 = por %p48, %p49
    %p51 = scmp.ne.s32.totalorder %s37, %s38
    %p52 = scmp.eq.s32.totalorder %s18, 5
    %p53 = por %p51, %p52
    %p55 = scmp.ne.s32.totalorder %s38, %s54
    %p56 = scmp.eq.s32.totalorder %s18, 0
    %p57 = por %p55, %p56
    %s58 = ssub.s32 %s19, %s31
    %s59 = ssub.s32 %s20, %s27
    %s60 = sor.u32 %s58, %s59
    %p61 = scmp.eq.s32.totalorder %s60, 0
    %s63 = sadd.s32 %s62, 1
    %s64 = scalar_select %p61, %s62, %s63
    %p67 = pneg %p61
    %p68 = scmp.eq.s32.totalorder %s12, 5
    %p69 = por %p67, %p68
    %p70 = scmp.ne.s32.totalorder %s62, %s65
    %p71 = scmp.eq.s32.totalorder %s12, 0
    %p72 = por %p70, %p71
    %p73 = scmp.ne.s32.totalorder %s62, %s65
    %p74 = scmp.eq.s32.totalorder %s17, 5
    %p75 = por %p73, %p74
    %p76 = scmp.ne.s32.totalorder %s65, %s66
    %p77 = scmp.eq.s32.totalorder %s17, 0
    %p78 = por %p76, %p77
    %p79 = scmp.ne.s32.totalorder %s65, %s66
    %p80 = scmp.eq.s32.totalorder %s18, 5
    %p81 = por %p79, %p80
    %p83 = scmp.ne.s32.totalorder %s66, %s82
    %p84 = scmp.eq.s32.totalorder %s18, 0
    %p85 = por %p83, %p84
    %s86 = ssub.s32 %s19, %s31
    %p87 = scmp.eq.s32.totalorder %s86, 0
    %s89 = sadd.s32 %s88, 1
    %s90 = scalar_select %p87, %s88, %s89
    %p93 = pneg %p87
    %p94 = scmp.eq.s32.totalorder %s12, 5
    %p95 = por %p93, %p94
    %p96 = scmp.ne.s32.totalorder %s88, %s91
    %p97 = scmp.eq.s32.totalorder %s12, 0
    %p98 = por %p96, %p97
    %p99 = scmp.ne.s32.totalorder %s88, %s91
    %p100 = scmp.eq.s32.totalorder %s17, 5
    %p101 = por %p99, %p100
    %p102 = scmp.ne.s32.totalorder %s91, %s92
    %p103 = scmp.eq.s32.totalorder %s17, 0
    %p104 = por %p102, %p103
    %p105 = scmp.ne.s32.totalorder %s91, %s92
    %p106 = scmp.eq.s32.totalorder %s18, 5
    %p107 = por %p105, %p106
    %p109 = scmp.ne.s32.totalorder %s92, %s108
    %p110 = scmp.eq.s32.totalorder %s18, 0
    %p111 = por %p109, %p110
    %s112 = ssub.s32 %s19, %s31
    %p113 = scmp.eq.s32.totalorder %s112, 0
    %s115 = sadd.s32 %s114, 1
    %s116 = scalar_select %p113, %s114, %s115
    %p119 = pneg %p113
    %p120 = scmp.eq.s32.totalorder %s12, 5
    %p121 = por %p119, %p120
    %p122 = scmp.ne.s32.totalorder %s114, %s117
    %p123 = scmp.eq.s32.totalorder %s12, 0
    %p124 = por %p122, %p123
    %p125 = scmp.ne.s32.totalorder %s114, %s117
    %p126 = scmp.eq.s32.totalorder %s17, 5
    %p127 = por %p125, %p126
    %p128 = scmp.ne.s32.totalorder %s117, %s118
    %p129 = scmp.eq.s32.totalorder %s17, 0
    %p130 = por %p128, %p129
    %p131 = scmp.ne.s32.totalorder %s117, %s118
    %p132 = scmp.eq.s32.totalorder %s18, 5
    %p133 = por %p131, %p132
    %p135 = scmp.ne.s32.totalorder %s118, %s134
    %p136 = scmp.eq.s32.totalorder %s18, 0
    %p137 = por %p135, %p136
    %s138 = ssub.s32 %s19, %s31
    %p139 = scmp.eq.s32.totalorder %s138, 0
    %s141 = sadd.s32 %s140, 1
    %s142 = scalar_select %p139, %s140, %s141
    %p145 = pneg %p139
    %p146 = scmp.eq.s32.totalorder %s12, 5
    %p147 = por %p145, %p146
    %p148 = scmp.ne.s32.totalorder %s140, %s143
    %p149 = scmp.eq.s32.totalorder %s12, 0
    %p150 = por %p148, %p149
    %p151 = scmp.ne.s32.totalorder %s140, %s143
    %p152 = scmp.eq.s32.totalorder %s17, 5
    %p153 = por %p151, %p152
    %p154 = scmp.ne.s32.totalorder %s143, %s144
    %p155 = scmp.eq.s32.totalorder %s17, 0
    %p156 = por %p154, %p155
    %p157 = scmp.ne.s32.totalorder %s143, %s144
    %p158 = scmp.eq.s32.totalorder %s18, 5
    %p159 = por %p157, %p158
    %p161 = scmp.ne.s32.totalorder %s144, %s160
    %p162 = scmp.eq.s32.totalorder %s18, 0
    %p163 = por %p161, %p162
    %s164 = ssub.s32 %s19, %s31
    %p165 = scmp.eq.s32.totalorder %s164, 0
    %s167 = sadd.s32 %s166, 1
    %s168 = scalar_select %p165, %s166, %s167
    %p171 = pneg %p165
    %p172 = scmp.eq.s32.totalorder %s12, 5
    %p173 = por %p171, %p172
    %p174 = scmp.ne.s32.totalorder %s166, %s169
    %p175 = scmp.eq.s32.totalorder %s12, 0
    %p176 = por %p174, %p175
    %p177 = scmp.ne.s32.totalorder %s166, %s169
    %p178 = scmp.eq.s32.totalorder %s17, 5
    %p179 = por %p177, %p178
    %p180 = scmp.ne.s32.totalorder %s169, %s170
    %p181 = scmp.eq.s32.totalorder %s17, 0
    %p182 = por %p180, %p181
    %p183 = scmp.ne.s32.totalorder %s169, %s170
    %p184 = scmp.eq.s32.totalorder %s18, 5
    %p185 = por %p183, %p184
    %p187 = scmp.ne.s32.totalorder %s170, %s186
    %p188 = scmp.eq.s32.totalorder %s18, 0
    %p189 = por %p187, %p188
    %s190 = ssub.s32 %s19, %s31
    %s191 = ssub.s32 %s20, %s27
    %s192 = sor.u32 %s190, %s191
    %p193 = scmp.eq.s32.totalorder %s192, 0
    %s195 = sadd.s32 %s194, 1
    %s196 = scalar_select %p193, %s194, %s195
    %p199 = pneg %p193
    %p200 = scmp.eq.s32.totalorder %s12, 5
    %p201 = por %p199, %p200
    %p202 = scmp.ne.s32.totalorder %s194, %s197
    %p203 = scmp.eq.s32.totalorder %s12, 0
    %p204 = por %p202, %p203
    %p205 = scmp.ne.s32.totalorder %s194, %s197
    %p206 = scmp.eq.s32.totalorder %s17, 5
    %p207 = por %p205, %p206
    %p208 = scmp.ne.s32.totalorder %s197, %s198
    %p209 = scmp.eq.s32.totalorder %s17, 0
    %p210 = por %p208, %p209
    %p211 = scmp.ne.s32.totalorder %s197, %s198
    %p212 = scmp.eq.s32.totalorder %s18, 5
    %p213 = por %p211, %p212
    %p215 = scmp.ne.s32.totalorder %s198, %s214
    %p216 = scmp.eq.s32.totalorder %s18, 0
    %p217 = por %p215, %p216
    %p218 = scmp.le.s32.totalorder 1, %s12
    %p219 = scmp.lt.s32.totalorder %s12, 7
    %p220 = pnand %p218, %p219
    %p221 = pneg %p220
    // Predicated region
    $region9: #{glow_network.8} parent=5 // pred_check
      _
    $region10: #{glow_network.8} parent=5 // pred_check_branch
      %223 = sbr.rel (%p220) target = $region12
    $region11: #{glow_network.8} parent=5 // pred_region
      %s224 = ssub.s32 %s12, 1
    $region12: #{glow_network.8} parent=5 // pred_fallthru
      _
    %p225 = scmp.lt.s32.totalorder %s12, 6
    // Predicated region
    $region13: #{glow_network.8} parent=5 // pred_check
      %p226 = pneg %p225
    $region14: #{glow_network.8} parent=5 // pred_check_branch
      %228 = sbr.rel (%p226) target = $region16
    $region15: #{glow_network.8} parent=5 // pred_region
      // Predicated region
      $region17: #{glow_network.8} parent=15 // pred_check
        %p229 = pneg %p44
      $region18: #{glow_network.8} parent=15 // pred_check_branch
        %231 = sbr.rel (%p229) target = $region20
      $region19: #{glow_network.8} parent=15 // pred_region
        %p232 = scmp.lt.s32.totalorder %s20, 1
        %s233 = scalar_select %p232, %s20, 1
        %s234 = smul.addr %s233, 2
        %s235 = scalar_lea.vmem %s0, %s234
      $region20: #{glow_network.8} parent=15 // pred_fallthru
        _
      // Predicated region
      $region21: #{glow_network.8} parent=15 // pred_check
        %p236 = pneg %p72
      $region22: #{glow_network.8} parent=15 // pred_check_branch
        %238 = sbr.rel (%p236) target = $region24
      $region23: #{glow_network.8} parent=15 // pred_region
        %p239 = scmp.lt.s32.totalorder %s19, 2
        %s240 = scalar_select %p239, %s19, 2
        %p241 = scmp.lt.s32.totalorder %s20, 1
        %s242 = scalar_select %p241, %s20, 1
        %s243 = smul.addr %s240, 2
        %s244 = sadd.s32 %s242, %s243
        %s245 = smul.addr %s244, 2
        %s246 = scalar_lea.vmem %s1, %s245
      $region24: #{glow_network.8} parent=15 // pred_fallthru
        _
      // Predicated region
      $region25: #{glow_network.8} parent=15 // pred_check
        %p247 = pneg %p98
      $region26: #{glow_network.8} parent=15 // pred_check_branch
        %249 = sbr.rel (%p247) target = $region28
      $region27: #{glow_network.8} parent=15 // pred_region
        %p250 = scmp.lt.s32.totalorder %s19, 2
        %s251 = scalar_select %p250, %s19, 2
        %s252 = smul.addr %s251, 3
        %s253 = smul.addr %s252, 2
        %s254 = scalar_lea.vmem %s2, %s253
      $region28: #{glow_network.8} parent=15 // pred_fallthru
        _
      // Predicated region
      $region29: #{glow_network.8} parent=15 // pred_check
        %p255 = pneg %p124
      $region30: #{glow_network.8} parent=15 // pred_check_branch
        %257 = sbr.rel (%p255) target = $region32
      $region31: #{glow_network.8} parent=15 // pred_region
        %p258 = scmp.lt.s32.totalorder %s19, 2
        %s259 = scalar_select %p258, %s19, 2
        %s260 = smul.addr %s259, 4
        %s261 = scalar_lea.vmem %s3, %s260
      $region32: #{glow_network.8} parent=15 // pred_fallthru
        _
      // Predicated region
      $region33: #{glow_network.8} parent=15 // pred_check
        %p262 = pneg %p150
      $region34: #{glow_network.8} parent=15 // pred_check_branch
        %264 = sbr.rel (%p262) target = $region36
      $region35: #{glow_network.8} parent=15 // pred_region
        %p265 = scmp.lt.s32.totalorder %s19, 2
        %s266 = scalar_select %p265, %s19, 2
        %s267 = smul.addr %s266, 3
        %s268 = smul.addr %s267, 2
        %s269 = scalar_lea.vmem %s4, %s268
      $region36: #{glow_network.8} parent=15 // pred_fallthru
        _
      // Predicated region
      $region37: #{glow_network.8} parent=15 // pred_check
        %p270 = pneg %p176
      $region38: #{glow_network.8} parent=15 // pred_check_branch
        %272 = sbr.rel (%p270) target = $region40
      $region39: #{glow_network.8} parent=15 // pred_region
        %p273 = scmp.lt.s32.totalorder %s19, 2
        %s274 = scalar_select %p273, %s19, 2
        %s275 = smul.addr %s274, 4
        %s276 = scalar_lea.vmem %s5, %s275
      $region40: #{glow_network.8} parent=15 // pred_fallthru
        _
    $region16: #{glow_network.8} parent=5 // pred_fallthru
      _
    %p277 = scmp.le.s32.totalorder 1, %s12
    %p278 = scmp.lt.s32.totalorder %s12, 7
    %p279 = pnand %p277, %p278
    %p280 = pneg %p279
    // Predicated region
    $region41: #{glow_network.8} parent=5 // pred_check
      _
    $region42: #{glow_network.8} parent=5 // pred_check_branch
      %282 = sbr.rel (%p279) target = $region44
    $region43: #{glow_network.8} parent=5 // pred_region
      %s283 = ssub.s32 %s12, 1
      %p284 = scmp.lt.s32.totalorder %s22, 1
      %s285 = scalar_select %p284, %s22, 1
      %s286 = smul.addr %s285, 2
      %s287 = scalar_lea.vmem %s0, %s286
      %p288 = pneg %p50
      %p289 = pneg %p47
      %p290 = scmp.lt.s32.totalorder %s21, 2
      %s291 = scalar_select %p290, %s21, 2
      %p292 = scmp.lt.s32.totalorder %s22, 1
      %s293 = scalar_select %p292, %s22, 1
      %s294 = smul.addr %s291, 2
      %s295 = sadd.s32 %s293, %s294
      %s296 = smul.addr %s295, 2
      %s297 = scalar_lea.vmem %s1, %s296
      %p298 = pneg %p78
      %p299 = pneg %p75
      %p300 = scmp.lt.s32.totalorder %s21, 2
      %s301 = scalar_select %p300, %s21, 2
      %s302 = smul.addr %s301, 3
      %s303 = smul.addr %s302, 2
      %s304 = scalar_lea.vmem %s2, %s303
      %p305 = pneg %p104
      %p306 = pneg %p101
      %p307 = scmp.lt.s32.totalorder %s21, 2
      %s308 = scalar_select %p307, %s21, 2
      %s309 = smul.addr %s308, 4
      %s310 = scalar_lea.vmem %s3, %s309
      %p311 = pneg %p130
      %p312 = pneg %p127
      %p313 = scmp.lt.s32.totalorder %s21, 2
      %s314 = scalar_select %p313, %s21, 2
      %s315 = smul.addr %s314, 3
      %s316 = smul.addr %s315, 2
      %s317 = scalar_lea.vmem %s4, %s316
      %p318 = pneg %p156
      %p319 = pneg %p153
      %p320 = scmp.lt.s32.totalorder %s21, 2
      %s321 = scalar_select %p320, %s21, 2
      %s322 = smul.addr %s321, 4
      %s323 = scalar_lea.vmem %s5, %s322
      %p324 = pneg %p182
      %p325 = pneg %p179
      %p326 = pneg %p210
      %p327 = pneg %p207
      %p328 = scmp.lt.s32.totalorder %s21, 2
      %s329 = scalar_select %p328, %s21, 2
      %p330 = scmp.lt.s32.totalorder %s22, 1
      %s331 = scalar_select %p330, %s22, 1
      %s332 = smul.addr %s329, 2
      %s333 = sadd.s32 %s331, %s332
      %s334 = smul.addr %s333, 2
      %s335 = scalar_lea.vmem %s6, %s334
      %p336 = scmp.lt.s32.totalorder %s22, 1
      %s337 = scalar_select %p336, %s22, 1
      %s338 = smul.addr %s337, 2
      %s339 = scalar_lea.vmem %s0, %s338
      %p340 = scmp.lt.s32.totalorder %s21, 2
      %s341 = scalar_select %p340, %s21, 2
      %p342 = scmp.lt.s32.totalorder %s22, 1
      %s343 = scalar_select %p342, %s22, 1
      %s344 = smul.addr %s341, 2
      %s345 = sadd.s32 %s343, %s344
      %s346 = smul.addr %s345, 2
      %s347 = scalar_lea.vmem %s1, %s346
      %p348 = scmp.lt.s32.totalorder %s21, 2
      %s349 = scalar_select %p348, %s21, 2
      %s350 = smul.addr %s349, 3
      %s351 = smul.addr %s350, 2
      %s352 = scalar_lea.vmem %s2, %s351
      %p353 = scmp.lt.s32.totalorder %s21, 2
      %s354 = scalar_select %p353, %s21, 2
      %s355 = smul.addr %s354, 4
      %s356 = scalar_lea.vmem %s3, %s355
      %p357 = scmp.lt.s32.totalorder %s21, 2
      %s358 = scalar_select %p357, %s21, 2
      %s359 = smul.addr %s358, 3
      %s360 = smul.addr %s359, 2
      %s361 = scalar_lea.vmem %s4, %s360
      %p362 = scmp.lt.s32.totalorder %s21, 2
      %s363 = scalar_select %p362, %s21, 2
      %s364 = smul.addr %s363, 4
      %s365 = scalar_lea.vmem %s5, %s364
      %p366 = scmp.lt.s32.totalorder %s21, 2
      %s367 = scalar_select %p366, %s21, 2
      %p368 = scmp.lt.s32.totalorder %s22, 1
      %s369 = scalar_select %p368, %s22, 1
      %s370 = smul.addr %s367, 2
      %s371 = sadd.s32 %s369, %s370
      %s372 = smul.addr %s371, 2
      %s373 = scalar_lea.vmem %s6, %s372
      %v375 = vld [vmem:[%s339] sm:$0x3]
      %v376 = vunpack.c.l.bf16 %v375
      %v377 = vld [vmem:[%s347] sm:$0x3]
      %v378 = vunpack.c.l.bf16 %v377
      %v379 = vadd.f32 %v376, %v378
      %v380 = vlaneseq
      %v381 = vshrl.u32 %v380, 7
      %v382 = vlaneseq
      %v383 = vand.u32 %v382, 127
      %v384 = vmul.u32 %v381, 2
      %vm385 = vcmp.eq.s32.totalorder %v383, %v384
      %v386 = vadd.s32 %v384, 1
      %vm387 = vcmp.eq.s32.totalorder %v383, %v386
      %vm388 = vmor %vm385, %vm387
      %v389 = vsel %vm388, 1.0, 0.0
      %v390 = vpack.c.bf16 %v389, %v389
      %v391 = vpack.c.bf16 %v379, %v379
      %vm392 = vcmask 64512
      %v394 = vsel %vm392, %v391, 0
      %vm396 = vcmask 1043456
      %v398 = vsel %vm396, %v390, 0
      %400 = vmatprep.subr.bf16.mxu0 0
      %401 = vmatpush1.bf16.msra.mxu0 0
      %402 = vmatprep.subr.bf16.mxu0 0
      %403 = vmatpush1.bf16.msra.mxu0 0
      %404 = vmatprep.subr.bf16.mxu0 0
      %405 = vmatpush1.bf16.msra.mxu0 0
      %406 = vmatprep.subr.bf16.mxu0 0
      %407 = vmatpush1.bf16.msra.mxu0 0
      %408 = vmatprep.subr.bf16.mxu0 0
      %409 = vmatpush1.bf16.msra.mxu0 0
      %410 = vmatprep.subr.bf16.mxu0 0
      %411 = vmatpush1.bf16.msra.mxu0 0
      %412 = vmatprep.subr.bf16.mxu0 0
      %413 = vmatpush1.bf16.msra.mxu0 0
      %414 = vmatprep.subr.bf16.mxu0 0
      %415 = vmatpush1.bf16.msra.mxu0 %v398
      %416 = vmatprep.subr.bf16.mxu0 0
      %417 = vmatpush2.bf16.msra.mxu0 0
      %418 = vmatprep.subr.bf16.mxu0 0
      %419 = vmatpush2.bf16.msra.mxu0 0
      %420 = vmatprep.subr.bf16.mxu0 0
      %421 = vmatpush2.bf16.msra.mxu0 0
      %422 = vmatprep.subr.bf16.mxu0 0
      %423 = vmatpush2.bf16.msra.mxu0 0
      %424 = vmatprep.subr.bf16.mxu0 0
      %425 = vmatpush2.bf16.msra.mxu0 0
      %426 = vmatprep.subr.bf16.mxu0 0
      %427 = vmatpush2.bf16.msra.mxu0 0
      %428 = vmatprep.subr.bf16.mxu0 0
      %429 = vmatpush2.bf16.msra.mxu0 0
      %430 = vmatprep.subr.bf16.mxu0 0
      %431 = vmatpush2.bf16.msra.mxu0 0
      %432 = vmatprep.mubr.bf16.mxu0 0
      %433 = vmatmul.mubr.bf16.gmra.mxu0 %v394
      %v434 = vpop.f32.mrf.mxu0
      %v435 = vadd.f32 0.0, %v434
      %v436 = vpop.f32.mrf.mxu0
      %v437 = vpop.f32.mrf.mxu0
      %v438 = vpop.f32.mrf.mxu0
      %439 = vdwg.mxu0
      %v440 = vpack.c.bf16 %v435, %v435
      %v441 = vld [vmem:[%s352] sm:$0x3]
      %v442 = vld [vmem:[%s352 + $0x2] sm:$0x3]
      %v443 = vld [vmem:[%s352 + $0x4] sm:$0x3]
      %v444 = vld [vmem:[%s356] sm:$0x7]
      %446 = vrot.lane.b32.xlu0 %v440, 1
      %v447 = vpop.permute.xlu0 %446
      %vm448 = vcmask 7168
      %v451 = vsel %vm448, 0, %v447
      %vm452 = vcmask 31744
      %v454 = vsel %vm452, %v442, 0
      %vm456 = vcmask 1041408
      %v458 = vsel %vm456, %v440, 0
      %460 = vmatprep.subr.bf16.mxu0 0
      %461 = vmatpush1.bf16.msra.mxu0 0
      %462 = vmatprep.subr.bf16.mxu0 0
      %463 = vmatpush1.bf16.msra.mxu0 0
      %464 = vmatprep.subr.bf16.mxu0 0
      %465 = vmatpush1.bf16.msra.mxu0 0
      %466 = vmatprep.subr.bf16.mxu0 0
      %467 = vmatpush1.bf16.msra.mxu0 0
      %468 = vmatprep.subr.bf16.mxu0 0
      %469 = vmatpush1.bf16.msra.mxu0 0
      %470 = vmatprep.subr.bf16.mxu0 0
      %471 = vmatpush1.bf16.msra.mxu0 0
      %472 = vmatprep.subr.bf16.mxu0 0
      %473 = vmatpush1.bf16.msra.mxu0 0
      %474 = vmatprep.subr.bf16.mxu0 0
      %475 = vmatpush1.bf16.msra.mxu0 %v458
      %476 = vmatprep.subr.bf16.mxu0 0
      %477 = vmatpush2.bf16.msra.mxu0 0
      %478 = vmatprep.subr.bf16.mxu0 0
      %479 = vmatpush2.bf16.msra.mxu0 0
      %480 = vmatprep.subr.bf16.mxu0 0
      %481 = vmatpush2.bf16.msra.mxu0 0
      %482 = vmatprep.subr.bf16.mxu0 0
      %483 = vmatpush2.bf16.msra.mxu0 0
      %484 = vmatprep.subr.bf16.mxu0 0
      %485 = vmatpush2.bf16.msra.mxu0 0
      %486 = vmatprep.subr.bf16.mxu0 0
      %487 = vmatpush2.bf16.msra.mxu0 0
      %488 = vmatprep.subr.bf16.mxu0 0
      %489 = vmatpush2.bf16.msra.mxu0 0
      %490 = vmatprep.subr.bf16.mxu0 0
      %491 = vmatpush2.bf16.msra.mxu0 0
      %492 = vmatprep.mubr.bf16.mxu0 0
      %493 = vmatmul.mubr.bf16.gmra.mxu0 %v454
      %v494 = vpop.f32.mrf.mxu0
      %v495 = vadd.f32 0.0, %v494
      %v496 = vpop.f32.mrf.mxu0
      %v497 = vpop.f32.mrf.mxu0
      %v498 = vpop.f32.mrf.mxu0
      %499 = vdwg.mxu0
      %v501 = vsel %vm452, %v441, 0
      %v503 = vsel %vm456, %v451, 0
      %505 = vmatprep.subr.bf16.mxu0 0
      %506 = vmatpush1.bf16.msra.mxu0 0
      %507 = vmatprep.subr.bf16.mxu0 0
      %508 = vmatpush1.bf16.msra.mxu0 0
      %509 = vmatprep.subr.bf16.mxu0 0
      %510 = vmatpush1.bf16.msra.mxu0 0
      %511 = vmatprep.subr.bf16.mxu0 0
      %512 = vmatpush1.bf16.msra.mxu0 0
      %513 = vmatprep.subr.bf16.mxu0 0
      %514 = vmatpush1.bf16.msra.mxu0 0
      %515 = vmatprep.subr.bf16.mxu0 0
      %516 = vmatpush1.bf16.msra.mxu0 0
      %517 = vmatprep.subr.bf16.mxu0 0
      %518 = vmatpush1.bf16.msra.mxu0 0
      %519 = vmatprep.subr.bf16.mxu0 0
      %520 = vmatpush1.bf16.msra.mxu0 %v503
      %521 = vmatprep.subr.bf16.mxu0 0
      %522 = vmatpush2.bf16.msra.mxu0 0
      %523 = vmatprep.subr.bf16.mxu0 0
      %524 = vmatpush2.bf16.msra.mxu0 0
      %525 = vmatprep.subr.bf16.mxu0 0
      %526 = vmatpush2.bf16.msra.mxu0 0
      %527 = vmatprep.subr.bf16.mxu0 0
      %528 = vmatpush2.bf16.msra.mxu0 0
      %529 = vmatprep.subr.bf16.mxu0 0
      %530 = vmatpush2.bf16.msra.mxu0 0
      %531 = vmatprep.subr.bf16.mxu0 0
      %532 = vmatpush2.bf16.msra.mxu0 0
      %533 = vmatprep.subr.bf16.mxu0 0
      %534 = vmatpush2.bf16.msra.mxu0 0
      %535 = vmatprep.subr.bf16.mxu0 0
      %536 = vmatpush2.bf16.msra.mxu0 0
      %537 = vmatprep.mubr.bf16.mxu0 0
      %538 = vmatmul.mubr.bf16.gmra.mxu0 %v501
      %v539 = vpop.f32.mrf.mxu0
      %v540 = vadd.f32 %v495, %v539
      %v541 = vpop.f32.mrf.mxu0
      %v542 = vpop.f32.mrf.mxu0
      %v543 = vpop.f32.mrf.mxu0
      %544 = vdwg.mxu0
      %545 = vrot.lane.b32.xlu0 %v440, 127
      %v546 = vpop.permute.xlu0 %545
      %vm547 = vcmask 121856
      %v549 = vsel %vm547, %v546, 0
      %v551 = vsel %vm452, %v443, 0
      %v553 = vsel %vm456, %v549, 0
      %555 = vmatprep.subr.bf16.mxu0 0
      %556 = vmatpush1.bf16.msra.mxu0 0
      %557 = vmatprep.subr.bf16.mxu0 0
      %558 = vmatpush1.bf16.msra.mxu0 0
      %559 = vmatprep.subr.bf16.mxu0 0
      %560 = vmatpush1.bf16.msra.mxu0 0
      %561 = vmatprep.subr.bf16.mxu0 0
      %562 = vmatpush1.bf16.msra.mxu0 0
      %563 = vmatprep.subr.bf16.mxu0 0
      %564 = vmatpush1.bf16.msra.mxu0 0
      %565 = vmatprep.subr.bf16.mxu0 0
      %566 = vmatpush1.bf16.msra.mxu0 0
      %567 = vmatprep.subr.bf16.mxu0 0
      %568 = vmatpush1.bf16.msra.mxu0 0
      %569 = vmatprep.subr.bf16.mxu0 0
      %570 = vmatpush1.bf16.msra.mxu0 %v553
      %571 = vmatprep.subr.bf16.mxu0 0
      %572 = vmatpush2.bf16.msra.mxu0 0
      %573 = vmatprep.subr.bf16.mxu0 0
      %574 = vmatpush2.bf16.msra.mxu0 0
      %575 = vmatprep.subr.bf16.mxu0 0
      %576 = vmatpush2.bf16.msra.mxu0 0
      %577 = vmatprep.subr.bf16.mxu0 0
      %578 = vmatpush2.bf16.msra.mxu0 0
      %579 = vmatprep.subr.bf16.mxu0 0
      %580 = vmatpush2.bf16.msra.mxu0 0
      %581 = vmatprep.subr.bf16.mxu0 0
      %582 = vmatpush2.bf16.msra.mxu0 0
      %583 = vmatprep.subr.bf16.mxu0 0
      %584 = vmatpush2.bf16.msra.mxu0 0
      %585 = vmatprep.subr.bf16.mxu0 0
      %586 = vmatpush2.bf16.msra.mxu0 0
      %587 = vmatprep.mubr.bf16.mxu0 0
      %588 = vmatmul.mubr.bf16.gmra.mxu0 %v551
      %v589 = vpop.f32.mrf.mxu0
      %v590 = vadd.f32 0.0, %v589
      %v591 = vpop.f32.mrf.mxu0
      %v592 = vpop.f32.mrf.mxu0
      %v593 = vpop.f32.mrf.mxu0
      %594 = vdwg.mxu0
      %v595 = vadd.f32 %v540, %v590
      %597 = vset.pattern.permute.xlu0 0
      %598 = vperm.xlu0 %597, %v444
      %v599 = vpop.permute.xlu0 %598
      %v601 = vadd.f32 %v595, %v599
      %v602 = vmax.f32 %v601, 0.0
      %v603 = vpack.c.bf16 %v602, %v602
      %v604 = vld [vmem:[%s361] sm:$0x3]
      %v605 = vld [vmem:[%s361 + $0x2] sm:$0x3]
      %v606 = vld [vmem:[%s361 + $0x4] sm:$0x3]
      %v607 = vld [vmem:[%s365] sm:$0x7]
      %609 = vrot.lane.b32.xlu0 %v603, 1
      %v610 = vpop.permute.xlu0 %609
      %v612 = vsel %vm448, 0, %v610
      %vm613 = vcmask 23552
      %v615 = vsel %vm613, %v605, 0
      %vm617 = vcmask 1040384
      %v618 = vsel %vm617, 4294967295, 65535
      %v619 = vsel %vm456, %v618, 0
      %v621 = vand.u32 %v603, %v619
      %623 = vmatprep.subr.bf16.mxu0 0
      %624 = vmatpush1.bf16.msra.mxu0 0
      %625 = vmatprep.subr.bf16.mxu0 0
      %626 = vmatpush1.bf16.msra.mxu0 0
      %627 = vmatprep.subr.bf16.mxu0 0
      %628 = vmatpush1.bf16.msra.mxu0 0
      %629 = vmatprep.subr.bf16.mxu0 0
      %630 = vmatpush1.bf16.msra.mxu0 0
      %631 = vmatprep.subr.bf16.mxu0 0
      %632 = vmatpush1.bf16.msra.mxu0 0
      %633 = vmatprep.subr.bf16.mxu0 0
      %634 = vmatpush1.bf16.msra.mxu0 0
      %635 = vmatprep.subr.bf16.mxu0 0
      %636 = vmatpush1.bf16.msra.mxu0 0
      %637 = vmatprep.subr.bf16.mxu0 0
      %638 = vmatpush1.bf16.msra.mxu0 %v621
      %639 = vmatprep.subr.bf16.mxu0 0
      %640 = vmatpush2.bf16.msra.mxu0 0
      %641 = vmatprep.subr.bf16.mxu0 0
      %642 = vmatpush2.bf16.msra.mxu0 0
      %643 = vmatprep.subr.bf16.mxu0 0
      %644 = vmatpush2.bf16.msra.mxu0 0
      %645 = vmatprep.subr.bf16.mxu0 0
      %646 = vmatpush2.bf16.msra.mxu0 0
      %647 = vmatprep.subr.bf16.mxu0 0
      %648 = vmatpush2.bf16.msra.mxu0 0
      %649 = vmatprep.subr.bf16.mxu0 0
      %650 = vmatpush2.bf16.msra.mxu0 0
      %651 = vmatprep.subr.bf16.mxu0 0
      %652 = vmatpush2.bf16.msra.mxu0 0
      %653 = vmatprep.subr.bf16.mxu0 0
      %654 = vmatpush2.bf16.msra.mxu0 0
      %655 = vmatprep.mubr.bf16.mxu0 0
      %656 = vmatmul.mubr.bf16.gmra.mxu0 %v615
      %v657 = vpop.f32.mrf.mxu0
      %v658 = vadd.f32 0.0, %v657
      %v659 = vpop.f32.mrf.mxu0
      %v660 = vpop.f32.mrf.mxu0
      %v661 = vpop.f32.mrf.mxu0
      %662 = vdwg.mxu0
      %v664 = vsel %vm613, %v604, 0
      %v666 = vand.u32 %v612, %v619
      %668 = vmatprep.subr.bf16.mxu0 0
      %669 = vmatpush1.bf16.msra.mxu0 0
      %670 = vmatprep.subr.bf16.mxu0 0
      %671 = vmatpush1.bf16.msra.mxu0 0
      %672 = vmatprep.subr.bf16.mxu0 0
      %673 = vmatpush1.bf16.msra.mxu0 0
      %674 = vmatprep.subr.bf16.mxu0 0
      %675 = vmatpush1.bf16.msra.mxu0 0
      %676 = vmatprep.subr.bf16.mxu0 0
      %677 = vmatpush1.bf16.msra.mxu0 0
      %678 = vmatprep.subr.bf16.mxu0 0
      %679 = vmatpush1.bf16.msra.mxu0 0
      %680 = vmatprep.subr.bf16.mxu0 0
      %681 = vmatpush1.bf16.msra.mxu0 0
      %682 = vmatprep.subr.bf16.mxu0 0
      %683 = vmatpush1.bf16.msra.mxu0 %v666
      %684 = vmatprep.subr.bf16.mxu0 0
      %685 = vmatpush2.bf16.msra.mxu0 0
      %686 = vmatprep.subr.bf16.mxu0 0
      %687 = vmatpush2.bf16.msra.mxu0 0
      %688 = vmatprep.subr.bf16.mxu0 0
      %689 = vmatpush2.bf16.msra.mxu0 0
      %690 = vmatprep.subr.bf16.mxu0 0
      %691 = vmatpush2.bf16.msra.mxu0 0
      %692 = vmatprep.subr.bf16.mxu0 0
      %693 = vmatpush2.bf16.msra.mxu0 0
      %694 = vmatprep.subr.bf16.mxu0 0
      %695 = vmatpush2.bf16.msra.mxu0 0
      %696 = vmatprep.subr.bf16.mxu0 0
      %697 = vmatpush2.bf16.msra.mxu0 0
      %698 = vmatprep.subr.bf16.mxu0 0
      %699 = vmatpush2.bf16.msra.mxu0 0
      %700 = vmatprep.mubr.bf16.mxu0 0
      %701 = vmatmul.mubr.bf16.gmra.mxu0 %v664
      %v702 = vpop.f32.mrf.mxu0
      %v703 = vadd.f32 %v658, %v702
      %v704 = vpop.f32.mrf.mxu0
      %v705 = vpop.f32.mrf.mxu0
      %v706 = vpop.f32.mrf.mxu0
      %707 = vdwg.mxu0
      %708 = vrot.lane.b32.xlu0 %v603, 127
      %v709 = vpop.permute.xlu0 %708
      %v711 = vsel %vm547, %v709, 0
      %v713 = vsel %vm613, %v606, 0
      %v715 = vand.u32 %v711, %v619
      %717 = vmatprep.subr.bf16.mxu0 0
      %718 = vmatpush1.bf16.msra.mxu0 0
      %719 = vmatprep.subr.bf16.mxu0 0
      %720 = vmatpush1.bf16.msra.mxu0 0
      %721 = vmatprep.subr.bf16.mxu0 0
      %722 = vmatpush1.bf16.msra.mxu0 0
      %723 = vmatprep.subr.bf16.mxu0 0
      %724 = vmatpush1.bf16.msra.mxu0 0
      %725 = vmatprep.subr.bf16.mxu0 0
      %726 = vmatpush1.bf16.msra.mxu0 0
      %727 = vmatprep.subr.bf16.mxu0 0
      %728 = vmatpush1.bf16.msra.mxu0 0
      %729 = vmatprep.subr.bf16.mxu0 0
      %730 = vmatpush1.bf16.msra.mxu0 0
      %731 = vmatprep.subr.bf16.mxu0 0
      %732 = vmatpush1.bf16.msra.mxu0 %v715
      %733 = vmatprep.subr.bf16.mxu0 0
      %734 = vmatpush2.bf16.msra.mxu0 0
      %735 = vmatprep.subr.bf16.mxu0 0
      %736 = vmatpush2.bf16.msra.mxu0 0
      %737 = vmatprep.subr.bf16.mxu0 0
      %738 = vmatpush2.bf16.msra.mxu0 0
      %739 = vmatprep.subr.bf16.mxu0 0
      %740 = vmatpush2.bf16.msra.mxu0 0
      %741 = vmatprep.subr.bf16.mxu0 0
      %742 = vmatpush2.bf16.msra.mxu0 0
      %743 = vmatprep.subr.bf16.mxu0 0
      %744 = vmatpush2.bf16.msra.mxu0 0
      %745 = vmatprep.subr.bf16.mxu0 0
      %746 = vmatpush2.bf16.msra.mxu0 0
      %747 = vmatprep.subr.bf16.mxu0 0
      %748 = vmatpush2.bf16.msra.mxu0 0
      %749 = vmatprep.mubr.bf16.mxu0 0
      %750 = vmatmul.mubr.bf16.gmra.mxu0 %v713
      %v751 = vpop.f32.mrf.mxu0
      %v752 = vadd.f32 0.0, %v751
      %v753 = vpop.f32.mrf.mxu0
      %v754 = vpop.f32.mrf.mxu0
      %v755 = vpop.f32.mrf.mxu0
      %756 = vdwg.mxu0
      %v757 = vadd.f32 %v703, %v752
      %759 = vset.pattern.permute.xlu0 0
      %760 = vperm.xlu0 %759, %v607
      %v761 = vpop.permute.xlu0 %760
      %v763 = vadd.f32 %v757, %v761
      %v764 = vmax.f32 %v763, 0.0
      %v765 = vpack.c.bf16 %v764, %v764
      %vm766 = vcmask 123904
      %vm767 = vsmask.f32 1280
      %vm768 = vmand %vm766, %vm767
      %v769 = vld [vmem:[%s373] sm:$0x3]
      %v770 = vsel %vm768, %v765, %v769
      %771 = vst [vmem:[%s373] sm:$0x3] %v770
      %p772 = scmp.lt.s32.totalorder %s21, 2
      %s773 = scalar_select %p772, %s21, 2
      %p774 = scmp.lt.s32.totalorder %s22, 1
      %s775 = scalar_select %p774, %s22, 1
      %s776 = smul.addr %s773, 2
      %s777 = sadd.s32 %s775, %s776
      %s778 = smul.addr %s777, 2
      %s779 = scalar_lea.vmem %s6, %s778
      // Predicated region
      $region45: #{glow_network.8} parent=43 // pred_check
        %p780 = pneg %p207
      $region46: #{glow_network.8} parent=43 // pred_check_branch
        %782 = sbr.rel (%p780) target = $region48
      $region47: #{glow_network.8} parent=43 // pred_region
        _
      $region48: #{glow_network.8} parent=43 // pred_fallthru
        _
    $region44: #{glow_network.8} parent=5 // pred_fallthru
      _
    %p783 = scmp.le.s32.totalorder 2, %s12
    // Predicated region
    $region49: #{glow_network.8} parent=5 // pred_check
      %p784 = pneg %p783
    $region50: #{glow_network.8} parent=5 // pred_check_branch
      %786 = sbr.rel (%p784) target = $region52
    $region51: #{glow_network.8} parent=5 // pred_region
      %s787 = ssub.s32 %s12, 2
      // Predicated region
      $region53: #{glow_network.8} parent=51 // pred_check
        %p788 = pneg %p213
      $region54: #{glow_network.8} parent=51 // pred_check_branch
        %790 = sbr.rel (%p788) target = $region56
      $region55: #{glow_network.8} parent=51 // pred_region
        %p791 = scmp.lt.s32.totalorder %s23, 2
        %s792 = scalar_select %p791, %s23, 2
        %p793 = scmp.lt.s32.totalorder %s24, 1
        %s794 = scalar_select %p793, %s24, 1
        %s795 = smul.addr %s792, 2
        %s796 = sadd.s32 %s794, %s795
        %s797 = smul.addr %s796, 2
        %s798 = scalar_lea.vmem %s6, %s797
      $region56: #{glow_network.8} parent=51 // pred_fallthru
        _
    $region52: #{glow_network.8} parent=5 // pred_fallthru
      _
  $region6: #{glow_network.8} parent=0 // loop_footer
    %s16 = sadd.s32 1, %s12
  $region7: #{glow_network.8} parent=0 // loop_footer_branch
    %11 = sbr.rel target = $region3
  $region8: #{glow_network.8} parent=0 // loop_exit
    _

// kernel: glow_network.5
$region0: #{glow_network.5}
  #allocation0 [shape = 'u32[]', space=smem, size = 0x4, offset = 0x4, fixed_abs, tag = 'smem constant byte address 0x4 - core index']
  #allocation1 [shape = 'u32[144,128]{1,0:T(1,128)}', space=vmem, size = 0x12000, scoped, tag = 'internal scratch']
  %s0 = inlined_call_operand.vmem [shape: bf16[2,3,16], index: 0, kind: input, shape index: {}]
  %s1 = inlined_call_operand.vmem [shape: bf16[3,4,3], index: 1, kind: input, shape index: {}]
  %s2 = inlined_call_operand.vmem [shape: f32[4,1], index: 2, kind: input, shape index: {}]
  %s3 = inlined_call_operand.vmem [shape: bf16[3,4,4], index: 3, kind: input, shape index: {}]
  %s4 = inlined_call_operand.vmem [shape: f32[4,1], index: 4, kind: input, shape index: {}]
  %s5 = inlined_call_operand.vmem [shape: bf16[1,3,2,2], index: 5, kind: input, shape index: {}]
  %s6 = inlined_call_operand.vmem [shape: f32[1,2,1], index: 6, kind: input, shape index: {}]
  %s7 = inlined_call_operand.vmem [shape: bf16[1,2,2], index: 7, kind: input, shape index: {}]
  %s8 = inlined_call_operand.vmem [shape: f32[1,2,1], index: 8, kind: input, shape index: {}]
  %s9 = inlined_call_operand.vmem [shape: bf16[1,3,4,2], index: 9, kind: input, shape index: {}]
  %s10 = inlined_call_operand.vmem [shape: f32[1,4,1], index: 10, kind: input, shape index: {}]
  %s11 = inlined_call_operand.vmem [shape: bf16[2,4,8], index: 11, kind: output, shape index: {}]
  %s12 = sld [smem:[#allocation0]]
  $region77: #{glow_network.5} parent=0
    _
  %s14 = ssub.s32 1, %s12
  %s15 = scalar_select 0, %s14, %s12
  loop: start=0, step=1, limit=4
  $region2: #{glow_network.5} parent=0 // loop_pre_header
    _
  $region3: #{glow_network.5} parent=0 // loop_header
    %s17 = sphi 0, %s21
    %p18 = scmp.ge.s32.totalorder %s17, 4
    %s27 = sphi 0, %s29
    %s30 = sphi 0, %s27
    %s31 = sphi 0, %s30
    %s47 = sphi 0, %s31
    %s51 = sphi 0, %s51
    %s53 = sphi 0, %s51
    %s54 = sphi 0, %s53
    %s68 = sphi 0, %s54
    %s72 = sphi 0, %s72
    %s74 = sphi 0, %s72
    %s75 = sphi 0, %s74
    %s89 = sphi 0, %s75
    %s93 = sphi 0, %s93
    %s95 = sphi 0, %s93
    %s96 = sphi 0, %s95
    %s110 = sphi 0, %s96
    %s114 = sphi 0, %s114
    %s116 = sphi 0, %s114
    %s117 = sphi 0, %s116
    %s131 = sphi 0, %s117
    %s135 = sphi 0, %s135
    %s137 = sphi 0, %s135
    %s138 = sphi 0, %s137
    %s152 = sphi 0, %s138
    %s156 = sphi 0, %s156
    %s158 = sphi 0, %s156
    %s159 = sphi 0, %s158
    %s173 = sphi 0, %s159
    %s177 = sphi 0, %s177
    %s179 = sphi 0, %s177
    %s180 = sphi 0, %s179
    %s194 = sphi 0, %s180
    %s198 = sphi 0, %s198
    %s200 = sphi 0, %s198
    %s201 = sphi 0, %s200
    %s215 = sphi 0, %s201
    %s219 = sphi 0, %s219
    %s221 = sphi 0, %s219
    %s222 = sphi 0, %s221
    %s236 = sphi 0, %s222
    %s240 = sphi 0, %s240
    %s242 = sphi 0, %s240
    %s243 = sphi 0, %s242
    %s257 = sphi 0, %s243
    %s263 = sphi 0, %s265
    %s266 = sphi 0, %s263
    %s267 = sphi 0, %s266
    %s283 = sphi 0, %s267
  $region4: #{glow_network.5} parent=0 // loop_header_branch
    %20 = sbr.rel (%p18) target = $region8
  $region5: #{glow_network.5} parent=0 // loop_body
    %s22 = ssub.s32 %s17, 1
    %s23 = ssub.s32 %s17, 2
    %s24 = sadd.s32 %s17, 1
    %s25 = ssub.s32 %s17, %s24
    %p26 = scmp.eq.s32.totalorder %s25, 0
    %s28 = sadd.s32 %s27, 1
    %s29 = scalar_select %p26, %s27, %s28
    %p32 = pneg %p26
    %p33 = scmp.eq.s32.totalorder %s17, 1
    %p34 = por %p32, %p33
    %p35 = scmp.ne.s32.totalorder %s27, %s30
    %p36 = scmp.eq.s32.totalorder %s17, 0
    %p37 = por %p35, %p36
    %p38 = scmp.ne.s32.totalorder %s27, %s30
    %p39 = scmp.eq.s32.totalorder %s22, 1
    %p40 = por %p38, %p39
    %p41 = scmp.ne.s32.totalorder %s30, %s31
    %p42 = scmp.eq.s32.totalorder %s22, 0
    %p43 = por %p41, %p42
    %p44 = scmp.ne.s32.totalorder %s30, %s31
    %p45 = scmp.eq.s32.totalorder %s23, 1
    %p46 = por %p44, %p45
    %p48 = scmp.ne.s32.totalorder %s31, %s47
    %p49 = scmp.eq.s32.totalorder %s23, 0
    %p50 = por %p48, %p49
    %s52 = sadd.s32 %s51, 1
    %p55 = scmp.eq.s32.totalorder %s17, 1
    %p56 = scmp.ne.s32.totalorder %s51, %s53
    %p57 = scmp.eq.s32.totalorder %s17, 0
    %p58 = por %p56, %p57
    %p59 = scmp.ne.s32.totalorder %s51, %s53
    %p60 = scmp.eq.s32.totalorder %s22, 1
    %p61 = por %p59, %p60
    %p62 = scmp.ne.s32.totalorder %s53, %s54
    %p63 = scmp.eq.s32.totalorder %s22, 0
    %p64 = por %p62, %p63
    %p65 = scmp.ne.s32.totalorder %s53, %s54
    %p66 = scmp.eq.s32.totalorder %s23, 1
    %p67 = por %p65, %p66
    %p69 = scmp.ne.s32.totalorder %s54, %s68
    %p70 = scmp.eq.s32.totalorder %s23, 0
    %p71 = por %p69, %p70
    %s73 = sadd.s32 %s72, 1
    %p76 = scmp.eq.s32.totalorder %s17, 1
    %p77 = scmp.ne.s32.totalorder %s72, %s74
    %p78 = scmp.eq.s32.totalorder %s17, 0
    %p79 = por %p77, %p78
    %p80 = scmp.ne.s32.totalorder %s72, %s74
    %p81 = scmp.eq.s32.totalorder %s22, 1
    %p82 = por %p80, %p81
    %p83 = scmp.ne.s32.totalorder %s74, %s75
    %p84 = scmp.eq.s32.totalorder %s22, 0
    %p85 = por %p83, %p84
    %p86 = scmp.ne.s32.totalorder %s74, %s75
    %p87 = scmp.eq.s32.totalorder %s23, 1
    %p88 = por %p86, %p87
    %p90 = scmp.ne.s32.totalorder %s75, %s89
    %p91 = scmp.eq.s32.totalorder %s23, 0
    %p92 = por %p90, %p91
    %s94 = sadd.s32 %s93, 1
    %p97 = scmp.eq.s32.totalorder %s17, 1
    %p98 = scmp.ne.s32.totalorder %s93, %s95
    %p99 = scmp.eq.s32.totalorder %s17, 0
    %p100 = por %p98, %p99
    %p101 = scmp.ne.s32.totalorder %s93, %s95
    %p102 = scmp.eq.s32.totalorder %s22, 1
    %p103 = por %p101, %p102
    %p104 = scmp.ne.s32.totalorder %s95, %s96
    %p105 = scmp.eq.s32.totalorder %s22, 0
    %p106 = por %p104, %p105
    %p107 = scmp.ne.s32.totalorder %s95, %s96
    %p108 = scmp.eq.s32.totalorder %s23, 1
    %p109 = por %p107, %p108
    %p111 = scmp.ne.s32.totalorder %s96, %s110
    %p112 = scmp.eq.s32.totalorder %s23, 0
    %p113 = por %p111, %p112
    %s115 = sadd.s32 %s114, 1
    %p118 = scmp.eq.s32.totalorder %s17, 1
    %p119 = scmp.ne.s32.totalorder %s114, %s116
    %p120 = scmp.eq.s32.totalorder %s17, 0
    %p121 = por %p119, %p120
    %p122 = scmp.ne.s32.totalorder %s114, %s116
    %p123 = scmp.eq.s32.totalorder %s22, 1
    %p124 = por %p122, %p123
    %p125 = scmp.ne.s32.totalorder %s116, %s117
    %p126 = scmp.eq.s32.totalorder %s22, 0
    %p127 = por %p125, %p126
    %p128 = scmp.ne.s32.totalorder %s116, %s117
    %p129 = scmp.eq.s32.totalorder %s23, 1
    %p130 = por %p128, %p129
    %p132 = scmp.ne.s32.totalorder %s117, %s131
    %p133 = scmp.eq.s32.totalorder %s23, 0
    %p134 = por %p132, %p133
    %s136 = sadd.s32 %s135, 1
    %p139 = scmp.eq.s32.totalorder %s17, 1
    %p140 = scmp.ne.s32.totalorder %s135, %s137
    %p141 = scmp.eq.s32.totalorder %s17, 0
    %p142 = por %p140, %p141
    %p143 = scmp.ne.s32.totalorder %s135, %s137
    %p144 = scmp.eq.s32.totalorder %s22, 1
    %p145 = por %p143, %p144
    %p146 = scmp.ne.s32.totalorder %s137, %s138
    %p147 = scmp.eq.s32.totalorder %s22, 0
    %p148 = por %p146, %p147
    %p149 = scmp.ne.s32.totalorder %s137, %s138
    %p150 = scmp.eq.s32.totalorder %s23, 1
    %p151 = por %p149, %p150
    %p153 = scmp.ne.s32.totalorder %s138, %s152
    %p154 = scmp.eq.s32.totalorder %s23, 0
    %p155 = por %p153, %p154
    %s157 = sadd.s32 %s156, 1
    %p160 = scmp.eq.s32.totalorder %s17, 1
    %p161 = scmp.ne.s32.totalorder %s156, %s158
    %p162 = scmp.eq.s32.totalorder %s17, 0
    %p163 = por %p161, %p162
    %p164 = scmp.ne.s32.totalorder %s156, %s158
    %p165 = scmp.eq.s32.totalorder %s22, 1
    %p166 = por %p164, %p165
    %p167 = scmp.ne.s32.totalorder %s158, %s159
    %p168 = scmp.eq.s32.totalorder %s22, 0
    %p169 = por %p167, %p168
    %p170 = scmp.ne.s32.totalorder %s158, %s159
    %p171 = scmp.eq.s32.totalorder %s23, 1
    %p172 = por %p170, %p171
    %p174 = scmp.ne.s32.totalorder %s159, %s173
    %p175 = scmp.eq.s32.totalorder %s23, 0
    %p176 = por %p174, %p175
    %s178 = sadd.s32 %s177, 1
    %p181 = scmp.eq.s32.totalorder %s17, 1
    %p182 = scmp.ne.s32.totalorder %s177, %s179
    %p183 = scmp.eq.s32.totalorder %s17, 0
    %p184 = por %p182, %p183
    %p185 = scmp.ne.s32.totalorder %s177, %s179
    %p186 = scmp.eq.s32.totalorder %s22, 1
    %p187 = por %p185, %p186
    %p188 = scmp.ne.s32.totalorder %s179, %s180
    %p189 = scmp.eq.s32.totalorder %s22, 0
    %p190 = por %p188, %p189
    %p191 = scmp.ne.s32.totalorder %s179, %s180
    %p192 = scmp.eq.s32.totalorder %s23, 1
    %p193 = por %p191, %p192
    %p195 = scmp.ne.s32.totalorder %s180, %s194
    %p196 = scmp.eq.s32.totalorder %s23, 0
    %p197 = por %p195, %p196
    %s199 = sadd.s32 %s198, 1
    %p202 = scmp.eq.s32.totalorder %s17, 1
    %p203 = scmp.ne.s32.totalorder %s198, %s200
    %p204 = scmp.eq.s32.totalorder %s17, 0
    %p205 = por %p203, %p204
    %p206 = scmp.ne.s32.totalorder %s198, %s200
    %p207 = scmp.eq.s32.totalorder %s22, 1
    %p208 = por %p206, %p207
    %p209 = scmp.ne.s32.totalorder %s200, %s201
    %p210 = scmp.eq.s32.totalorder %s22, 0
    %p211 = por %p209, %p210
    %p212 = scmp.ne.s32.totalorder %s200, %s201
    %p213 = scmp.eq.s32.totalorder %s23, 1
    %p214 = por %p212, %p213
    %p216 = scmp.ne.s32.totalorder %s201, %s215
    %p217 = scmp.eq.s32.totalorder %s23, 0
    %p218 = por %p216, %p217
    %s220 = sadd.s32 %s219, 1
    %p223 = scmp.eq.s32.totalorder %s17, 1
    %p224 = scmp.ne.s32.totalorder %s219, %s221
    %p225 = scmp.eq.s32.totalorder %s17, 0
    %p226 = por %p224, %p225
    %p227 = scmp.ne.s32.totalorder %s219, %s221
    %p228 = scmp.eq.s32.totalorder %s22, 1
    %p229 = por %p227, %p228
    %p230 = scmp.ne.s32.totalorder %s221, %s222
    %p231 = scmp.eq.s32.totalorder %s22, 0
    %p232 = por %p230, %p231
    %p233 = scmp.ne.s32.totalorder %s221, %s222
    %p234 = scmp.eq.s32.totalorder %s23, 1
    %p235 = por %p233, %p234
    %p237 = scmp.ne.s32.totalorder %s222, %s236
    %p238 = scmp.eq.s32.totalorder %s23, 0
    %p239 = por %p237, %p238
    %s241 = sadd.s32 %s240, 1
    %p244 = scmp.eq.s32.totalorder %s17, 1
    %p245 = scmp.ne.s32.totalorder %s240, %s242
    %p246 = scmp.eq.s32.totalorder %s17, 0
    %p247 = por %p245, %p246
    %p248 = scmp.ne.s32.totalorder %s240, %s242
    %p249 = scmp.eq.s32.totalorder %s22, 1
    %p250 = por %p248, %p249
    %p251 = scmp.ne.s32.totalorder %s242, %s243
    %p252 = scmp.eq.s32.totalorder %s22, 0
    %p253 = por %p251, %p252
    %p254 = scmp.ne.s32.totalorder %s242, %s243
    %p255 = scmp.eq.s32.totalorder %s23, 1
    %p256 = por %p254, %p255
    %p258 = scmp.ne.s32.totalorder %s243, %s257
    %p259 = scmp.eq.s32.totalorder %s23, 0
    %p260 = por %p258, %p259
    %s261 = ssub.s32 %s17, %s24
    %p262 = scmp.eq.s32.totalorder %s261, 0
    %s264 = sadd.s32 %s263, 1
    %s265 = scalar_select %p262, %s263, %s264
    %p268 = pneg %p262
    %p269 = scmp.eq.s32.totalorder %s17, 1
    %p270 = por %p268, %p269
    %p271 = scmp.ne.s32.totalorder %s263, %s266
    %p272 = scmp.eq.s32.totalorder %s17, 0
    %p273 = por %p271, %p272
    %p274 = scmp.ne.s32.totalorder %s263, %s266
    %p275 = scmp.eq.s32.totalorder %s22, 1
    %p276 = por %p274, %p275
    %p277 = scmp.ne.s32.totalorder %s266, %s267
    %p278 = scmp.eq.s32.totalorder %s22, 0
    %p279 = por %p277, %p278
    %p280 = scmp.ne.s32.totalorder %s266, %s267
    %p281 = scmp.eq.s32.totalorder %s23, 1
    %p282 = por %p280, %p281
    %p284 = scmp.ne.s32.totalorder %s267, %s283
    %p285 = scmp.eq.s32.totalorder %s23, 0
    %p286 = por %p284, %p285
    %p287 = scmp.le.s32.totalorder 1, %s17
    %p288 = scmp.lt.s32.totalorder %s17, 3
    %p289 = pnand %p287, %p288
    %p290 = pneg %p289
    // Predicated region
    $region9: #{glow_network.5} parent=5 // pred_check
      _
    $region10: #{glow_network.5} parent=5 // pred_check_branch
      %292 = sbr.rel (%p289) target = $region12
    $region11: #{glow_network.5} parent=5 // pred_region
      %s293 = ssub.s32 %s17, 1
      // Predicated region
      $region13: #{glow_network.5} parent=11 // pred_check
        %p294 = pneg %p64
      $region14: #{glow_network.5} parent=11 // pred_check_branch
        %296 = sbr.rel (%p294) target = $region16
      $region15: #{glow_network.5} parent=11 // pred_region
        _
      $region16: #{glow_network.5} parent=11 // pred_fallthru
        _
      // Predicated region
      $region17: #{glow_network.5} parent=11 // pred_check
        %p297 = pneg %p85
      $region18: #{glow_network.5} parent=11 // pred_check_branch
        %299 = sbr.rel (%p297) target = $region20
      $region19: #{glow_network.5} parent=11 // pred_region
        _
      $region20: #{glow_network.5} parent=11 // pred_fallthru
        _
      // Predicated region
      $region21: #{glow_network.5} parent=11 // pred_check
        %p300 = pneg %p106
      $region22: #{glow_network.5} parent=11 // pred_check_branch
        %302 = sbr.rel (%p300) target = $region24
      $region23: #{glow_network.5} parent=11 // pred_region
        _
      $region24: #{glow_network.5} parent=11 // pred_fallthru
        _
      // Predicated region
      $region25: #{glow_network.5} parent=11 // pred_check
        %p303 = pneg %p127
      $region26: #{glow_network.5} parent=11 // pred_check_branch
        %305 = sbr.rel (%p303) target = $region28
      $region27: #{glow_network.5} parent=11 // pred_region
        _
      $region28: #{glow_network.5} parent=11 // pred_fallthru
        _
      // Predicated region
      $region29: #{glow_network.5} parent=11 // pred_check
        %p306 = pneg %p148
      $region30: #{glow_network.5} parent=11 // pred_check_branch
        %308 = sbr.rel (%p306) target = $region32
      $region31: #{glow_network.5} parent=11 // pred_region
        _
      $region32: #{glow_network.5} parent=11 // pred_fallthru
        _
      // Predicated region
      $region33: #{glow_network.5} parent=11 // pred_check
        %p309 = pneg %p169
      $region34: #{glow_network.5} parent=11 // pred_check_branch
        %311 = sbr.rel (%p309) target = $region36
      $region35: #{glow_network.5} parent=11 // pred_region
        _
      $region36: #{glow_network.5} parent=11 // pred_fallthru
        _
      // Predicated region
      $region37: #{glow_network.5} parent=11 // pred_check
        %p312 = pneg %p190
      $region38: #{glow_network.5} parent=11 // pred_check_branch
        %314 = sbr.rel (%p312) target = $region40
      $region39: #{glow_network.5} parent=11 // pred_region
        _
      $region40: #{glow_network.5} parent=11 // pred_fallthru
        _
      // Predicated region
      $region41: #{glow_network.5} parent=11 // pred_check
        %p315 = pneg %p211
      $region42: #{glow_network.5} parent=11 // pred_check_branch
        %317 = sbr.rel (%p315) target = $region44
      $region43: #{glow_network.5} parent=11 // pred_region
        _
      $region44: #{glow_network.5} parent=11 // pred_fallthru
        _
      // Predicated region
      $region45: #{glow_network.5} parent=11 // pred_check
        %p318 = pneg %p232
      $region46: #{glow_network.5} parent=11 // pred_check_branch
        %320 = sbr.rel (%p318) target = $region48
      $region47: #{glow_network.5} parent=11 // pred_region
        _
      $region48: #{glow_network.5} parent=11 // pred_fallthru
        _
      // Predicated region
      $region49: #{glow_network.5} parent=11 // pred_check
        %p321 = pneg %p253
      $region50: #{glow_network.5} parent=11 // pred_check_branch
        %323 = sbr.rel (%p321) target = $region52
      $region51: #{glow_network.5} parent=11 // pred_region
        _
      $region52: #{glow_network.5} parent=11 // pred_fallthru
        _
    $region12: #{glow_network.5} parent=5 // pred_fallthru
      _
    %p324 = scmp.lt.s32.totalorder %s17, 2
    // Predicated region
    $region53: #{glow_network.5} parent=5 // pred_check
      %p325 = pneg %p324
    $region54: #{glow_network.5} parent=5 // pred_check_branch
      %327 = sbr.rel (%p325) target = $region56
    $region55: #{glow_network.5} parent=5 // pred_region
      // Predicated region
      $region57: #{glow_network.5} parent=55 // pred_check
        %p328 = pneg %p37
      $region58: #{glow_network.5} parent=55 // pred_check_branch
        %330 = sbr.rel (%p328) target = $region60
      $region59: #{glow_network.5} parent=55 // pred_region
        %p331 = scmp.lt.s32.totalorder %s17, 1
        %s332 = scalar_select %p331, %s17, 1
        %s333 = smul.addr %s332, 2
        %s334 = scalar_lea.vmem %s0, %s333
      $region60: #{glow_network.5} parent=55 // pred_fallthru
        _
    $region56: #{glow_network.5} parent=5 // pred_fallthru
      _
    %p335 = scmp.le.s32.totalorder 1, %s17
    %p336 = scmp.lt.s32.totalorder %s17, 3
    %p337 = pnand %p335, %p336
    %p338 = pneg %p337
    // Predicated region
    $region61: #{glow_network.5} parent=5 // pred_check
      _
    $region62: #{glow_network.5} parent=5 // pred_check_branch
      %340 = sbr.rel (%p337) target = $region64
    $region63: #{glow_network.5} parent=5 // pred_region
      %s341 = ssub.s32 %s17, 1
      %p342 = scmp.lt.s32.totalorder %s22, 1
      %s343 = scalar_select %p342, %s22, 1
      %s344 = smul.addr %s343, 2
      %s345 = scalar_lea.vmem %s0, %s344
      %p346 = pneg %p43
      %p347 = pneg %p40
      %p348 = pneg %p64
      %p349 = pneg %p61
      %p350 = pneg %p85
      %p351 = pneg %p82
      %p352 = pneg %p106
      %p353 = pneg %p103
      %p354 = pneg %p127
      %p355 = pneg %p124
      %p356 = pneg %p148
      %p357 = pneg %p145
      %p358 = pneg %p169
      %p359 = pneg %p166
      %p360 = pneg %p190
      %p361 = pneg %p187
      %p362 = pneg %p211
      %p363 = pneg %p208
      %p364 = pneg %p232
      %p365 = pneg %p229
      %p366 = pneg %p253
      %p367 = pneg %p250
      %p368 = pneg %p279
      %p369 = pneg %p276
      %p370 = scmp.lt.s32.totalorder %s22, 1
      %s371 = scalar_select %p370, %s22, 1
      %s372 = smul.addr %s371, 2
      %s373 = scalar_lea.vmem %s11, %s372
      %p374 = scmp.lt.s32.totalorder %s22, 1
      %s375 = scalar_select %p374, %s22, 1
      %s376 = smul.addr %s375, 2
      %s377 = scalar_lea.vmem %s0, %s376
      %p378 = scmp.lt.s32.totalorder %s22, 1
      %s379 = scalar_select %p378, %s22, 1
      %s380 = smul.addr %s379, 2
      %s381 = scalar_lea.vmem %s11, %s380
      %v383 = vld [vmem:[%s377] sm:$0x3]
      %v384 = vld [vmem:[%s1] sm:$0x3]
      %v385 = vld [vmem:[%s1 + $0x2] sm:$0x3]
      %v386 = vld [vmem:[%s1 + $0x4] sm:$0x3]
      %v387 = vld [vmem:[%s2] sm:$0xf]
      %v390 = vunpack.c.l.s4 1983009808
      %v391 = vunpack.c.0.s8 %v390
      %v392 = vlaneseq
      %v393 = vshrl.u32 %v392, 7
      %v394 = vsub.s32 %v391, %v393
      %v395 = vrot.slane %v383, %v394
      %396 = vrot.lane.b32.xlu0 %v395, 1
      %v397 = vpop.permute.xlu0 %396
      %vm398 = vcmask 7168
      %v401 = vsel %vm398, 0, %v397
      %vm402 = vcmask 23552
      %v404 = vsel %vm402, %v385, 0
      %vm406 = vcmask 1040384
      %vm407 = vcmask 1041408
      %v408 = vsel %vm406, 4294967295, 65535
      %v409 = vsel %vm407, %v408, 0
      %v411 = vand.u32 %v383, %v409
      %413 = vmatprep.subr.bf16.mxu0 0
      %414 = vmatpush1.bf16.msra.mxu0 0
      %415 = vmatprep.subr.bf16.mxu0 0
      %416 = vmatpush1.bf16.msra.mxu0 0
      %417 = vmatprep.subr.bf16.mxu0 0
      %418 = vmatpush1.bf16.msra.mxu0 0
      %419 = vmatprep.subr.bf16.mxu0 0
      %420 = vmatpush1.bf16.msra.mxu0 0
      %421 = vmatprep.subr.bf16.mxu0 0
      %422 = vmatpush1.bf16.msra.mxu0 0
      %423 = vmatprep.subr.bf16.mxu0 0
      %424 = vmatpush1.bf16.msra.mxu0 0
      %425 = vmatprep.subr.bf16.mxu0 0
      %426 = vmatpush1.bf16.msra.mxu0 0
      %427 = vmatprep.subr.bf16.mxu0 0
      %428 = vmatpush1.bf16.msra.mxu0 %v411
      %429 = vmatprep.subr.bf16.mxu0 0
      %430 = vmatpush2.bf16.msra.mxu0 0
      %431 = vmatprep.subr.bf16.mxu0 0
      %432 = vmatpush2.bf16.msra.mxu0 0
      %433 = vmatprep.subr.bf16.mxu0 0
      %434 = vmatpush2.bf16.msra.mxu0 0
      %435 = vmatprep.subr.bf16.mxu0 0
      %436 = vmatpush2.bf16.msra.mxu0 0
      %437 = vmatprep.subr.bf16.mxu0 0
      %438 = vmatpush2.bf16.msra.mxu0 0
      %439 = vmatprep.subr.bf16.mxu0 0
      %440 = vmatpush2.bf16.msra.mxu0 0
      %441 = vmatprep.subr.bf16.mxu0 0
      %442 = vmatpush2.bf16.msra.mxu0 0
      %443 = vmatprep.subr.bf16.mxu0 0
      %444 = vmatpush2.bf16.msra.mxu0 0
      %445 = vmatprep.mubr.bf16.mxu0 0
      %446 = vmatmul.mubr.bf16.gmra.mxu0 %v404
      %v447 = vpop.f32.mrf.mxu0
      %v448 = vadd.f32 0.0, %v447
      %v449 = vpop.f32.mrf.mxu0
      %v450 = vpop.f32.mrf.mxu0
      %v451 = vpop.f32.mrf.mxu0
      %452 = vdwg.mxu0
      %v454 = vsel %vm402, %v384, 0
      %v456 = vand.u32 %v401, %v409
      %458 = vmatprep.subr.bf16.mxu0 0
      %459 = vmatpush1.bf16.msra.mxu0 0
      %460 = vmatprep.subr.bf16.mxu0 0
      %461 = vmatpush1.bf16.msra.mxu0 0
      %462 = vmatprep.subr.bf16.mxu0 0
      %463 = vmatpush1.bf16.msra.mxu0 0
      %464 = vmatprep.subr.bf16.mxu0 0
      %465 = vmatpush1.bf16.msra.mxu0 0
      %466 = vmatprep.subr.bf16.mxu0 0
      %467 = vmatpush1.bf16.msra.mxu0 0
      %468 = vmatprep.subr.bf16.mxu0 0
      %469 = vmatpush1.bf16.msra.mxu0 0
      %470 = vmatprep.subr.bf16.mxu0 0
      %471 = vmatpush1.bf16.msra.mxu0 0
      %472 = vmatprep.subr.bf16.mxu0 0
      %473 = vmatpush1.bf16.msra.mxu0 %v456
      %474 = vmatprep.subr.bf16.mxu0 0
      %475 = vmatpush2.bf16.msra.mxu0 0
      %476 = vmatprep.subr.bf16.mxu0 0
      %477 = vmatpush2.bf16.msra.mxu0 0
      %478 = vmatprep.subr.bf16.mxu0 0
      %479 = vmatpush2.bf16.msra.mxu0 0
      %480 = vmatprep.subr.bf16.mxu0 0
      %481 = vmatpush2.bf16.msra.mxu0 0
      %482 = vmatprep.subr.bf16.mxu0 0
      %483 = vmatpush2.bf16.msra.mxu0 0
      %484 = vmatprep.subr.bf16.mxu0 0
      %485 = vmatpush2.bf16.msra.mxu0 0
      %486 = vmatprep.subr.bf16.mxu0 0
      %487 = vmatpush2.bf16.msra.mxu0 0
      %488 = vmatprep.subr.bf16.mxu0 0
      %489 = vmatpush2.bf16.msra.mxu0 0
      %490 = vmatprep.mubr.bf16.mxu0 0
      %491 = vmatmul.mubr.bf16.gmra.mxu0 %v454
      %v492 = vpop.f32.mrf.mxu0
      %v493 = vadd.f32 %v448, %v492
      %v494 = vpop.f32.mrf.mxu0
      %v495 = vpop.f32.mrf.mxu0
      %v496 = vpop.f32.mrf.mxu0
      %497 = vdwg.mxu0
      %498 = vrot.lane.b32.xlu0 %v395, 127
      %v499 = vpop.permute.xlu0 %498
      %vm500 = vcmask 121856
      %v502 = vsel %vm500, %v499, 0
      %v504 = vsel %vm402, %v386, 0
      %v506 = vand.u32 %v502, %v409
      %508 = vmatprep.subr.bf16.mxu0 0
      %509 = vmatpush1.bf16.msra.mxu0 0
      %510 = vmatprep.subr.bf16.mxu0 0
      %511 = vmatpush1.bf16.msra.mxu0 0
      %512 = vmatprep.subr.bf16.mxu0 0
      %513 = vmatpush1.bf16.msra.mxu0 0
      %514 = vmatprep.subr.bf16.mxu0 0
      %515 = vmatpush1.bf16.msra.mxu0 0
      %516 = vmatprep.subr.bf16.mxu0 0
      %517 = vmatpush1.bf16.msra.mxu0 0
      %518 = vmatprep.subr.bf16.mxu0 0
      %519 = vmatpush1.bf16.msra.mxu0 0
      %520 = vmatprep.subr.bf16.mxu0 0
      %521 = vmatpush1.bf16.msra.mxu0 0
      %522 = vmatprep.subr.bf16.mxu0 0
      %523 = vmatpush1.bf16.msra.mxu0 %v506
      %524 = vmatprep.subr.bf16.mxu0 0
      %525 = vmatpush2.bf16.msra.mxu0 0
      %526 = vmatprep.subr.bf16.mxu0 0
      %527 = vmatpush2.bf16.msra.mxu0 0
      %528 = vmatprep.subr.bf16.mxu0 0
      %529 = vmatpush2.bf16.msra.mxu0 0
      %530 = vmatprep.subr.bf16.mxu0 0
      %531 = vmatpush2.bf16.msra.mxu0 0
      %532 = vmatprep.subr.bf16.mxu0 0
      %533 = vmatpush2.bf16.msra.mxu0 0
      %534 = vmatprep.subr.bf16.mxu0 0
      %535 = vmatpush2.bf16.msra.mxu0 0
      %536 = vmatprep.subr.bf16.mxu0 0
      %537 = vmatpush2.bf16.msra.mxu0 0
      %538 = vmatprep.subr.bf16.mxu0 0
      %539 = vmatpush2.bf16.msra.mxu0 0
      %540 = vmatprep.mubr.bf16.mxu0 0
      %541 = vmatmul.mubr.bf16.gmra.mxu0 %v504
      %v542 = vpop.f32.mrf.mxu0
      %v543 = vadd.f32 0.0, %v542
      %v544 = vpop.f32.mrf.mxu0
      %v545 = vpop.f32.mrf.mxu0
      %v546 = vpop.f32.mrf.mxu0
      %547 = vdwg.mxu0
      %v548 = vadd.f32 %v493, %v543
      %550 = vset.pattern.permute.xlu0 0
      %551 = vperm.xlu0 %550, %v387
      %v552 = vpop.permute.xlu0 %551
      %v554 = vadd.f32 %v548, %v552
      %v555 = vmax.f32 %v554, 0.0
      %v556 = vpack.c.bf16 %v555, %v555
      %v557 = vld [vmem:[%s3] sm:$0x3]
      %v558 = vld [vmem:[%s3 + $0x2] sm:$0x3]
      %v559 = vld [vmem:[%s3 + $0x4] sm:$0x3]
      %v560 = vld [vmem:[%s4] sm:$0xf]
      %562 = vrot.lane.b32.xlu0 %v556, 1
      %v563 = vpop.permute.xlu0 %562
      %v565 = vsel %vm398, 0, %v563
      %vm566 = vcmask 31744
      %v568 = vsel %vm566, %v558, 0
      %v571 = vsel %vm407, %v556, 0
      %573 = vmatprep.subr.bf16.mxu0 0
      %574 = vmatpush1.bf16.msra.mxu0 0
      %575 = vmatprep.subr.bf16.mxu0 0
      %576 = vmatpush1.bf16.msra.mxu0 0
      %577 = vmatprep.subr.bf16.mxu0 0
      %578 = vmatpush1.bf16.msra.mxu0 0
      %579 = vmatprep.subr.bf16.mxu0 0
      %580 = vmatpush1.bf16.msra.mxu0 0
      %581 = vmatprep.subr.bf16.mxu0 0
      %582 = vmatpush1.bf16.msra.mxu0 0
      %583 = vmatprep.subr.bf16.mxu0 0
      %584 = vmatpush1.bf16.msra.mxu0 0
      %585 = vmatprep.subr.bf16.mxu0 0
      %586 = vmatpush1.bf16.msra.mxu0 0
      %587 = vmatprep.subr.bf16.mxu0 0
      %588 = vmatpush1.bf16.msra.mxu0 %v571
      %589 = vmatprep.subr.bf16.mxu0 0
      %590 = vmatpush2.bf16.msra.mxu0 0
      %591 = vmatprep.subr.bf16.mxu0 0
      %592 = vmatpush2.bf16.msra.mxu0 0
      %593 = vmatprep.subr.bf16.mxu0 0
      %594 = vmatpush2.bf16.msra.mxu0 0
      %595 = vmatprep.subr.bf16.mxu0 0
      %596 = vmatpush2.bf16.msra.mxu0 0
      %597 = vmatprep.subr.bf16.mxu0 0
      %598 = vmatpush2.bf16.msra.mxu0 0
      %599 = vmatprep.subr.bf16.mxu0 0
      %600 = vmatpush2.bf16.msra.mxu0 0
      %601 = vmatprep.subr.bf16.mxu0 0
      %602 = vmatpush2.bf16.msra.mxu0 0
      %603 = vmatprep.subr.bf16.mxu0 0
      %604 = vmatpush2.bf16.msra.mxu0 0
      %605 = vmatprep.mubr.bf16.mxu0 0
      %606 = vmatmul.mubr.bf16.gmra.mxu0 %v568
      %v607 = vpop.f32.mrf.mxu0
      %v608 = vadd.f32 0.0, %v607
      %v609 = vpop.f32.mrf.mxu0
      %v610 = vpop.f32.mrf.mxu0
      %v611 = vpop.f32.mrf.mxu0
      %612 = vdwg.mxu0
      %v614 = vsel %vm566, %v557, 0
      %v616 = vsel %vm407, %v565, 0
      %618 = vmatprep.subr.bf16.mxu0 0
      %619 = vmatpush1.bf16.msra.mxu0 0
      %620 = vmatprep.subr.bf16.mxu0 0
      %621 = vmatpush1.bf16.msra.mxu0 0
      %622 = vmatprep.subr.bf16.mxu0 0
      %623 = vmatpush1.bf16.msra.mxu0 0
      %624 = vmatprep.subr.bf16.mxu0 0
      %625 = vmatpush1.bf16.msra.mxu0 0
      %626 = vmatprep.subr.bf16.mxu0 0
      %627 = vmatpush1.bf16.msra.mxu0 0
      %628 = vmatprep.subr.bf16.mxu0 0
      %629 = vmatpush1.bf16.msra.mxu0 0
      %630 = vmatprep.subr.bf16.mxu0 0
      %631 = vmatpush1.bf16.msra.mxu0 0
      %632 = vmatprep.subr.bf16.mxu0 0
      %633 = vmatpush1.bf16.msra.mxu0 %v616
      %634 = vmatprep.subr.bf16.mxu0 0
      %635 = vmatpush2.bf16.msra.mxu0 0
      %636 = vmatprep.subr.bf16.mxu0 0
      %637 = vmatpush2.bf16.msra.mxu0 0
      %638 = vmatprep.subr.bf16.mxu0 0
      %639 = vmatpush2.bf16.msra.mxu0 0
      %640 = vmatprep.subr.bf16.mxu0 0
      %641 = vmatpush2.bf16.msra.mxu0 0
      %642 = vmatprep.subr.bf16.mxu0 0
      %643 = vmatpush2.bf16.msra.mxu0 0
      %644 = vmatprep.subr.bf16.mxu0 0
      %645 = vmatpush2.bf16.msra.mxu0 0
      %646 = vmatprep.subr.bf16.mxu0 0
      %647 = vmatpush2.bf16.msra.mxu0 0
      %648 = vmatprep.subr.bf16.mxu0 0
      %649 = vmatpush2.bf16.msra.mxu0 0
      %650 = vmatprep.mubr.bf16.mxu0 0
      %651 = vmatmul.mubr.bf16.gmra.mxu0 %v614
      %v652 = vpop.f32.mrf.mxu0
      %v653 = vadd.f32 %v608, %v652
      %v654 = vpop.f32.mrf.mxu0
      %v655 = vpop.f32.mrf.mxu0
      %v656 = vpop.f32.mrf.mxu0
      %657 = vdwg.mxu0
      %658 = vrot.lane.b32.xlu0 %v556, 127
      %v659 = vpop.permute.xlu0 %658
      %v661 = vsel %vm500, %v659, 0
      %v663 = vsel %vm566, %v559, 0
      %v665 = vsel %vm407, %v661, 0
      %667 = vmatprep.subr.bf16.mxu0 0
      %668 = vmatpush1.bf16.msra.mxu0 0
      %669 = vmatprep.subr.bf16.mxu0 0
      %670 = vmatpush1.bf16.msra.mxu0 0
      %671 = vmatprep.subr.bf16.mxu0 0
      %672 = vmatpush1.bf16.msra.mxu0 0
      %673 = vmatprep.subr.bf16.mxu0 0
      %674 = vmatpush1.bf16.msra.mxu0 0
      %675 = vmatprep.subr.bf16.mxu0 0
      %676 = vmatpush1.bf16.msra.mxu0 0
      %677 = vmatprep.subr.bf16.mxu0 0
      %678 = vmatpush1.bf16.msra.mxu0 0
      %679 = vmatprep.subr.bf16.mxu0 0
      %680 = vmatpush1.bf16.msra.mxu0 0
      %681 = vmatprep.subr.bf16.mxu0 0
      %682 = vmatpush1.bf16.msra.mxu0 %v665
      %683 = vmatprep.subr.bf16.mxu0 0
      %684 = vmatpush2.bf16.msra.mxu0 0
      %685 = vmatprep.subr.bf16.mxu0 0
      %686 = vmatpush2.bf16.msra.mxu0 0
      %687 = vmatprep.subr.bf16.mxu0 0
      %688 = vmatpush2.bf16.msra.mxu0 0
      %689 = vmatprep.subr.bf16.mxu0 0
      %690 = vmatpush2.bf16.msra.mxu0 0
      %691 = vmatprep.subr.bf16.mxu0 0
      %692 = vmatpush2.bf16.msra.mxu0 0
      %693 = vmatprep.subr.bf16.mxu0 0
      %694 = vmatpush2.bf16.msra.mxu0 0
      %695 = vmatprep.subr.bf16.mxu0 0
      %696 = vmatpush2.bf16.msra.mxu0 0
      %697 = vmatprep.subr.bf16.mxu0 0
      %698 = vmatpush2.bf16.msra.mxu0 0
      %699 = vmatprep.mubr.bf16.mxu0 0
      %700 = vmatmul.mubr.bf16.gmra.mxu0 %v663
      %v701 = vpop.f32.mrf.mxu0
      %v702 = vadd.f32 0.0, %v701
      %v703 = vpop.f32.mrf.mxu0
      %v704 = vpop.f32.mrf.mxu0
      %v705 = vpop.f32.mrf.mxu0
      %706 = vdwg.mxu0
      %v707 = vadd.f32 %v653, %v702
      %709 = vset.pattern.permute.xlu0 0
      %710 = vperm.xlu0 %709, %v560
      %v711 = vpop.permute.xlu0 %710
      %v713 = vadd.f32 %v707, %v711
      %v714 = vmax.f32 %v713, 0.0
      %716 = vrot.lane.b32.xlu0 %v714, 1
      %v717 = vpop.permute.xlu0 %716
      %v719 = vsel %vm398, 0.0, %v717
      %v720 = vmax.f32 %v719, %v714
      %721 = vrot.lane.b32.xlu0 %v714, 127
      %v722 = vpop.permute.xlu0 %721
      %v724 = vsel %vm500, %v722, 0.0
      %v725 = vmax.f32 %v720, %v724
      %v726 = vlaneseq
      %v727 = vshrl.u32 %v726, 7
      %v728 = vadd.s32 %v727, 8
      %v729 = vlaneseq
      %v730 = vand.u32 %v729, 127
      %v731 = vmul.u32 %v730, 2
      %vm732 = vcmp.eq.s32.totalorder %v727, %v731
      %vm733 = vcmp.eq.s32.totalorder %v728, %v731
      %v734 = vsel %vm732, 1.0, 0.0
      %v735 = vsel %vm733, 1.0, 0.0
      %v736 = vpack.c.bf16 %v735, %v734
      %v737 = vpack.c.bf16 %v725, %v725
      %vm738 = vcmask 130048
      %v740 = vsel %vm738, %v737, 0
      %742 = vmatprep.subr.bf16.mxu0 0
      %743 = vmatpush1.bf16.msra.mxu0 0
      %744 = vmatprep.subr.bf16.mxu0 0
      %745 = vmatpush1.bf16.msra.mxu0 0
      %746 = vmatprep.subr.bf16.mxu0 0
      %747 = vmatpush1.bf16.msra.mxu0 0
      %748 = vmatprep.subr.bf16.mxu0 0
      %749 = vmatpush1.bf16.msra.mxu0 0
      %750 = vmatprep.subr.bf16.mxu0 0
      %751 = vmatpush1.bf16.msra.mxu0 0
      %752 = vmatprep.subr.bf16.mxu0 0
      %753 = vmatpush1.bf16.msra.mxu0 0
      %754 = vmatprep.subr.bf16.mxu0 0
      %755 = vmatpush1.bf16.msra.mxu0 0
      %756 = vmatprep.subr.bf16.mxu0 0
      %757 = vmatpush1.bf16.msra.mxu0 %v736
      %758 = vmatprep.subr.bf16.mxu0 0
      %759 = vmatpush2.bf16.msra.mxu0 0
      %760 = vmatprep.subr.bf16.mxu0 0
      %761 = vmatpush2.bf16.msra.mxu0 0
      %762 = vmatprep.subr.bf16.mxu0 0
      %763 = vmatpush2.bf16.msra.mxu0 0
      %764 = vmatprep.subr.bf16.mxu0 0
      %765 = vmatpush2.bf16.msra.mxu0 0
      %766 = vmatprep.subr.bf16.mxu0 0
      %767 = vmatpush2.bf16.msra.mxu0 0
      %768 = vmatprep.subr.bf16.mxu0 0
      %769 = vmatpush2.bf16.msra.mxu0 0
      %770 = vmatprep.subr.bf16.mxu0 0
      %771 = vmatpush2.bf16.msra.mxu0 0
      %772 = vmatprep.subr.bf16.mxu0 0
      %773 = vmatpush2.bf16.msra.mxu0 0
      %774 = vmatprep.mubr.bf16.mxu0 0
      %775 = vmatmul.mubr.bf16.gmra.mxu0 %v740
      %v776 = vpop.f32.mrf.mxu0
      %v777 = vadd.f32 0.0, %v776
      %v778 = vpop.f32.mrf.mxu0
      %v779 = vpop.f32.mrf.mxu0
      %v780 = vpop.f32.mrf.mxu0
      %781 = vdwg.mxu0
      %v782 = vpack.c.bf16 %v777, %v777
      %v783 = vld [vmem:[%s5] sm:$0x1]
      %v784 = vld [vmem:[%s5 + $0x1] sm:$0x1]
      %v785 = vld [vmem:[%s5 + $0x2] sm:$0x1]
      %v786 = vld [vmem:[%s6] sm:$0x3]
      %788 = vrot.lane.b32.xlu0 %v782, 1
      %v789 = vpop.permute.xlu0 %788
      %v791 = vsel %vm398, 0, %v789
      %vm792 = vcmask 15360
      %v794 = vsel %vm792, %v784, 0
      %v797 = vsel %vm406, %v782, 0
      %799 = vmatprep.subr.bf16.mxu0 0
      %800 = vmatpush1.bf16.msra.mxu0 0
      %801 = vmatprep.subr.bf16.mxu0 0
      %802 = vmatpush1.bf16.msra.mxu0 0
      %803 = vmatprep.subr.bf16.mxu0 0
      %804 = vmatpush1.bf16.msra.mxu0 0
      %805 = vmatprep.subr.bf16.mxu0 0
      %806 = vmatpush1.bf16.msra.mxu0 0
      %807 = vmatprep.subr.bf16.mxu0 0
      %808 = vmatpush1.bf16.msra.mxu0 0
      %809 = vmatprep.subr.bf16.mxu0 0
      %810 = vmatpush1.bf16.msra.mxu0 0
      %811 = vmatprep.subr.bf16.mxu0 0
      %812 = vmatpush1.bf16.msra.mxu0 0
      %813 = vmatprep.subr.bf16.mxu0 0
      %814 = vmatpush1.bf16.msra.mxu0 %v797
      %815 = vmatprep.subr.bf16.mxu0 0
      %816 = vmatpush2.bf16.msra.mxu0 0
      %817 = vmatprep.subr.bf16.mxu0 0
      %818 = vmatpush2.bf16.msra.mxu0 0
      %819 = vmatprep.subr.bf16.mxu0 0
      %820 = vmatpush2.bf16.msra.mxu0 0
      %821 = vmatprep.subr.bf16.mxu0 0
      %822 = vmatpush2.bf16.msra.mxu0 0
      %823 = vmatprep.subr.bf16.mxu0 0
      %824 = vmatpush2.bf16.msra.mxu0 0
      %825 = vmatprep.subr.bf16.mxu0 0
      %826 = vmatpush2.bf16.msra.mxu0 0
      %827 = vmatprep.subr.bf16.mxu0 0
      %828 = vmatpush2.bf16.msra.mxu0 0
      %829 = vmatprep.subr.bf16.mxu0 0
      %830 = vmatpush2.bf16.msra.mxu0 0
      %831 = vmatprep.mubr.bf16.mxu0 0
      %832 = vmatmul.mubr.bf16.gmra.mxu0 %v794
      %v833 = vpop.f32.mrf.mxu0
      %v834 = vadd.f32 0.0, %v833
      %v835 = vpop.f32.mrf.mxu0
      %v836 = vpop.f32.mrf.mxu0
      %v837 = vpop.f32.mrf.mxu0
      %838 = vdwg.mxu0
      %v840 = vsel %vm792, %v783, 0
      %v842 = vsel %vm406, %v791, 0
      %844 = vmatprep.subr.bf16.mxu0 0
      %845 = vmatpush1.bf16.msra.mxu0 0
      %846 = vmatprep.subr.bf16.mxu0 0
      %847 = vmatpush1.bf16.msra.mxu0 0
      %848 = vmatprep.subr.bf16.mxu0 0
      %849 = vmatpush1.bf16.msra.mxu0 0
      %850 = vmatprep.subr.bf16.mxu0 0
      %851 = vmatpush1.bf16.msra.mxu0 0
      %852 = vmatprep.subr.bf16.mxu0 0
      %853 = vmatpush1.bf16.msra.mxu0 0
      %854 = vmatprep.subr.bf16.mxu0 0
      %855 = vmatpush1.bf16.msra.mxu0 0
      %856 = vmatprep.subr.bf16.mxu0 0
      %857 = vmatpush1.bf16.msra.mxu0 0
      %858 = vmatprep.subr.bf16.mxu0 0
      %859 = vmatpush1.bf16.msra.mxu0 %v842
      %860 = vmatprep.subr.bf16.mxu0 0
      %861 = vmatpush2.bf16.msra.mxu0 0
      %862 = vmatprep.subr.bf16.mxu0 0
      %863 = vmatpush2.bf16.msra.mxu0 0
      %864 = vmatprep.subr.bf16.mxu0 0
      %865 = vmatpush2.bf16.msra.mxu0 0
      %866 = vmatprep.subr.bf16.mxu0 0
      %867 = vmatpush2.bf16.msra.mxu0 0
      %868 = vmatprep.subr.bf16.mxu0 0
      %869 = vmatpush2.bf16.msra.mxu0 0
      %870 = vmatprep.subr.bf16.mxu0 0
      %871 = vmatpush2.bf16.msra.mxu0 0
      %872 = vmatprep.subr.bf16.mxu0 0
      %873 = vmatpush2.bf16.msra.mxu0 0
      %874 = vmatprep.subr.bf16.mxu0 0
      %875 = vmatpush2.bf16.msra.mxu0 0
      %876 = vmatprep.mubr.bf16.mxu0 0
      %877 = vmatmul.mubr.bf16.gmra.mxu0 %v840
      %v878 = vpop.f32.mrf.mxu0
      %v879 = vadd.f32 %v834, %v878
      %v880 = vpop.f32.mrf.mxu0
      %v881 = vpop.f32.mrf.mxu0
      %v882 = vpop.f32.mrf.mxu0
      %883 = vdwg.mxu0
      %884 = vrot.lane.b32.xlu0 %v782, 127
      %v885 = vpop.permute.xlu0 %884
      %vm886 = vcmask 56320
      %v888 = vsel %vm886, %v885, 0
      %v890 = vsel %vm792, %v785, 0
      %v892 = vsel %vm406, %v888, 0
      %894 = vmatprep.subr.bf16.mxu0 0
      %895 = vmatpush1.bf16.msra.mxu0 0
      %896 = vmatprep.subr.bf16.mxu0 0
      %897 = vmatpush1.bf16.msra.mxu0 0
      %898 = vmatprep.subr.bf16.mxu0 0
      %899 = vmatpush1.bf16.msra.mxu0 0
      %900 = vmatprep.subr.bf16.mxu0 0
      %901 = vmatpush1.bf16.msra.mxu0 0
      %902 = vmatprep.subr.bf16.mxu0 0
      %903 = vmatpush1.bf16.msra.mxu0 0
      %904 = vmatprep.subr.bf16.mxu0 0
      %905 = vmatpush1.bf16.msra.mxu0 0
      %906 = vmatprep.subr.bf16.mxu0 0
      %907 = vmatpush1.bf16.msra.mxu0 0
      %908 = vmatprep.subr.bf16.mxu0 0
      %909 = vmatpush1.bf16.msra.mxu0 %v892
      %910 = vmatprep.subr.bf16.mxu0 0
      %911 = vmatpush2.bf16.msra.mxu0 0
      %912 = vmatprep.subr.bf16.mxu0 0
      %913 = vmatpush2.bf16.msra.mxu0 0
      %914 = vmatprep.subr.bf16.mxu0 0
      %915 = vmatpush2.bf16.msra.mxu0 0
      %916 = vmatprep.subr.bf16.mxu0 0
      %917 = vmatpush2.bf16.msra.mxu0 0
      %918 = vmatprep.subr.bf16.mxu0 0
      %919 = vmatpush2.bf16.msra.mxu0 0
      %920 = vmatprep.subr.bf16.mxu0 0
      %921 = vmatpush2.bf16.msra.mxu0 0
      %922 = vmatprep.subr.bf16.mxu0 0
      %923 = vmatpush2.bf16.msra.mxu0 0
      %924 = vmatprep.subr.bf16.mxu0 0
      %925 = vmatpush2.bf16.msra.mxu0 0
      %926 = vmatprep.mubr.bf16.mxu0 0
      %927 = vmatmul.mubr.bf16.gmra.mxu0 %v890
      %v928 = vpop.f32.mrf.mxu0
      %v929 = vadd.f32 0.0, %v928
      %v930 = vpop.f32.mrf.mxu0
      %v931 = vpop.f32.mrf.mxu0
      %v932 = vpop.f32.mrf.mxu0
      %933 = vdwg.mxu0
      %v934 = vadd.f32 %v879, %v929
      %936 = vset.pattern.permute.xlu0 0
      %937 = vperm.xlu0 %936, %v786
      %v938 = vpop.permute.xlu0 %937
      %v940 = vadd.f32 %v934, %v938
      %v941 = vmax.f32 %v940, 0.0
      %v942 = vld [vmem:[%s7] sm:$0x1]
      %v943 = vpack.c.bf16 %v941, %v941
      %v944 = vld [vmem:[%s8] sm:$0x3]
      %946 = vset.pattern.permute.xlu0 0
      %947 = vperm.xlu0 %946, %v944
      %v948 = vpop.permute.xlu0 %947
      %v951 = vsel %vm792, %v942, 0
      %v954 = vsel %vm406, %v943, 0
      %956 = vmatprep.subr.bf16.mxu0 0
      %957 = vmatpush1.bf16.msra.mxu0 0
      %958 = vmatprep.subr.bf16.mxu0 0
      %959 = vmatpush1.bf16.msra.mxu0 0
      %960 = vmatprep.subr.bf16.mxu0 0
      %961 = vmatpush1.bf16.msra.mxu0 0
      %962 = vmatprep.subr.bf16.mxu0 0
      %963 = vmatpush1.bf16.msra.mxu0 0
      %964 = vmatprep.subr.bf16.mxu0 0
      %965 = vmatpush1.bf16.msra.mxu0 0
      %966 = vmatprep.subr.bf16.mxu0 0
      %967 = vmatpush1.bf16.msra.mxu0 0
      %968 = vmatprep.subr.bf16.mxu0 0
      %969 = vmatpush1.bf16.msra.mxu0 0
      %970 = vmatprep.subr.bf16.mxu0 0
      %971 = vmatpush1.bf16.msra.mxu0 %v954
      %972 = vmatprep.subr.bf16.mxu0 0
      %973 = vmatpush2.bf16.msra.mxu0 0
      %974 = vmatprep.subr.bf16.mxu0 0
      %975 = vmatpush2.bf16.msra.mxu0 0
      %976 = vmatprep.subr.bf16.mxu0 0
      %977 = vmatpush2.bf16.msra.mxu0 0
      %978 = vmatprep.subr.bf16.mxu0 0
      %979 = vmatpush2.bf16.msra.mxu0 0
      %980 = vmatprep.subr.bf16.mxu0 0
      %981 = vmatpush2.bf16.msra.mxu0 0
      %982 = vmatprep.subr.bf16.mxu0 0
      %983 = vmatpush2.bf16.msra.mxu0 0
      %984 = vmatprep.subr.bf16.mxu0 0
      %985 = vmatpush2.bf16.msra.mxu0 0
      %986 = vmatprep.subr.bf16.mxu0 0
      %987 = vmatpush2.bf16.msra.mxu0 0
      %988 = vmatprep.mubr.bf16.mxu0 0
      %989 = vmatmul.mubr.bf16.gmra.mxu0 %v951
      %v990 = vpop.f32.mrf.mxu0
      %v991 = vadd.f32 %v948, %v990
      %v992 = vpop.f32.mrf.mxu0
      %v993 = vpop.f32.mrf.mxu0
      %v994 = vpop.f32.mrf.mxu0
      %995 = vdwg.mxu0
      %v996 = vmax.f32 %v991, 0.0
      %v997 = vpack.c.bf16 %v996, %v996
      %v998 = vld [vmem:[%s9] sm:$0x3]
      %v999 = vld [vmem:[%s9 + $0x2] sm:$0x3]
      %v1000 = vld [vmem:[%s9 + $0x4] sm:$0x3]
      %v1001 = vld [vmem:[%s10] sm:$0xf]
      %1003 = vrot.lane.b32.xlu0 %v997, 1
      %v1004 = vpop.permute.xlu0 %1003
      %v1006 = vsel %vm398, 0, %v1004
      %v1008 = vsel %vm792, %v999, 0
      %v1011 = vsel %vm406, %v997, 0
      %1013 = vmatprep.subr.bf16.mxu0 0
      %1014 = vmatpush1.bf16.msra.mxu0 0
      %1015 = vmatprep.subr.bf16.mxu0 0
      %1016 = vmatpush1.bf16.msra.mxu0 0
      %1017 = vmatprep.subr.bf16.mxu0 0
      %1018 = vmatpush1.bf16.msra.mxu0 0
      %1019 = vmatprep.subr.bf16.mxu0 0
      %1020 = vmatpush1.bf16.msra.mxu0 0
      %1021 = vmatprep.subr.bf16.mxu0 0
      %1022 = vmatpush1.bf16.msra.mxu0 0
      %1023 = vmatprep.subr.bf16.mxu0 0
      %1024 = vmatpush1.bf16.msra.mxu0 0
      %1025 = vmatprep.subr.bf16.mxu0 0
      %1026 = vmatpush1.bf16.msra.mxu0 0
      %1027 = vmatprep.subr.bf16.mxu0 0
      %1028 = vmatpush1.bf16.msra.mxu0 %v1011
      %1029 = vmatprep.subr.bf16.mxu0 0
      %1030 = vmatpush2.bf16.msra.mxu0 0
      %1031 = vmatprep.subr.bf16.mxu0 0
      %1032 = vmatpush2.bf16.msra.mxu0 0
      %1033 = vmatprep.subr.bf16.mxu0 0
      %1034 = vmatpush2.bf16.msra.mxu0 0
      %1035 = vmatprep.subr.bf16.mxu0 0
      %1036 = vmatpush2.bf16.msra.mxu0 0
      %1037 = vmatprep.subr.bf16.mxu0 0
      %1038 = vmatpush2.bf16.msra.mxu0 0
      %1039 = vmatprep.subr.bf16.mxu0 0
      %1040 = vmatpush2.bf16.msra.mxu0 0
      %1041 = vmatprep.subr.bf16.mxu0 0
      %1042 = vmatpush2.bf16.msra.mxu0 0
      %1043 = vmatprep.subr.bf16.mxu0 0
      %1044 = vmatpush2.bf16.msra.mxu0 0
      %1045 = vmatprep.mubr.bf16.mxu0 0
      %1046 = vmatmul.mubr.bf16.gmra.mxu0 %v1008
      %v1047 = vpop.f32.mrf.mxu0
      %v1048 = vadd.f32 0.0, %v1047
      %v1049 = vpop.f32.mrf.mxu0
      %v1050 = vpop.f32.mrf.mxu0
      %v1051 = vpop.f32.mrf.mxu0
      %1052 = vdwg.mxu0
      %v1054 = vsel %vm792, %v998, 0
      %v1056 = vsel %vm406, %v1006, 0
      %1058 = vmatprep.subr.bf16.mxu0 0
      %1059 = vmatpush1.bf16.msra.mxu0 0
      %1060 = vmatprep.subr.bf16.mxu0 0
      %1061 = vmatpush1.bf16.msra.mxu0 0
      %1062 = vmatprep.subr.bf16.mxu0 0
      %1063 = vmatpush1.bf16.msra.mxu0 0
      %1064 = vmatprep.subr.bf16.mxu0 0
      %1065 = vmatpush1.bf16.msra.mxu0 0
      %1066 = vmatprep.subr.bf16.mxu0 0
      %1067 = vmatpush1.bf16.msra.mxu0 0
      %1068 = vmatprep.subr.bf16.mxu0 0
      %1069 = vmatpush1.bf16.msra.mxu0 0
      %1070 = vmatprep.subr.bf16.mxu0 0
      %1071 = vmatpush1.bf16.msra.mxu0 0
      %1072 = vmatprep.subr.bf16.mxu0 0
      %1073 = vmatpush1.bf16.msra.mxu0 %v1056
      %1074 = vmatprep.subr.bf16.mxu0 0
      %1075 = vmatpush2.bf16.msra.mxu0 0
      %1076 = vmatprep.subr.bf16.mxu0 0
      %1077 = vmatpush2.bf16.msra.mxu0 0
      %1078 = vmatprep.subr.bf16.mxu0 0
      %1079 = vmatpush2.bf16.msra.mxu0 0
      %1080 = vmatprep.subr.bf16.mxu0 0
      %1081 = vmatpush2.bf16.msra.mxu0 0
      %1082 = vmatprep.subr.bf16.mxu0 0
      %1083 = vmatpush2.bf16.msra.mxu0 0
      %1084 = vmatprep.subr.bf16.mxu0 0
      %1085 = vmatpush2.bf16.msra.mxu0 0
      %1086 = vmatprep.subr.bf16.mxu0 0
      %1087 = vmatpush2.bf16.msra.mxu0 0
      %1088 = vmatprep.subr.bf16.mxu0 0
      %1089 = vmatpush2.bf16.msra.mxu0 0
      %1090 = vmatprep.mubr.bf16.mxu0 0
      %1091 = vmatmul.mubr.bf16.gmra.mxu0 %v1054
      %v1092 = vpop.f32.mrf.mxu0
      %v1093 = vadd.f32 %v1048, %v1092
      %v1094 = vpop.f32.mrf.mxu0
      %v1095 = vpop.f32.mrf.mxu0
      %v1096 = vpop.f32.mrf.mxu0
      %1097 = vdwg.mxu0
      %1098 = vrot.lane.b32.xlu0 %v997, 127
      %v1099 = vpop.permute.xlu0 %1098
      %v1101 = vsel %vm886, %v1099, 0
      %v1103 = vsel %vm792, %v1000, 0
      %v1105 = vsel %vm406, %v1101, 0
      %1107 = vmatprep.subr.bf16.mxu0 0
      %1108 = vmatpush1.bf16.msra.mxu0 0
      %1109 = vmatprep.subr.bf16.mxu0 0
      %1110 = vmatpush1.bf16.msra.mxu0 0
      %1111 = vmatprep.subr.bf16.mxu0 0
      %1112 = vmatpush1.bf16.msra.mxu0 0
      %1113 = vmatprep.subr.bf16.mxu0 0
      %1114 = vmatpush1.bf16.msra.mxu0 0
      %1115 = vmatprep.subr.bf16.mxu0 0
      %1116 = vmatpush1.bf16.msra.mxu0 0
      %1117 = vmatprep.subr.bf16.mxu0 0
      %1118 = vmatpush1.bf16.msra.mxu0 0
      %1119 = vmatprep.subr.bf16.mxu0 0
      %1120 = vmatpush1.bf16.msra.mxu0 0
      %1121 = vmatprep.subr.bf16.mxu0 0
      %1122 = vmatpush1.bf16.msra.mxu0 %v1105
      %1123 = vmatprep.subr.bf16.mxu0 0
      %1124 = vmatpush2.bf16.msra.mxu0 0
      %1125 = vmatprep.subr.bf16.mxu0 0
      %1126 = vmatpush2.bf16.msra.mxu0 0
      %1127 = vmatprep.subr.bf16.mxu0 0
      %1128 = vmatpush2.bf16.msra.mxu0 0
      %1129 = vmatprep.subr.bf16.mxu0 0
      %1130 = vmatpush2.bf16.msra.mxu0 0
      %1131 = vmatprep.subr.bf16.mxu0 0
      %1132 = vmatpush2.bf16.msra.mxu0 0
      %1133 = vmatprep.subr.bf16.mxu0 0
      %1134 = vmatpush2.bf16.msra.mxu0 0
      %1135 = vmatprep.subr.bf16.mxu0 0
      %1136 = vmatpush2.bf16.msra.mxu0 0
      %1137 = vmatprep.subr.bf16.mxu0 0
      %1138 = vmatpush2.bf16.msra.mxu0 0
      %1139 = vmatprep.mubr.bf16.mxu0 0
      %1140 = vmatmul.mubr.bf16.gmra.mxu0 %v1103
      %v1141 = vpop.f32.mrf.mxu0
      %v1142 = vadd.f32 0.0, %v1141
      %v1143 = vpop.f32.mrf.mxu0
      %v1144 = vpop.f32.mrf.mxu0
      %v1145 = vpop.f32.mrf.mxu0
      %1146 = vdwg.mxu0
      %v1147 = vadd.f32 %v1093, %v1142
      %1149 = vset.pattern.permute.xlu0 0
      %1150 = vperm.xlu0 %1149, %v1001
      %v1151 = vpop.permute.xlu0 %1150
      %v1153 = vadd.f32 %v1147, %v1151
      %v1154 = vadd.f32 %v1153, 2.0
      %v1155 = vxor.u32 %v1154, 2147483648
      %v1156 = vmul.f32 %v1155, 1.442695
      %v1157 = vpow.pop %v1156
      %v1158 = vadd.f32 %v1157, 1.0
      %v1159 = vrcp.pop %v1158
      %v1160 = vmul.f32 1.0, %v1159
      %v1161 = vadd.f32 %v777, %v1153
      %v1163 = vrot.slane %v1160, 6
      %v1165 = vmul.f32 %v1161, %v1163
      %v1166 = vsel %vm407, %v777, %v1165
      %v1167 = vpack.c.bf16 %v1166, %v1166
      %vm1168 = vcmask 58368
      %1169 = vst.msk [vmem:[%s381] sm:$0x3] %vm1168, %v1167
      %p1170 = scmp.lt.s32.totalorder %s22, 1
      %s1171 = scalar_select %p1170, %s22, 1
      %s1172 = smul.addr %s1171, 2
      %s1173 = scalar_lea.vmem %s11, %s1172
      // Predicated region
      $region65: #{glow_network.5} parent=63 // pred_check
        %p1174 = pneg %p276
      $region66: #{glow_network.5} parent=63 // pred_check_branch
        %1176 = sbr.rel (%p1174) target = $region68
      $region67: #{glow_network.5} parent=63 // pred_region
        _
      $region68: #{glow_network.5} parent=63 // pred_fallthru
        _
    $region64: #{glow_network.5} parent=5 // pred_fallthru
      _
    %p1177 = scmp.le.s32.totalorder 2, %s17
    // Predicated region
    $region69: #{glow_network.5} parent=5 // pred_check
      %p1178 = pneg %p1177
    $region70: #{glow_network.5} parent=5 // pred_check_branch
      %1180 = sbr.rel (%p1178) target = $region72
    $region71: #{glow_network.5} parent=5 // pred_region
      %s1181 = ssub.s32 %s17, 2
      // Predicated region
      $region73: #{glow_network.5} parent=71 // pred_check
        %p1182 = pneg %p282
      $region74: #{glow_network.5} parent=71 // pred_check_branch
        %1184 = sbr.rel (%p1182) target = $region76
      $region75: #{glow_network.5} parent=71 // pred_region
        %p1185 = scmp.lt.s32.totalorder %s23, 1
        %s1186 = scalar_select %p1185, %s23, 1
        %s1187 = smul.addr %s1186, 2
        %s1188 = scalar_lea.vmem %s11, %s1187
      $region76: #{glow_network.5} parent=71 // pred_fallthru
        _
    $region72: #{glow_network.5} parent=5 // pred_fallthru
      _
  $region6: #{glow_network.5} parent=0 // loop_footer
    %s21 = sadd.s32 1, %s17
  $region7: #{glow_network.5} parent=0 // loop_footer_branch
    %16 = sbr.rel target = $region3
  $region8: #{glow_network.5} parent=0 // loop_exit
    _

// kernel: glow_network.6
$region0: #{glow_network.6}
  #allocation0 [shape = 'u32[]', space=smem, size = 0x4, offset = 0x4, fixed_abs, tag = 'smem constant byte address 0x4 - core index']
  #allocation1 [shape = 'u32[144,128]{1,0:T(1,128)}', space=vmem, size = 0x12000, scoped, tag = 'internal scratch']
  %s0 = inlined_call_operand.vmem [shape: bf16[2,4,8], index: 0, kind: input, shape index: {}]
  %s1 = inlined_call_operand.vmem [shape: bf16[3,6,4], index: 1, kind: input, shape index: {}]
  %s2 = inlined_call_operand.vmem [shape: f32[6,1], index: 2, kind: input, shape index: {}]
  %s3 = inlined_call_operand.vmem [shape: bf16[3,6,6], index: 3, kind: input, shape index: {}]
  %s4 = inlined_call_operand.vmem [shape: f32[6,1], index: 4, kind: input, shape index: {}]
  %s5 = inlined_call_operand.vmem [shape: bf16[1,3,3,3], index: 5, kind: input, shape index: {}]
  %s6 = inlined_call_operand.hbm [shape: f32[1,3,1], index: 6, kind: input, shape index: {}]
  %s7 = inlined_call_operand.hbm [shape: bf16[1,3,3], index: 7, kind: input, shape index: {}]
  %s8 = inlined_call_operand.vmem [shape: f32[1,3,1], index: 8, kind: input, shape index: {}]
  %s9 = inlined_call_operand.vmem [shape: bf16[1,3,6,3], index: 9, kind: input, shape index: {}]
  %s10 = inlined_call_operand.vmem [shape: f32[1,6,1], index: 10, kind: input, shape index: {}]
  %s11 = inlined_call_operand.vmem [shape: bf16[2,6,4], index: 11, kind: output, shape index: {}]
  %s12 = sld [smem:[#allocation0]]
  $region85: #{glow_network.6} parent=0
    _
  %s14 = ssub.s32 1, %s12
  %s15 = scalar_select 0, %s14, %s12
  $region1: #{glow_network.6} parent=0
    #allocation2 [shape = 'u8[2048]{0}', space=vmem, size = 0x800, scoped, tag = 'input window, operand 6, single buffered']
    #allocation3 [shape = 's32[2]{0}', space=sflag, size = 0x8, scoped, tag = 'scoped memory for glow_network.6']
    #allocation4 [shape = 'u8[1024]{0}', space=vmem, size = 0x400, scoped, tag = 'input window, operand 7, single buffered']
    #allocation5 [shape = 's32[1]{0}', space=sflag, size = 0x4, scoped, tag = 'scoped memory for glow_network.6']
    %16 = vsyncpa [#allocation3], 0
    %17 = vsyncpa [#allocation5], 0
    loop: start=0, step=1, limit=4
    $region2: #{glow_network.6} parent=1 // loop_pre_header
      _
    $region3: #{glow_network.6} parent=1 // loop_header
      %s19 = sphi 0, %s23
      %p20 = scmp.ge.s32.totalorder %s19, 4
      %s29 = sphi 0, %s31
      %s32 = sphi 0, %s29
      %s33 = sphi 0, %s32
      %s49 = sphi 0, %s33
      %s53 = sphi 0, %s53
      %s55 = sphi 0, %s53
      %s56 = sphi 0, %s55
      %s70 = sphi 0, %s56
      %s74 = sphi 0, %s74
      %s76 = sphi 0, %s74
      %s77 = sphi 0, %s76
      %s91 = sphi 0, %s77
      %s95 = sphi 0, %s95
      %s97 = sphi 0, %s95
      %s98 = sphi 0, %s97
      %s112 = sphi 0, %s98
      %s116 = sphi 0, %s116
      %s118 = sphi 0, %s116
      %s119 = sphi 0, %s118
      %s133 = sphi 0, %s119
      %s137 = sphi 0, %s137
      %s139 = sphi 0, %s137
      %s140 = sphi 0, %s139
      %s154 = sphi 0, %s140
      %s158 = sphi 0, %s158
      %s160 = sphi 0, %s158
      %s161 = sphi 0, %s160
      %s175 = sphi 0, %s161
      %s179 = sphi 0, %s179
      %s181 = sphi 0, %s179
      %s182 = sphi 0, %s181
      %s196 = sphi 0, %s182
      %s200 = sphi 0, %s200
      %s202 = sphi 0, %s200
      %s203 = sphi 0, %s202
      %s217 = sphi 0, %s203
      %s221 = sphi 0, %s221
      %s223 = sphi 0, %s221
      %s224 = sphi 0, %s223
      %s238 = sphi 0, %s224
      %s242 = sphi 0, %s242
      %s244 = sphi 0, %s242
      %s245 = sphi 0, %s244
      %s259 = sphi 0, %s245
      %s265 = sphi 0, %s267
      %s268 = sphi 0, %s265
      %s269 = sphi 0, %s268
      %s285 = sphi 0, %s269
    $region4: #{glow_network.6} parent=1 // loop_header_branch
      %22 = sbr.rel (%p20) target = $region8
    $region5: #{glow_network.6} parent=1 // loop_body
      %s24 = ssub.s32 %s19, 1
      %s25 = ssub.s32 %s19, 2
      %s26 = sadd.s32 %s19, 1
      %s27 = ssub.s32 %s19, %s26
      %p28 = scmp.eq.s32.totalorder %s27, 0
      %s30 = sadd.s32 %s29, 1
      %s31 = scalar_select %p28, %s29, %s30
      %p34 = pneg %p28
      %p35 = scmp.eq.s32.totalorder %s19, 1
      %p36 = por %p34, %p35
      %p37 = scmp.ne.s32.totalorder %s29, %s32
      %p38 = scmp.eq.s32.totalorder %s19, 0
      %p39 = por %p37, %p38
      %p40 = scmp.ne.s32.totalorder %s29, %s32
      %p41 = scmp.eq.s32.totalorder %s24, 1
      %p42 = por %p40, %p41
      %p43 = scmp.ne.s32.totalorder %s32, %s33
      %p44 = scmp.eq.s32.totalorder %s24, 0
      %p45 = por %p43, %p44
      %p46 = scmp.ne.s32.totalorder %s32, %s33
      %p47 = scmp.eq.s32.totalorder %s25, 1
      %p48 = por %p46, %p47
      %p50 = scmp.ne.s32.totalorder %s33, %s49
      %p51 = scmp.eq.s32.totalorder %s25, 0
      %p52 = por %p50, %p51
      %s54 = sadd.s32 %s53, 1
      %p57 = scmp.eq.s32.totalorder %s19, 1
      %p58 = scmp.ne.s32.totalorder %s53, %s55
      %p59 = scmp.eq.s32.totalorder %s19, 0
      %p60 = por %p58, %p59
      %p61 = scmp.ne.s32.totalorder %s53, %s55
      %p62 = scmp.eq.s32.totalorder %s24, 1
      %p63 = por %p61, %p62
      %p64 = scmp.ne.s32.totalorder %s55, %s56
      %p65 = scmp.eq.s32.totalorder %s24, 0
      %p66 = por %p64, %p65
      %p67 = scmp.ne.s32.totalorder %s55, %s56
      %p68 = scmp.eq.s32.totalorder %s25, 1
      %p69 = por %p67, %p68
      %p71 = scmp.ne.s32.totalorder %s56, %s70
      %p72 = scmp.eq.s32.totalorder %s25, 0
      %p73 = por %p71, %p72
      %s75 = sadd.s32 %s74, 1
      %p78 = scmp.eq.s32.totalorder %s19, 1
      %p79 = scmp.ne.s32.totalorder %s74, %s76
      %p80 = scmp.eq.s32.totalorder %s19, 0
      %p81 = por %p79, %p80
      %p82 = scmp.ne.s32.totalorder %s74, %s76
      %p83 = scmp.eq.s32.totalorder %s24, 1
      %p84 = por %p82, %p83
      %p85 = scmp.ne.s32.totalorder %s76, %s77
      %p86 = scmp.eq.s32.totalorder %s24, 0
      %p87 = por %p85, %p86
      %p88 = scmp.ne.s32.totalorder %s76, %s77
      %p89 = scmp.eq.s32.totalorder %s25, 1
      %p90 = por %p88, %p89
      %p92 = scmp.ne.s32.totalorder %s77, %s91
      %p93 = scmp.eq.s32.totalorder %s25, 0
      %p94 = por %p92, %p93
      %s96 = sadd.s32 %s95, 1
      %p99 = scmp.eq.s32.totalorder %s19, 1
      %p100 = scmp.ne.s32.totalorder %s95, %s97
      %p101 = scmp.eq.s32.totalorder %s19, 0
      %p102 = por %p100, %p101
      %p103 = scmp.ne.s32.totalorder %s95, %s97
      %p104 = scmp.eq.s32.totalorder %s24, 1
      %p105 = por %p103, %p104
      %p106 = scmp.ne.s32.totalorder %s97, %s98
      %p107 = scmp.eq.s32.totalorder %s24, 0
      %p108 = por %p106, %p107
      %p109 = scmp.ne.s32.totalorder %s97, %s98
      %p110 = scmp.eq.s32.totalorder %s25, 1
      %p111 = por %p109, %p110
      %p113 = scmp.ne.s32.totalorder %s98, %s112
      %p114 = scmp.eq.s32.totalorder %s25, 0
      %p115 = por %p113, %p114
      %s117 = sadd.s32 %s116, 1
      %p120 = scmp.eq.s32.totalorder %s19, 1
      %p121 = scmp.ne.s32.totalorder %s116, %s118
      %p122 = scmp.eq.s32.totalorder %s19, 0
      %p123 = por %p121, %p122
      %p124 = scmp.ne.s32.totalorder %s116, %s118
      %p125 = scmp.eq.s32.totalorder %s24, 1
      %p126 = por %p124, %p125
      %p127 = scmp.ne.s32.totalorder %s118, %s119
      %p128 = scmp.eq.s32.totalorder %s24, 0
      %p129 = por %p127, %p128
      %p130 = scmp.ne.s32.totalorder %s118, %s119
      %p131 = scmp.eq.s32.totalorder %s25, 1
      %p132 = por %p130, %p131
      %p134 = scmp.ne.s32.totalorder %s119, %s133
      %p135 = scmp.eq.s32.totalorder %s25, 0
      %p136 = por %p134, %p135
      %s138 = sadd.s32 %s137, 1
      %p141 = scmp.eq.s32.totalorder %s19, 1
      %p142 = scmp.ne.s32.totalorder %s137, %s139
      %p143 = scmp.eq.s32.totalorder %s19, 0
      %p144 = por %p142, %p143
      %p145 = scmp.ne.s32.totalorder %s137, %s139
      %p146 = scmp.eq.s32.totalorder %s24, 1
      %p147 = por %p145, %p146
      %p148 = scmp.ne.s32.totalorder %s139, %s140
      %p149 = scmp.eq.s32.totalorder %s24, 0
      %p150 = por %p148, %p149
      %p151 = scmp.ne.s32.totalorder %s139, %s140
      %p152 = scmp.eq.s32.totalorder %s25, 1
      %p153 = por %p151, %p152
      %p155 = scmp.ne.s32.totalorder %s140, %s154
      %p156 = scmp.eq.s32.totalorder %s25, 0
      %p157 = por %p155, %p156
      %s159 = sadd.s32 %s158, 1
      %p162 = scmp.eq.s32.totalorder %s19, 1
      %p163 = scmp.ne.s32.totalorder %s158, %s160
      %p164 = scmp.eq.s32.totalorder %s19, 0
      %p165 = por %p163, %p164
      %p166 = scmp.ne.s32.totalorder %s158, %s160
      %p167 = scmp.eq.s32.totalorder %s24, 1
      %p168 = por %p166, %p167
      %p169 = scmp.ne.s32.totalorder %s160, %s161
      %p170 = scmp.eq.s32.totalorder %s24, 0
      %p171 = por %p169, %p170
      %p172 = scmp.ne.s32.totalorder %s160, %s161
      %p173 = scmp.eq.s32.totalorder %s25, 1
      %p174 = por %p172, %p173
      %p176 = scmp.ne.s32.totalorder %s161, %s175
      %p177 = scmp.eq.s32.totalorder %s25, 0
      %p178 = por %p176, %p177
      %s180 = sadd.s32 %s179, 1
      %p183 = scmp.eq.s32.totalorder %s19, 1
      %p184 = scmp.ne.s32.totalorder %s179, %s181
      %p185 = scmp.eq.s32.totalorder %s19, 0
      %p186 = por %p184, %p185
      %p187 = scmp.ne.s32.totalorder %s179, %s181
      %p188 = scmp.eq.s32.totalorder %s24, 1
      %p189 = por %p187, %p188
      %p190 = scmp.ne.s32.totalorder %s181, %s182
      %p191 = scmp.eq.s32.totalorder %s24, 0
      %p192 = por %p190, %p191
      %p193 = scmp.ne.s32.totalorder %s181, %s182
      %p194 = scmp.eq.s32.totalorder %s25, 1
      %p195 = por %p193, %p194
      %p197 = scmp.ne.s32.totalorder %s182, %s196
      %p198 = scmp.eq.s32.totalorder %s25, 0
      %p199 = por %p197, %p198
      %s201 = sadd.s32 %s200, 1
      %p204 = scmp.eq.s32.totalorder %s19, 1
      %p205 = scmp.ne.s32.totalorder %s200, %s202
      %p206 = scmp.eq.s32.totalorder %s19, 0
      %p207 = por %p205, %p206
      %p208 = scmp.ne.s32.totalorder %s200, %s202
      %p209 = scmp.eq.s32.totalorder %s24, 1
      %p210 = por %p208, %p209
      %p211 = scmp.ne.s32.totalorder %s202, %s203
      %p212 = scmp.eq.s32.totalorder %s24, 0
      %p213 = por %p211, %p212
      %p214 = scmp.ne.s32.totalorder %s202, %s203
      %p215 = scmp.eq.s32.totalorder %s25, 1
      %p216 = por %p214, %p215
      %p218 = scmp.ne.s32.totalorder %s203, %s217
      %p219 = scmp.eq.s32.totalorder %s25, 0
      %p220 = por %p218, %p219
      %s222 = sadd.s32 %s221, 1
      %p225 = scmp.eq.s32.totalorder %s19, 1
      %p226 = scmp.ne.s32.totalorder %s221, %s223
      %p227 = scmp.eq.s32.totalorder %s19, 0
      %p228 = por %p226, %p227
      %p229 = scmp.ne.s32.totalorder %s221, %s223
      %p230 = scmp.eq.s32.totalorder %s24, 1
      %p231 = por %p229, %p230
      %p232 = scmp.ne.s32.totalorder %s223, %s224
      %p233 = scmp.eq.s32.totalorder %s24, 0
      %p234 = por %p232, %p233
      %p235 = scmp.ne.s32.totalorder %s223, %s224
      %p236 = scmp.eq.s32.totalorder %s25, 1
      %p237 = por %p235, %p236
      %p239 = scmp.ne.s32.totalorder %s224, %s238
      %p240 = scmp.eq.s32.totalorder %s25, 0
      %p241 = por %p239, %p240
      %s243 = sadd.s32 %s242, 1
      %p246 = scmp.eq.s32.totalorder %s19, 1
      %p247 = scmp.ne.s32.totalorder %s242, %s244
      %p248 = scmp.eq.s32.totalorder %s19, 0
      %p249 = por %p247, %p248
      %p250 = scmp.ne.s32.totalorder %s242, %s244
      %p251 = scmp.eq.s32.totalorder %s24, 1
      %p252 = por %p250, %p251
      %p253 = scmp.ne.s32.totalorder %s244, %s245
      %p254 = scmp.eq.s32.totalorder %s24, 0
      %p255 = por %p253, %p254
      %p256 = scmp.ne.s32.totalorder %s244, %s245
      %p257 = scmp.eq.s32.totalorder %s25, 1
      %p258 = por %p256, %p257
      %p260 = scmp.ne.s32.totalorder %s245, %s259
      %p261 = scmp.eq.s32.totalorder %s25, 0
      %p262 = por %p260, %p261
      %s263 = ssub.s32 %s19, %s26
      %p264 = scmp.eq.s32.totalorder %s263, 0
      %s266 = sadd.s32 %s265, 1
      %s267 = scalar_select %p264, %s265, %s266
      %p270 = pneg %p264
      %p271 = scmp.eq.s32.totalorder %s19, 1
      %p272 = por %p270, %p271
      %p273 = scmp.ne.s32.totalorder %s265, %s268
      %p274 = scmp.eq.s32.totalorder %s19, 0
      %p275 = por %p273, %p274
      %p276 = scmp.ne.s32.totalorder %s265, %s268
      %p277 = scmp.eq.s32.totalorder %s24, 1
      %p278 = por %p276, %p277
      %p279 = scmp.ne.s32.totalorder %s268, %s269
      %p280 = scmp.eq.s32.totalorder %s24, 0
      %p281 = por %p279, %p280
      %p282 = scmp.ne.s32.totalorder %s268, %s269
      %p283 = scmp.eq.s32.totalorder %s25, 1
      %p284 = por %p282, %p283
      %p286 = scmp.ne.s32.totalorder %s269, %s285
      %p287 = scmp.eq.s32.totalorder %s25, 0
      %p288 = por %p286, %p287
      %p289 = scmp.le.s32.totalorder 1, %s19
      %p290 = scmp.lt.s32.totalorder %s19, 3
      %p291 = pnand %p289, %p290
      %p292 = pneg %p291
      // Predicated region
      $region9: #{glow_network.6} parent=5 // pred_check
        _
      $region10: #{glow_network.6} parent=5 // pred_check_branch
        %294 = sbr.rel (%p291) target = $region12
      $region11: #{glow_network.6} parent=5 // pred_region
        %s295 = ssub.s32 %s19, 1
        // Predicated region
        $region13: #{glow_network.6} parent=11 // pred_check
          %p296 = pneg %p66
        $region14: #{glow_network.6} parent=11 // pred_check_branch
          %298 = sbr.rel (%p296) target = $region16
        $region15: #{glow_network.6} parent=11 // pred_region
          _
        $region16: #{glow_network.6} parent=11 // pred_fallthru
          _
        // Predicated region
        $region17: #{glow_network.6} parent=11 // pred_check
          %p299 = pneg %p87
        $region18: #{glow_network.6} parent=11 // pred_check_branch
          %301 = sbr.rel (%p299) target = $region20
        $region19: #{glow_network.6} parent=11 // pred_region
          _
        $region20: #{glow_network.6} parent=11 // pred_fallthru
          _
        // Predicated region
        $region21: #{glow_network.6} parent=11 // pred_check
          %p302 = pneg %p108
        $region22: #{glow_network.6} parent=11 // pred_check_branch
          %304 = sbr.rel (%p302) target = $region24
        $region23: #{glow_network.6} parent=11 // pred_region
          _
        $region24: #{glow_network.6} parent=11 // pred_fallthru
          _
        // Predicated region
        $region25: #{glow_network.6} parent=11 // pred_check
          %p305 = pneg %p129
        $region26: #{glow_network.6} parent=11 // pred_check_branch
          %307 = sbr.rel (%p305) target = $region28
        $region27: #{glow_network.6} parent=11 // pred_region
          _
        $region28: #{glow_network.6} parent=11 // pred_fallthru
          _
        // Predicated region
        $region29: #{glow_network.6} parent=11 // pred_check
          %p308 = pneg %p150
        $region30: #{glow_network.6} parent=11 // pred_check_branch
          %310 = sbr.rel (%p308) target = $region32
        $region31: #{glow_network.6} parent=11 // pred_region
          _
        $region32: #{glow_network.6} parent=11 // pred_fallthru
          _
        // Predicated region
        $region33: #{glow_network.6} parent=11 // pred_check
          %p311 = pneg %p171
        $region34: #{glow_network.6} parent=11 // pred_check_branch
          %313 = sbr.rel (%p311) target = $region36
        $region35: #{glow_network.6} parent=11 // pred_region
          %s315 = ssub.s32 64, 64
          %316 = vsyncadd [#allocation3], %s315
          %s318 = sshll.u32 [#allocation2], 4
          %s319 = int_to_ptr.vmem [resolvable:$true] %s318
          %321 = dma.hbm_to_vmem [thread:$0]  %s6, 64, %s319, [#allocation3]
        $region36: #{glow_network.6} parent=11 // pred_fallthru
          _
        // Predicated region
        $region37: #{glow_network.6} parent=11 // pred_check
          %p322 = pneg %p192
        $region38: #{glow_network.6} parent=11 // pred_check_branch
          %324 = sbr.rel (%p322) target = $region40
        $region39: #{glow_network.6} parent=11 // pred_region
          %s326 = ssub.s32 32, 32
          %327 = vsyncadd [#allocation5], %s326
          %s329 = sshll.u32 [#allocation4], 4
          %s330 = int_to_ptr.vmem [resolvable:$true] %s329
          %332 = dma.hbm_to_vmem [thread:$0]  %s7, 32, %s330, [#allocation5]
        $region40: #{glow_network.6} parent=11 // pred_fallthru
          _
        // Predicated region
        $region41: #{glow_network.6} parent=11 // pred_check
          %p333 = pneg %p213
        $region42: #{glow_network.6} parent=11 // pred_check_branch
          %335 = sbr.rel (%p333) target = $region44
        $region43: #{glow_network.6} parent=11 // pred_region
          _
        $region44: #{glow_network.6} parent=11 // pred_fallthru
          _
        // Predicated region
        $region45: #{glow_network.6} parent=11 // pred_check
          %p336 = pneg %p234
        $region46: #{glow_network.6} parent=11 // pred_check_branch
          %338 = sbr.rel (%p336) target = $region48
        $region47: #{glow_network.6} parent=11 // pred_region
          _
        $region48: #{glow_network.6} parent=11 // pred_fallthru
          _
        // Predicated region
        $region49: #{glow_network.6} parent=11 // pred_check
          %p339 = pneg %p255
        $region50: #{glow_network.6} parent=11 // pred_check_branch
          %341 = sbr.rel (%p339) target = $region52
        $region51: #{glow_network.6} parent=11 // pred_region
          _
        $region52: #{glow_network.6} parent=11 // pred_fallthru
          _
      $region12: #{glow_network.6} parent=5 // pred_fallthru
        _
      %p342 = scmp.lt.s32.totalorder %s19, 2
      // Predicated region
      $region53: #{glow_network.6} parent=5 // pred_check
        %p343 = pneg %p342
      $region54: #{glow_network.6} parent=5 // pred_check_branch
        %345 = sbr.rel (%p343) target = $region56
      $region55: #{glow_network.6} parent=5 // pred_region
        // Predicated region
        $region57: #{glow_network.6} parent=55 // pred_check
          %p346 = pneg %p39
        $region58: #{glow_network.6} parent=55 // pred_check_branch
          %348 = sbr.rel (%p346) target = $region60
        $region59: #{glow_network.6} parent=55 // pred_region
          %p349 = scmp.lt.s32.totalorder %s19, 1
          %s350 = scalar_select %p349, %s19, 1
          %s351 = smul.addr %s350, 2
          %s352 = scalar_lea.vmem %s0, %s351
        $region60: #{glow_network.6} parent=55 // pred_fallthru
          _
      $region56: #{glow_network.6} parent=5 // pred_fallthru
        _
      %p353 = scmp.le.s32.totalorder 1, %s19
      %p354 = scmp.lt.s32.totalorder %s19, 3
      %p355 = pnand %p353, %p354
      %p356 = pneg %p355
      // Predicated region
      $region61: #{glow_network.6} parent=5 // pred_check
        _
      $region62: #{glow_network.6} parent=5 // pred_check_branch
        %358 = sbr.rel (%p355) target = $region64
      $region63: #{glow_network.6} parent=5 // pred_region
        %s359 = ssub.s32 %s19, 1
        // Predicated region
        $region65: #{glow_network.6} parent=63 // pred_check
          %p360 = pneg %p171
        $region66: #{glow_network.6} parent=63 // pred_check_branch
          %362 = sbr.rel (%p360) target = $region68
        $region67: #{glow_network.6} parent=63 // pred_region
          %363 = dma.done [#allocation3], 64
        $region68: #{glow_network.6} parent=63 // pred_fallthru
          _
        // Predicated region
        $region69: #{glow_network.6} parent=63 // pred_check
          %p364 = pneg %p192
        $region70: #{glow_network.6} parent=63 // pred_check_branch
          %366 = sbr.rel (%p364) target = $region72
        $region71: #{glow_network.6} parent=63 // pred_region
          %367 = dma.done [#allocation5], 32
        $region72: #{glow_network.6} parent=63 // pred_fallthru
          _
        %p368 = scmp.lt.s32.totalorder %s24, 1
        %s369 = scalar_select %p368, %s24, 1
        %s370 = smul.addr %s369, 2
        %s371 = scalar_lea.vmem %s0, %s370
        %p372 = pneg %p45
        %p373 = pneg %p42
        %p374 = pneg %p66
        %p375 = pneg %p63
        %p376 = pneg %p87
        %p377 = pneg %p84
        %p378 = pneg %p108
        %p379 = pneg %p105
        %p380 = pneg %p129
        %p381 = pneg %p126
        %p382 = pneg %p150
        %p383 = pneg %p147
        %p384 = pneg %p171
        %p385 = pneg %p168
        %p386 = pneg %p192
        %p387 = pneg %p189
        %p388 = pneg %p213
        %p389 = pneg %p210
        %p390 = pneg %p234
        %p391 = pneg %p231
        %p392 = pneg %p255
        %p393 = pneg %p252
        %p394 = pneg %p281
        %p395 = pneg %p278
        %p396 = scmp.lt.s32.totalorder %s24, 1
        %s397 = scalar_select %p396, %s24, 1
        %s398 = smul.addr %s397, 4
        %s399 = scalar_lea.vmem %s11, %s398
        %p400 = scmp.lt.s32.totalorder %s24, 1
        %s401 = scalar_select %p400, %s24, 1
        %s402 = smul.addr %s401, 2
        %s403 = scalar_lea.vmem %s0, %s402
        %p404 = scmp.lt.s32.totalorder %s24, 1
        %s405 = scalar_select %p404, %s24, 1
        %s406 = smul.addr %s405, 4
        %s407 = scalar_lea.vmem %s11, %s406
        %v409 = vld [vmem:[%s403] sm:$0x3]
        %v410 = vld [vmem:[%s1] sm:$0x7]
        %v411 = vld [vmem:[%s1 + $0x4] sm:$0x7]
        %v412 = vld [vmem:[%s1 + $0x8] sm:$0x7]
        %v413 = vld [vmem:[%s2] sm:$0x3f]
        %v416 = vunpack.c.l.s4 1983009808
        %v417 = vunpack.c.0.s8 %v416
        %v418 = vlaneseq
        %v419 = vshrl.u32 %v418, 7
        %v420 = vsub.s32 %v417, %v419
        %v421 = vrot.slane %v409, %v420
        %422 = vrot.lane.b32.xlu0 %v421, 1
        %v423 = vpop.permute.xlu0 %422
        %vm424 = vcmask 7168
        %v427 = vsel %vm424, 0, %v423
        %vm428 = vcmask 31744
        %v430 = vsel %vm428, %v411, 0
        %vm432 = vcmask 1041408
        %v434 = vsel %vm432, %v409, 0
        %436 = vmatprep.subr.bf16.mxu0 0
        %437 = vmatpush1.bf16.msra.mxu0 0
        %438 = vmatprep.subr.bf16.mxu0 0
        %439 = vmatpush1.bf16.msra.mxu0 0
        %440 = vmatprep.subr.bf16.mxu0 0
        %441 = vmatpush1.bf16.msra.mxu0 0
        %442 = vmatprep.subr.bf16.mxu0 0
        %443 = vmatpush1.bf16.msra.mxu0 0
        %444 = vmatprep.subr.bf16.mxu0 0
        %445 = vmatpush1.bf16.msra.mxu0 0
        %446 = vmatprep.subr.bf16.mxu0 0
        %447 = vmatpush1.bf16.msra.mxu0 0
        %448 = vmatprep.subr.bf16.mxu0 0
        %449 = vmatpush1.bf16.msra.mxu0 0
        %450 = vmatprep.subr.bf16.mxu0 0
        %451 = vmatpush1.bf16.msra.mxu0 %v434
        %452 = vmatprep.subr.bf16.mxu0 0
        %453 = vmatpush2.bf16.msra.mxu0 0
        %454 = vmatprep.subr.bf16.mxu0 0
        %455 = vmatpush2.bf16.msra.mxu0 0
        %456 = vmatprep.subr.bf16.mxu0 0
        %457 = vmatpush2.bf16.msra.mxu0 0
        %458 = vmatprep.subr.bf16.mxu0 0
        %459 = vmatpush2.bf16.msra.mxu0 0
        %460 = vmatprep.subr.bf16.mxu0 0
        %461 = vmatpush2.bf16.msra.mxu0 0
        %462 = vmatprep.subr.bf16.mxu0 0
        %463 = vmatpush2.bf16.msra.mxu0 0
        %464 = vmatprep.subr.bf16.mxu0 0
        %465 = vmatpush2.bf16.msra.mxu0 0
        %466 = vmatprep.subr.bf16.mxu0 0
        %467 = vmatpush2.bf16.msra.mxu0 0
        %468 = vmatprep.mubr.bf16.mxu0 0
        %469 = vmatmul.mubr.bf16.gmra.mxu0 %v430
        %v470 = vpop.f32.mrf.mxu0
        %v471 = vadd.f32 0.0, %v470
        %v472 = vpop.f32.mrf.mxu0
        %v473 = vpop.f32.mrf.mxu0
        %v474 = vpop.f32.mrf.mxu0
        %475 = vdwg.mxu0
        %v477 = vsel %vm428, %v410, 0
        %v479 = vsel %vm432, %v427, 0
        %481 = vmatprep.subr.bf16.mxu0 0
        %482 = vmatpush1.bf16.msra.mxu0 0
        %483 = vmatprep.subr.bf16.mxu0 0
        %484 = vmatpush1.bf16.msra.mxu0 0
        %485 = vmatprep.subr.bf16.mxu0 0
        %486 = vmatpush1.bf16.msra.mxu0 0
        %487 = vmatprep.subr.bf16.mxu0 0
        %488 = vmatpush1.bf16.msra.mxu0 0
        %489 = vmatprep.subr.bf16.mxu0 0
        %490 = vmatpush1.bf16.msra.mxu0 0
        %491 = vmatprep.subr.bf16.mxu0 0
        %492 = vmatpush1.bf16.msra.mxu0 0
        %493 = vmatprep.subr.bf16.mxu0 0
        %494 = vmatpush1.bf16.msra.mxu0 0
        %495 = vmatprep.subr.bf16.mxu0 0
        %496 = vmatpush1.bf16.msra.mxu0 %v479
        %497 = vmatprep.subr.bf16.mxu0 0
        %498 = vmatpush2.bf16.msra.mxu0 0
        %499 = vmatprep.subr.bf16.mxu0 0
        %500 = vmatpush2.bf16.msra.mxu0 0
        %501 = vmatprep.subr.bf16.mxu0 0
        %502 = vmatpush2.bf16.msra.mxu0 0
        %503 = vmatprep.subr.bf16.mxu0 0
        %504 = vmatpush2.bf16.msra.mxu0 0
        %505 = vmatprep.subr.bf16.mxu0 0
        %506 = vmatpush2.bf16.msra.mxu0 0
        %507 = vmatprep.subr.bf16.mxu0 0
        %508 = vmatpush2.bf16.msra.mxu0 0
        %509 = vmatprep.subr.bf16.mxu0 0
        %510 = vmatpush2.bf16.msra.mxu0 0
        %511 = vmatprep.subr.bf16.mxu0 0
        %512 = vmatpush2.bf16.msra.mxu0 0
        %513 = vmatprep.mubr.bf16.mxu0 0
        %514 = vmatmul.mubr.bf16.gmra.mxu0 %v477
        %v515 = vpop.f32.mrf.mxu0
        %v516 = vadd.f32 %v471, %v515
        %v517 = vpop.f32.mrf.mxu0
        %v518 = vpop.f32.mrf.mxu0
        %v519 = vpop.f32.mrf.mxu0
        %520 = vdwg.mxu0
        %521 = vrot.lane.b32.xlu0 %v421, 127
        %v522 = vpop.permute.xlu0 %521
        %vm523 = vcmask 56320
        %v525 = vsel %vm523, %v522, 0
        %v527 = vsel %vm428, %v412, 0
        %v529 = vsel %vm432, %v525, 0
        %531 = vmatprep.subr.bf16.mxu0 0
        %532 = vmatpush1.bf16.msra.mxu0 0
        %533 = vmatprep.subr.bf16.mxu0 0
        %534 = vmatpush1.bf16.msra.mxu0 0
        %535 = vmatprep.subr.bf16.mxu0 0
        %536 = vmatpush1.bf16.msra.mxu0 0
        %537 = vmatprep.subr.bf16.mxu0 0
        %538 = vmatpush1.bf16.msra.mxu0 0
        %539 = vmatprep.subr.bf16.mxu0 0
        %540 = vmatpush1.bf16.msra.mxu0 0
        %541 = vmatprep.subr.bf16.mxu0 0
        %542 = vmatpush1.bf16.msra.mxu0 0
        %543 = vmatprep.subr.bf16.mxu0 0
        %544 = vmatpush1.bf16.msra.mxu0 0
        %545 = vmatprep.subr.bf16.mxu0 0
        %546 = vmatpush1.bf16.msra.mxu0 %v529
        %547 = vmatprep.subr.bf16.mxu0 0
        %548 = vmatpush2.bf16.msra.mxu0 0
        %549 = vmatprep.subr.bf16.mxu0 0
        %550 = vmatpush2.bf16.msra.mxu0 0
        %551 = vmatprep.subr.bf16.mxu0 0
        %552 = vmatpush2.bf16.msra.mxu0 0
        %553 = vmatprep.subr.bf16.mxu0 0
        %554 = vmatpush2.bf16.msra.mxu0 0
        %555 = vmatprep.subr.bf16.mxu0 0
        %556 = vmatpush2.bf16.msra.mxu0 0
        %557 = vmatprep.subr.bf16.mxu0 0
        %558 = vmatpush2.bf16.msra.mxu0 0
        %559 = vmatprep.subr.bf16.mxu0 0
        %560 = vmatpush2.bf16.msra.mxu0 0
        %561 = vmatprep.subr.bf16.mxu0 0
        %562 = vmatpush2.bf16.msra.mxu0 0
        %563 = vmatprep.mubr.bf16.mxu0 0
        %564 = vmatmul.mubr.bf16.gmra.mxu0 %v527
        %v565 = vpop.f32.mrf.mxu0
        %v566 = vadd.f32 0.0, %v565
        %v567 = vpop.f32.mrf.mxu0
        %v568 = vpop.f32.mrf.mxu0
        %v569 = vpop.f32.mrf.mxu0
        %570 = vdwg.mxu0
        %v571 = vadd.f32 %v516, %v566
        %573 = vset.pattern.permute.xlu0 0
        %574 = vperm.xlu0 %573, %v413
        %v575 = vpop.permute.xlu0 %574
        %v577 = vadd.f32 %v571, %v575
        %v578 = vmax.f32 %v577, 0.0
        %v579 = vpack.c.bf16 %v578, %v578
        %v580 = vld [vmem:[%s3] sm:$0x7]
        %v581 = vld [vmem:[%s3 + $0x4] sm:$0x7]
        %v582 = vld [vmem:[%s3 + $0x8] sm:$0x7]
        %v583 = vld [vmem:[%s4] sm:$0x3f]
        %585 = vrot.lane.b32.xlu0 %v579, 1
        %v586 = vpop.permute.xlu0 %585
        %v588 = vsel %vm424, 0, %v586
        %vm589 = vcmask 48128
        %v591 = vsel %vm589, %v581, 0
        %vm593 = vcmask 1042432
        %v595 = vsel %vm593, %v579, 0
        %597 = vmatprep.subr.bf16.mxu0 0
        %598 = vmatpush1.bf16.msra.mxu0 0
        %599 = vmatprep.subr.bf16.mxu0 0
        %600 = vmatpush1.bf16.msra.mxu0 0
        %601 = vmatprep.subr.bf16.mxu0 0
        %602 = vmatpush1.bf16.msra.mxu0 0
        %603 = vmatprep.subr.bf16.mxu0 0
        %604 = vmatpush1.bf16.msra.mxu0 0
        %605 = vmatprep.subr.bf16.mxu0 0
        %606 = vmatpush1.bf16.msra.mxu0 0
        %607 = vmatprep.subr.bf16.mxu0 0
        %608 = vmatpush1.bf16.msra.mxu0 0
        %609 = vmatprep.subr.bf16.mxu0 0
        %610 = vmatpush1.bf16.msra.mxu0 0
        %611 = vmatprep.subr.bf16.mxu0 0
        %612 = vmatpush1.bf16.msra.mxu0 %v595
        %613 = vmatprep.subr.bf16.mxu0 0
        %614 = vmatpush2.bf16.msra.mxu0 0
        %615 = vmatprep.subr.bf16.mxu0 0
        %616 = vmatpush2.bf16.msra.mxu0 0
        %617 = vmatprep.subr.bf16.mxu0 0
        %618 = vmatpush2.bf16.msra.mxu0 0
        %619 = vmatprep.subr.bf16.mxu0 0
        %620 = vmatpush2.bf16.msra.mxu0 0
        %621 = vmatprep.subr.bf16.mxu0 0
        %622 = vmatpush2.bf16.msra.mxu0 0
        %623 = vmatprep.subr.bf16.mxu0 0
        %624 = vmatpush2.bf16.msra.mxu0 0
        %625 = vmatprep.subr.bf16.mxu0 0
        %626 = vmatpush2.bf16.msra.mxu0 0
        %627 = vmatprep.subr.bf16.mxu0 0
        %628 = vmatpush2.bf16.msra.mxu0 0
        %629 = vmatprep.mubr.bf16.mxu0 0
        %630 = vmatmul.mubr.bf16.gmra.mxu0 %v591
        %v631 = vpop.f32.mrf.mxu0
        %v632 = vadd.f32 0.0, %v631
        %v633 = vpop.f32.mrf.mxu0
        %v634 = vpop.f32.mrf.mxu0
        %v635 = vpop.f32.mrf.mxu0
        %636 = vdwg.mxu0
        %v638 = vsel %vm589, %v580, 0
        %v640 = vsel %vm593, %v588, 0
        %642 = vmatprep.subr.bf16.mxu0 0
        %643 = vmatpush1.bf16.msra.mxu0 0
        %644 = vmatprep.subr.bf16.mxu0 0
        %645 = vmatpush1.bf16.msra.mxu0 0
        %646 = vmatprep.subr.bf16.mxu0 0
        %647 = vmatpush1.bf16.msra.mxu0 0
        %648 = vmatprep.subr.bf16.mxu0 0
        %649 = vmatpush1.bf16.msra.mxu0 0
        %650 = vmatprep.subr.bf16.mxu0 0
        %651 = vmatpush1.bf16.msra.mxu0 0
        %652 = vmatprep.subr.bf16.mxu0 0
        %653 = vmatpush1.bf16.msra.mxu0 0
        %654 = vmatprep.subr.bf16.mxu0 0
        %655 = vmatpush1.bf16.msra.mxu0 0
        %656 = vmatprep.subr.bf16.mxu0 0
        %657 = vmatpush1.bf16.msra.mxu0 %v640
        %658 = vmatprep.subr.bf16.mxu0 0
        %659 = vmatpush2.bf16.msra.mxu0 0
        %660 = vmatprep.subr.bf16.mxu0 0
        %661 = vmatpush2.bf16.msra.mxu0 0
        %662 = vmatprep.subr.bf16.mxu0 0
        %663 = vmatpush2.bf16.msra.mxu0 0
        %664 = vmatprep.subr.bf16.mxu0 0
        %665 = vmatpush2.bf16.msra.mxu0 0
        %666 = vmatprep.subr.bf16.mxu0 0
        %667 = vmatpush2.bf16.msra.mxu0 0
        %668 = vmatprep.subr.bf16.mxu0 0
        %669 = vmatpush2.bf16.msra.mxu0 0
        %670 = vmatprep.subr.bf16.mxu0 0
        %671 = vmatpush2.bf16.msra.mxu0 0
        %672 = vmatprep.subr.bf16.mxu0 0
        %673 = vmatpush2.bf16.msra.mxu0 0
        %674 = vmatprep.mubr.bf16.mxu0 0
        %675 = vmatmul.mubr.bf16.gmra.mxu0 %v638
        %v676 = vpop.f32.mrf.mxu0
        %v677 = vadd.f32 %v632, %v676
        %v678 = vpop.f32.mrf.mxu0
        %v679 = vpop.f32.mrf.mxu0
        %v680 = vpop.f32.mrf.mxu0
        %681 = vdwg.mxu0
        %682 = vrot.lane.b32.xlu0 %v579, 127
        %v683 = vpop.permute.xlu0 %682
        %v685 = vsel %vm523, %v683, 0
        %v687 = vsel %vm589, %v582, 0
        %v689 = vsel %vm593, %v685, 0
        %691 = vmatprep.subr.bf16.mxu0 0
        %692 = vmatpush1.bf16.msra.mxu0 0
        %693 = vmatprep.subr.bf16.mxu0 0
        %694 = vmatpush1.bf16.msra.mxu0 0
        %695 = vmatprep.subr.bf16.mxu0 0
        %696 = vmatpush1.bf16.msra.mxu0 0
        %697 = vmatprep.subr.bf16.mxu0 0
        %698 = vmatpush1.bf16.msra.mxu0 0
        %699 = vmatprep.subr.bf16.mxu0 0
        %700 = vmatpush1.bf16.msra.mxu0 0
        %701 = vmatprep.subr.bf16.mxu0 0
        %702 = vmatpush1.bf16.msra.mxu0 0
        %703 = vmatprep.subr.bf16.mxu0 0
        %704 = vmatpush1.bf16.msra.mxu0 0
        %705 = vmatprep.subr.bf16.mxu0 0
        %706 = vmatpush1.bf16.msra.mxu0 %v689
        %707 = vmatprep.subr.bf16.mxu0 0
        %708 = vmatpush2.bf16.msra.mxu0 0
        %709 = vmatprep.subr.bf16.mxu0 0
        %710 = vmatpush2.bf16.msra.mxu0 0
        %711 = vmatprep.subr.bf16.mxu0 0
        %712 = vmatpush2.bf16.msra.mxu0 0
        %713 = vmatprep.subr.bf16.mxu0 0
        %714 = vmatpush2.bf16.msra.mxu0 0
        %715 = vmatprep.subr.bf16.mxu0 0
        %716 = vmatpush2.bf16.msra.mxu0 0
        %717 = vmatprep.subr.bf16.mxu0 0
        %718 = vmatpush2.bf16.msra.mxu0 0
        %719 = vmatprep.subr.bf16.mxu0 0
        %720 = vmatpush2.bf16.msra.mxu0 0
        %721 = vmatprep.subr.bf16.mxu0 0
        %722 = vmatpush2.bf16.msra.mxu0 0
        %723 = vmatprep.mubr.bf16.mxu0 0
        %724 = vmatmul.mubr.bf16.gmra.mxu0 %v687
        %v725 = vpop.f32.mrf.mxu0
        %v726 = vadd.f32 0.0, %v725
        %v727 = vpop.f32.mrf.mxu0
        %v728 = vpop.f32.mrf.mxu0
        %v729 = vpop.f32.mrf.mxu0
        %730 = vdwg.mxu0
        %v731 = vadd.f32 %v677, %v726
        %733 = vset.pattern.permute.xlu0 0
        %734 = vperm.xlu0 %733, %v583
        %v735 = vpop.permute.xlu0 %734
        %v737 = vadd.f32 %v731, %v735
        %v738 = vmax.f32 %v737, 0.0
        %740 = vrot.lane.b32.xlu0 %v738, 1
        %v741 = vpop.permute.xlu0 %740
        %v743 = vsel %vm424, 0.0, %v741
        %v744 = vmax.f32 %v743, %v738
        %745 = vrot.lane.b32.xlu0 %v738, 127
        %v746 = vpop.permute.xlu0 %745
        %v748 = vsel %vm523, %v746, 0.0
        %v749 = vmax.f32 %v744, %v748
        %v750 = vlaneseq
        %v751 = vshrl.u32 %v750, 7
        %v752 = vlaneseq
        %v753 = vand.u32 %v752, 127
        %v754 = vmul.u32 %v753, 2
        %vm755 = vcmp.eq.s32.totalorder %v751, %v754
        %v756 = vsel %vm755, 1.0, 0.0
        %v757 = vpack.c.bf16 %v756, %v756
        %v758 = vpack.c.bf16 %v749, %v749
        %vm759 = vcmask 64512
        %v761 = vsel %vm759, %v758, 0
        %vm763 = vcmask 1043456
        %v765 = vsel %vm763, %v757, 0
        %767 = vmatprep.subr.bf16.mxu0 0
        %768 = vmatpush1.bf16.msra.mxu0 0
        %769 = vmatprep.subr.bf16.mxu0 0
        %770 = vmatpush1.bf16.msra.mxu0 0
        %771 = vmatprep.subr.bf16.mxu0 0
        %772 = vmatpush1.bf16.msra.mxu0 0
        %773 = vmatprep.subr.bf16.mxu0 0
        %774 = vmatpush1.bf16.msra.mxu0 0
        %775 = vmatprep.subr.bf16.mxu0 0
        %776 = vmatpush1.bf16.msra.mxu0 0
        %777 = vmatprep.subr.bf16.mxu0 0
        %778 = vmatpush1.bf16.msra.mxu0 0
        %779 = vmatprep.subr.bf16.mxu0 0
        %780 = vmatpush1.bf16.msra.mxu0 0
        %781 = vmatprep.subr.bf16.mxu0 0
        %782 = vmatpush1.bf16.msra.mxu0 %v765
        %783 = vmatprep.subr.bf16.mxu0 0
        %784 = vmatpush2.bf16.msra.mxu0 0
        %785 = vmatprep.subr.bf16.mxu0 0
        %786 = vmatpush2.bf16.msra.mxu0 0
        %787 = vmatprep.subr.bf16.mxu0 0
        %788 = vmatpush2.bf16.msra.mxu0 0
        %789 = vmatprep.subr.bf16.mxu0 0
        %790 = vmatpush2.bf16.msra.mxu0 0
        %791 = vmatprep.subr.bf16.mxu0 0
        %792 = vmatpush2.bf16.msra.mxu0 0
        %793 = vmatprep.subr.bf16.mxu0 0
        %794 = vmatpush2.bf16.msra.mxu0 0
        %795 = vmatprep.subr.bf16.mxu0 0
        %796 = vmatpush2.bf16.msra.mxu0 0
        %797 = vmatprep.subr.bf16.mxu0 0
        %798 = vmatpush2.bf16.msra.mxu0 0
        %799 = vmatprep.mubr.bf16.mxu0 0
        %800 = vmatmul.mubr.bf16.gmra.mxu0 %v761
        %v801 = vpop.f32.mrf.mxu0
        %v802 = vadd.f32 0.0, %v801
        %v803 = vpop.f32.mrf.mxu0
        %v804 = vpop.f32.mrf.mxu0
        %v805 = vpop.f32.mrf.mxu0
        %806 = vdwg.mxu0
        %v807 = vpack.c.bf16 %v802, %v802
        %v808 = vld [vmem:[%s5] sm:$0x3]
        %v809 = vld [vmem:[%s5 + $0x2] sm:$0x3]
        %v810 = vld [vmem:[%s5 + $0x4] sm:$0x3]
        %v811 = vld [vmem:[#allocation2] sm:$0x7]
        %813 = vrot.lane.b32.xlu0 %v807, 1
        %v814 = vpop.permute.xlu0 %813
        %v816 = vsel %vm424, 0, %v814
        %vm817 = vcmask 23552
        %v819 = vsel %vm817, %v809, 0
        %vm821 = vcmask 1040384
        %v822 = vsel %vm821, 4294967295, 65535
        %v823 = vsel %vm432, %v822, 0
        %v825 = vand.u32 %v807, %v823
        %827 = vmatprep.subr.bf16.mxu0 0
        %828 = vmatpush1.bf16.msra.mxu0 0
        %829 = vmatprep.subr.bf16.mxu0 0
        %830 = vmatpush1.bf16.msra.mxu0 0
        %831 = vmatprep.subr.bf16.mxu0 0
        %832 = vmatpush1.bf16.msra.mxu0 0
        %833 = vmatprep.subr.bf16.mxu0 0
        %834 = vmatpush1.bf16.msra.mxu0 0
        %835 = vmatprep.subr.bf16.mxu0 0
        %836 = vmatpush1.bf16.msra.mxu0 0
        %837 = vmatprep.subr.bf16.mxu0 0
        %838 = vmatpush1.bf16.msra.mxu0 0
        %839 = vmatprep.subr.bf16.mxu0 0
        %840 = vmatpush1.bf16.msra.mxu0 0
        %841 = vmatprep.subr.bf16.mxu0 0
        %842 = vmatpush1.bf16.msra.mxu0 %v825
        %843 = vmatprep.subr.bf16.mxu0 0
        %844 = vmatpush2.bf16.msra.mxu0 0
        %845 = vmatprep.subr.bf16.mxu0 0
        %846 = vmatpush2.bf16.msra.mxu0 0
        %847 = vmatprep.subr.bf16.mxu0 0
        %848 = vmatpush2.bf16.msra.mxu0 0
        %849 = vmatprep.subr.bf16.mxu0 0
        %850 = vmatpush2.bf16.msra.mxu0 0
        %851 = vmatprep.subr.bf16.mxu0 0
        %852 = vmatpush2.bf16.msra.mxu0 0
        %853 = vmatprep.subr.bf16.mxu0 0
        %854 = vmatpush2.bf16.msra.mxu0 0
        %855 = vmatprep.subr.bf16.mxu0 0
        %856 = vmatpush2.bf16.msra.mxu0 0
        %857 = vmatprep.subr.bf16.mxu0 0
        %858 = vmatpush2.bf16.msra.mxu0 0
        %859 = vmatprep.mubr.bf16.mxu0 0
        %860 = vmatmul.mubr.bf16.gmra.mxu0 %v819
        %v861 = vpop.f32.mrf.mxu0
        %v862 = vadd.f32 0.0, %v861
        %v863 = vpop.f32.mrf.mxu0
        %v864 = vpop.f32.mrf.mxu0
        %v865 = vpop.f32.mrf.mxu0
        %866 = vdwg.mxu0
        %v868 = vsel %vm817, %v808, 0
        %v870 = vand.u32 %v816, %v823
        %872 = vmatprep.subr.bf16.mxu0 0
        %873 = vmatpush1.bf16.msra.mxu0 0
        %874 = vmatprep.subr.bf16.mxu0 0
        %875 = vmatpush1.bf16.msra.mxu0 0
        %876 = vmatprep.subr.bf16.mxu0 0
        %877 = vmatpush1.bf16.msra.mxu0 0
        %878 = vmatprep.subr.bf16.mxu0 0
        %879 = vmatpush1.bf16.msra.mxu0 0
        %880 = vmatprep.subr.bf16.mxu0 0
        %881 = vmatpush1.bf16.msra.mxu0 0
        %882 = vmatprep.subr.bf16.mxu0 0
        %883 = vmatpush1.bf16.msra.mxu0 0
        %884 = vmatprep.subr.bf16.mxu0 0
        %885 = vmatpush1.bf16.msra.mxu0 0
        %886 = vmatprep.subr.bf16.mxu0 0
        %887 = vmatpush1.bf16.msra.mxu0 %v870
        %888 = vmatprep.subr.bf16.mxu0 0
        %889 = vmatpush2.bf16.msra.mxu0 0
        %890 = vmatprep.subr.bf16.mxu0 0
        %891 = vmatpush2.bf16.msra.mxu0 0
        %892 = vmatprep.subr.bf16.mxu0 0
        %893 = vmatpush2.bf16.msra.mxu0 0
        %894 = vmatprep.subr.bf16.mxu0 0
        %895 = vmatpush2.bf16.msra.mxu0 0
        %896 = vmatprep.subr.bf16.mxu0 0
        %897 = vmatpush2.bf16.msra.mxu0 0
        %898 = vmatprep.subr.bf16.mxu0 0
        %899 = vmatpush2.bf16.msra.mxu0 0
        %900 = vmatprep.subr.bf16.mxu0 0
        %901 = vmatpush2.bf16.msra.mxu0 0
        %902 = vmatprep.subr.bf16.mxu0 0
        %903 = vmatpush2.bf16.msra.mxu0 0
        %904 = vmatprep.mubr.bf16.mxu0 0
        %905 = vmatmul.mubr.bf16.gmra.mxu0 %v868
        %v906 = vpop.f32.mrf.mxu0
        %v907 = vadd.f32 %v862, %v906
        %v908 = vpop.f32.mrf.mxu0
        %v909 = vpop.f32.mrf.mxu0
        %v910 = vpop.f32.mrf.mxu0
        %911 = vdwg.mxu0
        %912 = vrot.lane.b32.xlu0 %v807, 127
        %v913 = vpop.permute.xlu0 %912
        %v915 = vsel %vm817, %v913, 0
        %v917 = vsel %vm817, %v810, 0
        %v919 = vand.u32 %v915, %v823
        %921 = vmatprep.subr.bf16.mxu0 0
        %922 = vmatpush1.bf16.msra.mxu0 0
        %923 = vmatprep.subr.bf16.mxu0 0
        %924 = vmatpush1.bf16.msra.mxu0 0
        %925 = vmatprep.subr.bf16.mxu0 0
        %926 = vmatpush1.bf16.msra.mxu0 0
        %927 = vmatprep.subr.bf16.mxu0 0
        %928 = vmatpush1.bf16.msra.mxu0 0
        %929 = vmatprep.subr.bf16.mxu0 0
        %930 = vmatpush1.bf16.msra.mxu0 0
        %931 = vmatprep.subr.bf16.mxu0 0
        %932 = vmatpush1.bf16.msra.mxu0 0
        %933 = vmatprep.subr.bf16.mxu0 0
        %934 = vmatpush1.bf16.msra.mxu0 0
        %935 = vmatprep.subr.bf16.mxu0 0
        %936 = vmatpush1.bf16.msra.mxu0 %v919
        %937 = vmatprep.subr.bf16.mxu0 0
        %938 = vmatpush2.bf16.msra.mxu0 0
        %939 = vmatprep.subr.bf16.mxu0 0
        %940 = vmatpush2.bf16.msra.mxu0 0
        %941 = vmatprep.subr.bf16.mxu0 0
        %942 = vmatpush2.bf16.msra.mxu0 0
        %943 = vmatprep.subr.bf16.mxu0 0
        %944 = vmatpush2.bf16.msra.mxu0 0
        %945 = vmatprep.subr.bf16.mxu0 0
        %946 = vmatpush2.bf16.msra.mxu0 0
        %947 = vmatprep.subr.bf16.mxu0 0
        %948 = vmatpush2.bf16.msra.mxu0 0
        %949 = vmatprep.subr.bf16.mxu0 0
        %950 = vmatpush2.bf16.msra.mxu0 0
        %951 = vmatprep.subr.bf16.mxu0 0
        %952 = vmatpush2.bf16.msra.mxu0 0
        %953 = vmatprep.mubr.bf16.mxu0 0
        %954 = vmatmul.mubr.bf16.gmra.mxu0 %v917
        %v955 = vpop.f32.mrf.mxu0
        %v956 = vadd.f32 0.0, %v955
        %v957 = vpop.f32.mrf.mxu0
        %v958 = vpop.f32.mrf.mxu0
        %v959 = vpop.f32.mrf.mxu0
        %960 = vdwg.mxu0
        %v961 = vadd.f32 %v907, %v956
        %963 = vset.pattern.permute.xlu0 0
        %964 = vperm.xlu0 %963, %v811
        %v965 = vpop.permute.xlu0 %964
        %v967 = vadd.f32 %v961, %v965
        %v968 = vmax.f32 %v967, 0.0
        %v969 = vld [vmem:[#allocation4] sm:$0x3]
        %v970 = vpack.c.bf16 %v968, %v968
        %v971 = vld [vmem:[%s8] sm:$0x7]
        %973 = vset.pattern.permute.xlu0 0
        %974 = vperm.xlu0 %973, %v971
        %v975 = vpop.permute.xlu0 %974
        %v978 = vsel %vm817, %v969, 0
        %v981 = vand.u32 %v970, %v823
        %983 = vmatprep.subr.bf16.mxu0 0
        %984 = vmatpush1.bf16.msra.mxu0 0
        %985 = vmatprep.subr.bf16.mxu0 0
        %986 = vmatpush1.bf16.msra.mxu0 0
        %987 = vmatprep.subr.bf16.mxu0 0
        %988 = vmatpush1.bf16.msra.mxu0 0
        %989 = vmatprep.subr.bf16.mxu0 0
        %990 = vmatpush1.bf16.msra.mxu0 0
        %991 = vmatprep.subr.bf16.mxu0 0
        %992 = vmatpush1.bf16.msra.mxu0 0
        %993 = vmatprep.subr.bf16.mxu0 0
        %994 = vmatpush1.bf16.msra.mxu0 0
        %995 = vmatprep.subr.bf16.mxu0 0
        %996 = vmatpush1.bf16.msra.mxu0 0
        %997 = vmatprep.subr.bf16.mxu0 0
        %998 = vmatpush1.bf16.msra.mxu0 %v981
        %999 = vmatprep.subr.bf16.mxu0 0
        %1000 = vmatpush2.bf16.msra.mxu0 0
        %1001 = vmatprep.subr.bf16.mxu0 0
        %1002 = vmatpush2.bf16.msra.mxu0 0
        %1003 = vmatprep.subr.bf16.mxu0 0
        %1004 = vmatpush2.bf16.msra.mxu0 0
        %1005 = vmatprep.subr.bf16.mxu0 0
        %1006 = vmatpush2.bf16.msra.mxu0 0
        %1007 = vmatprep.subr.bf16.mxu0 0
        %1008 = vmatpush2.bf16.msra.mxu0 0
        %1009 = vmatprep.subr.bf16.mxu0 0
        %1010 = vmatpush2.bf16.msra.mxu0 0
        %1011 = vmatprep.subr.bf16.mxu0 0
        %1012 = vmatpush2.bf16.msra.mxu0 0
        %1013 = vmatprep.subr.bf16.mxu0 0
        %1014 = vmatpush2.bf16.msra.mxu0 0
        %1015 = vmatprep.mubr.bf16.mxu0 0
        %1016 = vmatmul.mubr.bf16.gmra.mxu0 %v978
        %v1017 = vpop.f32.mrf.mxu0
        %v1018 = vadd.f32 %v975, %v1017
        %v1019 = vpop.f32.mrf.mxu0
        %v1020 = vpop.f32.mrf.mxu0
        %v1021 = vpop.f32.mrf.mxu0
        %1022 = vdwg.mxu0
        %v1023 = vmax.f32 %v1018, 0.0
        %v1024 = vpack.c.bf16 %v1023, %v1023
        %v1025 = vld [vmem:[%s9] sm:$0x7]
        %v1026 = vld [vmem:[%s9 + $0x4] sm:$0x7]
        %v1027 = vld [vmem:[%s9 + $0x8] sm:$0x7]
        %v1028 = vld [vmem:[%s10] sm:$0x3f]
        %1030 = vrot.lane.b32.xlu0 %v1024, 1
        %v1031 = vpop.permute.xlu0 %1030
        %v1033 = vsel %vm424, 0, %v1031
        %v1035 = vsel %vm817, %v1026, 0
        %v1038 = vand.u32 %v1024, %v823
        %1040 = vmatprep.subr.bf16.mxu0 0
        %1041 = vmatpush1.bf16.msra.mxu0 0
        %1042 = vmatprep.subr.bf16.mxu0 0
        %1043 = vmatpush1.bf16.msra.mxu0 0
        %1044 = vmatprep.subr.bf16.mxu0 0
        %1045 = vmatpush1.bf16.msra.mxu0 0
        %1046 = vmatprep.subr.bf16.mxu0 0
        %1047 = vmatpush1.bf16.msra.mxu0 0
        %1048 = vmatprep.subr.bf16.mxu0 0
        %1049 = vmatpush1.bf16.msra.mxu0 0
        %1050 = vmatprep.subr.bf16.mxu0 0
        %1051 = vmatpush1.bf16.msra.mxu0 0
        %1052 = vmatprep.subr.bf16.mxu0 0
        %1053 = vmatpush1.bf16.msra.mxu0 0
        %1054 = vmatprep.subr.bf16.mxu0 0
        %1055 = vmatpush1.bf16.msra.mxu0 %v1038
        %1056 = vmatprep.subr.bf16.mxu0 0
        %1057 = vmatpush2.bf16.msra.mxu0 0
        %1058 = vmatprep.subr.bf16.mxu0 0
        %1059 = vmatpush2.bf16.msra.mxu0 0
        %1060 = vmatprep.subr.bf16.mxu0 0
        %1061 = vmatpush2.bf16.msra.mxu0 0
        %1062 = vmatprep.subr.bf16.mxu0 0
        %1063 = vmatpush2.bf16.msra.mxu0 0
        %1064 = vmatprep.subr.bf16.mxu0 0
        %1065 = vmatpush2.bf16.msra.mxu0 0
        %1066 = vmatprep.subr.bf16.mxu0 0
        %1067 = vmatpush2.bf16.msra.mxu0 0
        %1068 = vmatprep.subr.bf16.mxu0 0
        %1069 = vmatpush2.bf16.msra.mxu0 0
        %1070 = vmatprep.subr.bf16.mxu0 0
        %1071 = vmatpush2.bf16.msra.mxu0 0
        %1072 = vmatprep.mubr.bf16.mxu0 0
        %1073 = vmatmul.mubr.bf16.gmra.mxu0 %v1035
        %v1074 = vpop.f32.mrf.mxu0
        %v1075 = vadd.f32 0.0, %v1074
        %v1076 = vpop.f32.mrf.mxu0
        %v1077 = vpop.f32.mrf.mxu0
        %v1078 = vpop.f32.mrf.mxu0
        %1079 = vdwg.mxu0
        %v1081 = vsel %vm817, %v1025, 0
        %v1083 = vand.u32 %v1033, %v823
        %1085 = vmatprep.subr.bf16.mxu0 0
        %1086 = vmatpush1.bf16.msra.mxu0 0
        %1087 = vmatprep.subr.bf16.mxu0 0
        %1088 = vmatpush1.bf16.msra.mxu0 0
        %1089 = vmatprep.subr.bf16.mxu0 0
        %1090 = vmatpush1.bf16.msra.mxu0 0
        %1091 = vmatprep.subr.bf16.mxu0 0
        %1092 = vmatpush1.bf16.msra.mxu0 0
        %1093 = vmatprep.subr.bf16.mxu0 0
        %1094 = vmatpush1.bf16.msra.mxu0 0
        %1095 = vmatprep.subr.bf16.mxu0 0
        %1096 = vmatpush1.bf16.msra.mxu0 0
        %1097 = vmatprep.subr.bf16.mxu0 0
        %1098 = vmatpush1.bf16.msra.mxu0 0
        %1099 = vmatprep.subr.bf16.mxu0 0
        %1100 = vmatpush1.bf16.msra.mxu0 %v1083
        %1101 = vmatprep.subr.bf16.mxu0 0
        %1102 = vmatpush2.bf16.msra.mxu0 0
        %1103 = vmatprep.subr.bf16.mxu0 0
        %1104 = vmatpush2.bf16.msra.mxu0 0
        %1105 = vmatprep.subr.bf16.mxu0 0
        %1106 = vmatpush2.bf16.msra.mxu0 0
        %1107 = vmatprep.subr.bf16.mxu0 0
        %1108 = vmatpush2.bf16.msra.mxu0 0
        %1109 = vmatprep.subr.bf16.mxu0 0
        %1110 = vmatpush2.bf16.msra.mxu0 0
        %1111 = vmatprep.subr.bf16.mxu0 0
        %1112 = vmatpush2.bf16.msra.mxu0 0
        %1113 = vmatprep.subr.bf16.mxu0 0
        %1114 = vmatpush2.bf16.msra.mxu0 0
        %1115 = vmatprep.subr.bf16.mxu0 0
        %1116 = vmatpush2.bf16.msra.mxu0 0
        %1117 = vmatprep.mubr.bf16.mxu0 0
        %1118 = vmatmul.mubr.bf16.gmra.mxu0 %v1081
        %v1119 = vpop.f32.mrf.mxu0
        %v1120 = vadd.f32 %v1075, %v1119
        %v1121 = vpop.f32.mrf.mxu0
        %v1122 = vpop.f32.mrf.mxu0
        %v1123 = vpop.f32.mrf.mxu0
        %1124 = vdwg.mxu0
        %1125 = vrot.lane.b32.xlu0 %v1024, 127
        %v1126 = vpop.permute.xlu0 %1125
        %v1128 = vsel %vm817, %v1126, 0
        %v1130 = vsel %vm817, %v1027, 0
        %v1132 = vand.u32 %v1128, %v823
        %1134 = vmatprep.subr.bf16.mxu0 0
        %1135 = vmatpush1.bf16.msra.mxu0 0
        %1136 = vmatprep.subr.bf16.mxu0 0
        %1137 = vmatpush1.bf16.msra.mxu0 0
        %1138 = vmatprep.subr.bf16.mxu0 0
        %1139 = vmatpush1.bf16.msra.mxu0 0
        %1140 = vmatprep.subr.bf16.mxu0 0
        %1141 = vmatpush1.bf16.msra.mxu0 0
        %1142 = vmatprep.subr.bf16.mxu0 0
        %1143 = vmatpush1.bf16.msra.mxu0 0
        %1144 = vmatprep.subr.bf16.mxu0 0
        %1145 = vmatpush1.bf16.msra.mxu0 0
        %1146 = vmatprep.subr.bf16.mxu0 0
        %1147 = vmatpush1.bf16.msra.mxu0 0
        %1148 = vmatprep.subr.bf16.mxu0 0
        %1149 = vmatpush1.bf16.msra.mxu0 %v1132
        %1150 = vmatprep.subr.bf16.mxu0 0
        %1151 = vmatpush2.bf16.msra.mxu0 0
        %1152 = vmatprep.subr.bf16.mxu0 0
        %1153 = vmatpush2.bf16.msra.mxu0 0
        %1154 = vmatprep.subr.bf16.mxu0 0
        %1155 = vmatpush2.bf16.msra.mxu0 0
        %1156 = vmatprep.subr.bf16.mxu0 0
        %1157 = vmatpush2.bf16.msra.mxu0 0
        %1158 = vmatprep.subr.bf16.mxu0 0
        %1159 = vmatpush2.bf16.msra.mxu0 0
        %1160 = vmatprep.subr.bf16.mxu0 0
        %1161 = vmatpush2.bf16.msra.mxu0 0
        %1162 = vmatprep.subr.bf16.mxu0 0
        %1163 = vmatpush2.bf16.msra.mxu0 0
        %1164 = vmatprep.subr.bf16.mxu0 0
        %1165 = vmatpush2.bf16.msra.mxu0 0
        %1166 = vmatprep.mubr.bf16.mxu0 0
        %1167 = vmatmul.mubr.bf16.gmra.mxu0 %v1130
        %v1168 = vpop.f32.mrf.mxu0
        %v1169 = vadd.f32 0.0, %v1168
        %v1170 = vpop.f32.mrf.mxu0
        %v1171 = vpop.f32.mrf.mxu0
        %v1172 = vpop.f32.mrf.mxu0
        %1173 = vdwg.mxu0
        %v1174 = vadd.f32 %v1120, %v1169
        %1176 = vset.pattern.permute.xlu0 0
        %1177 = vperm.xlu0 %1176, %v1028
        %v1178 = vpop.permute.xlu0 %1177
        %v1180 = vadd.f32 %v1174, %v1178
        %v1181 = vadd.f32 %v1180, 2.0
        %v1182 = vxor.u32 %v1181, 2147483648
        %v1183 = vmul.f32 %v1182, 1.442695
        %v1184 = vpow.pop %v1183
        %v1185 = vadd.f32 %v1184, 1.0
        %v1186 = vrcp.pop %v1185
        %v1187 = vmul.f32 1.0, %v1186
        %v1188 = vadd.f32 %v802, %v1180
        %v1190 = vrot.slane %v1187, 5
        %v1192 = vmul.f32 %v1188, %v1190
        %v1193 = vsel %vm593, %v802, %v1192
        %v1194 = vpack.c.bf16 %v1193, %v1193
        %vm1195 = vcmask 26624
        %1196 = vst.msk [vmem:[%s407] sm:$0x7] %vm1195, %v1194
        %p1197 = scmp.lt.s32.totalorder %s24, 1
        %s1198 = scalar_select %p1197, %s24, 1
        %s1199 = smul.addr %s1198, 4
        %s1200 = scalar_lea.vmem %s11, %s1199
        // Predicated region
        $region73: #{glow_network.6} parent=63 // pred_check
          %p1201 = pneg %p278
        $region74: #{glow_network.6} parent=63 // pred_check_branch
          %1203 = sbr.rel (%p1201) target = $region76
        $region75: #{glow_network.6} parent=63 // pred_region
          _
        $region76: #{glow_network.6} parent=63 // pred_fallthru
          _
      $region64: #{glow_network.6} parent=5 // pred_fallthru
        _
      %p1204 = scmp.le.s32.totalorder 2, %s19
      // Predicated region
      $region77: #{glow_network.6} parent=5 // pred_check
        %p1205 = pneg %p1204
      $region78: #{glow_network.6} parent=5 // pred_check_branch
        %1207 = sbr.rel (%p1205) target = $region80
      $region79: #{glow_network.6} parent=5 // pred_region
        %s1208 = ssub.s32 %s19, 2
        // Predicated region
        $region81: #{glow_network.6} parent=79 // pred_check
          %p1209 = pneg %p284
        $region82: #{glow_network.6} parent=79 // pred_check_branch
          %1211 = sbr.rel (%p1209) target = $region84
        $region83: #{glow_network.6} parent=79 // pred_region
          %p1212 = scmp.lt.s32.totalorder %s25, 1
          %s1213 = scalar_select %p1212, %s25, 1
          %s1214 = smul.addr %s1213, 4
          %s1215 = scalar_lea.vmem %s11, %s1214
        $region84: #{glow_network.6} parent=79 // pred_fallthru
          _
      $region80: #{glow_network.6} parent=5 // pred_fallthru
        _
    $region6: #{glow_network.6} parent=1 // loop_footer
      %s23 = sadd.s32 1, %s19
    $region7: #{glow_network.6} parent=1 // loop_footer_branch
      %18 = sbr.rel target = $region3
    $region8: #{glow_network.6} parent=1 // loop_exit
      _
    %1216 = vsyncpa [#allocation3], 1
    %s1217 = scalar_lea.sflag [#allocation3], 1
    %1218 = vsyncpa %s1217, 1
    %1219 = vsyncpa [#allocation5], 1

// kernel: glow_network.9
$region0: #{glow_network.9}
  #allocation0 [shape = 'u32[]', space=smem, size = 0x4, offset = 0x4, fixed_abs, tag = 'smem constant byte address 0x4 - core index']
  #allocation1 [shape = 'u32[144,128]{1,0:T(1,128)}', space=vmem, size = 0x12000, scoped, tag = 'internal scratch']
  %s0 = inlined_call_operand.vmem [shape: bf16[3,2,3,16], index: 0, kind: input, shape index: {}]
  %s1 = inlined_call_operand.vmem [shape: bf16[3,3,1,3], index: 1, kind: input, shape index: {}]
  %s2 = inlined_call_operand.vmem [shape: f32[3,1,1], index: 2, kind: input, shape index: {}]
  %s3 = inlined_call_operand.vmem [shape: f32[3,2,1,16], index: 3, kind: output, shape index: {}]
  %s4 = sld [smem:[#allocation0]]
  $region45: #{glow_network.9} parent=0
    _
  %s6 = ssub.s32 1, %s4
  %s7 = scalar_select 0, %s6, %s4
  loop: start=0, step=1, limit=8
  $region2: #{glow_network.9} parent=0 // loop_pre_header
    _
  $region3: #{glow_network.9} parent=0 // loop_header
    %s9 = sphi 0, %s13
    %p10 = scmp.ge.s32.totalorder %s9, 8
    %s16 = sphi 0, %s28
    %s17 = sphi 0, %s24
    %s18 = sphi 0, %s16
    %s19 = sphi 0, %s17
    %s20 = sphi 0, %s18
    %s21 = sphi 0, %s19
    %s33 = sphi 0, %s35
    %s36 = sphi 0, %s33
    %s37 = sphi 0, %s36
    %s53 = sphi 0, %s37
    %s59 = sphi 0, %s61
    %s62 = sphi 0, %s59
    %s63 = sphi 0, %s62
    %s79 = sphi 0, %s63
    %s85 = sphi 0, %s87
    %s88 = sphi 0, %s85
    %s89 = sphi 0, %s88
    %s105 = sphi 0, %s89
    %s113 = sphi 0, %s115
    %s116 = sphi 0, %s113
    %s117 = sphi 0, %s116
    %s133 = sphi 0, %s117
  $region4: #{glow_network.9} parent=0 // loop_header_branch
    %12 = sbr.rel (%p10) target = $region8
  $region5: #{glow_network.9} parent=0 // loop_body
    %s14 = ssub.s32 %s9, 1
    %s15 = ssub.s32 %s9, 2
    %s22 = sadd.s32 1, %s17
    %p23 = scmp.ge.s32.totalorder %s22, 2
    %s24 = scalar_select %p23, 0, %s22
    %s25 = sadd.s32 1, %s16
    %s26 = scalar_select %p23, %s25, %s16
    %p27 = scmp.ge.s32.totalorder %s26, 3
    %s28 = scalar_select %p27, 0, %s26
    %s29 = ssub.s32 %s16, %s28
    %s30 = ssub.s32 %s17, %s24
    %s31 = sor.u32 %s29, %s30
    %p32 = scmp.eq.s32.totalorder %s31, 0
    %s34 = sadd.s32 %s33, 1
    %s35 = scalar_select %p32, %s33, %s34
    %p38 = pneg %p32
    %p39 = scmp.eq.s32.totalorder %s9, 5
    %p40 = por %p38, %p39
    %p41 = scmp.ne.s32.totalorder %s33, %s36
    %p42 = scmp.eq.s32.totalorder %s9, 0
    %p43 = por %p41, %p42
    %p44 = scmp.ne.s32.totalorder %s33, %s36
    %p45 = scmp.eq.s32.totalorder %s14, 5
    %p46 = por %p44, %p45
    %p47 = scmp.ne.s32.totalorder %s36, %s37
    %p48 = scmp.eq.s32.totalorder %s14, 0
    %p49 = por %p47, %p48
    %p50 = scmp.ne.s32.totalorder %s36, %s37
    %p51 = scmp.eq.s32.totalorder %s15, 5
    %p52 = por %p50, %p51
    %p54 = scmp.ne.s32.totalorder %s37, %s53
    %p55 = scmp.eq.s32.totalorder %s15, 0
    %p56 = por %p54, %p55
    %s57 = ssub.s32 %s16, %s28
    %p58 = scmp.eq.s32.totalorder %s57, 0
    %s60 = sadd.s32 %s59, 1
    %s61 = scalar_select %p58, %s59, %s60
    %p64 = pneg %p58
    %p65 = scmp.eq.s32.totalorder %s9, 5
    %p66 = por %p64, %p65
    %p67 = scmp.ne.s32.totalorder %s59, %s62
    %p68 = scmp.eq.s32.totalorder %s9, 0
    %p69 = por %p67, %p68
    %p70 = scmp.ne.s32.totalorder %s59, %s62
    %p71 = scmp.eq.s32.totalorder %s14, 5
    %p72 = por %p70, %p71
    %p73 = scmp.ne.s32.totalorder %s62, %s63
    %p74 = scmp.eq.s32.totalorder %s14, 0
    %p75 = por %p73, %p74
    %p76 = scmp.ne.s32.totalorder %s62, %s63
    %p77 = scmp.eq.s32.totalorder %s15, 5
    %p78 = por %p76, %p77
    %p80 = scmp.ne.s32.totalorder %s63, %s79
    %p81 = scmp.eq.s32.totalorder %s15, 0
    %p82 = por %p80, %p81
    %s83 = ssub.s32 %s16, %s28
    %p84 = scmp.eq.s32.totalorder %s83, 0
    %s86 = sadd.s32 %s85, 1
    %s87 = scalar_select %p84, %s85, %s86
    %p90 = pneg %p84
    %p91 = scmp.eq.s32.totalorder %s9, 5
    %p92 = por %p90, %p91
    %p93 = scmp.ne.s32.totalorder %s85, %s88
    %p94 = scmp.eq.s32.totalorder %s9, 0
    %p95 = por %p93, %p94
    %p96 = scmp.ne.s32.totalorder %s85, %s88
    %p97 = scmp.eq.s32.totalorder %s14, 5
    %p98 = por %p96, %p97
    %p99 = scmp.ne.s32.totalorder %s88, %s89
    %p100 = scmp.eq.s32.totalorder %s14, 0
    %p101 = por %p99, %p100
    %p102 = scmp.ne.s32.totalorder %s88, %s89
    %p103 = scmp.eq.s32.totalorder %s15, 5
    %p104 = por %p102, %p103
    %p106 = scmp.ne.s32.totalorder %s89, %s105
    %p107 = scmp.eq.s32.totalorder %s15, 0
    %p108 = por %p106, %p107
    %s109 = ssub.s32 %s16, %s28
    %s110 = ssub.s32 %s17, %s24
    %s111 = sor.u32 %s109, %s110
    %p112 = scmp.eq.s32.totalorder %s111, 0
    %s114 = sadd.s32 %s113, 1
    %s115 = scalar_select %p112, %s113, %s114
    %p118 = pneg %p112
    %p119 = scmp.eq.s32.totalorder %s9, 5
    %p120 = por %p118, %p119
    %p121 = scmp.ne.s32.totalorder %s113, %s116
    %p122 = scmp.eq.s32.totalorder %s9, 0
    %p123 = por %p121, %p122
    %p124 = scmp.ne.s32.totalorder %s113, %s116
    %p125 = scmp.eq.s32.totalorder %s14, 5
    %p126 = por %p124, %p125
    %p127 = scmp.ne.s32.totalorder %s116, %s117
    %p128 = scmp.eq.s32.totalorder %s14, 0
    %p129 = por %p127, %p128
    %p130 = scmp.ne.s32.totalorder %s116, %s117
    %p131 = scmp.eq.s32.totalorder %s15, 5
    %p132 = por %p130, %p131
    %p134 = scmp.ne.s32.totalorder %s117, %s133
    %p135 = scmp.eq.s32.totalorder %s15, 0
    %p136 = por %p134, %p135
    %p137 = scmp.le.s32.totalorder 1, %s9
    %p138 = scmp.lt.s32.totalorder %s9, 7
    %p139 = pnand %p137, %p138
    %p140 = pneg %p139
    // Predicated region
    $region9: #{glow_network.9} parent=5 // pred_check
      _
    $region10: #{glow_network.9} parent=5 // pred_check_branch
      %142 = sbr.rel (%p139) target = $region12
    $region11: #{glow_network.9} parent=5 // pred_region
      %s143 = ssub.s32 %s9, 1
    $region12: #{glow_network.9} parent=5 // pred_fallthru
      _
    %p144 = scmp.lt.s32.totalorder %s9, 6
    // Predicated region
    $region13: #{glow_network.9} parent=5 // pred_check
      %p145 = pneg %p144
    $region14: #{glow_network.9} parent=5 // pred_check_branch
      %147 = sbr.rel (%p145) target = $region16
    $region15: #{glow_network.9} parent=5 // pred_region
      // Predicated region
      $region17: #{glow_network.9} parent=15 // pred_check
        %p148 = pneg %p43
      $region18: #{glow_network.9} parent=15 // pred_check_branch
        %150 = sbr.rel (%p148) target = $region20
      $region19: #{glow_network.9} parent=15 // pred_region
        %p151 = scmp.lt.s32.totalorder %s16, 2
        %s152 = scalar_select %p151, %s16, 2
        %p153 = scmp.lt.s32.totalorder %s17, 1
        %s154 = scalar_select %p153, %s17, 1
        %s155 = smul.addr %s152, 2
        %s156 = sadd.s32 %s154, %s155
        %s157 = smul.addr %s156, 2
        %s158 = scalar_lea.vmem %s0, %s157
      $region20: #{glow_network.9} parent=15 // pred_fallthru
        _
      // Predicated region
      $region21: #{glow_network.9} parent=15 // pred_check
        %p159 = pneg %p69
      $region22: #{glow_network.9} parent=15 // pred_check_branch
        %161 = sbr.rel (%p159) target = $region24
      $region23: #{glow_network.9} parent=15 // pred_region
        %p162 = scmp.lt.s32.totalorder %s16, 2
        %s163 = scalar_select %p162, %s16, 2
        %s164 = smul.addr %s163, 3
        %s165 = scalar_lea.vmem %s1, %s164
      $region24: #{glow_network.9} parent=15 // pred_fallthru
        _
      // Predicated region
      $region25: #{glow_network.9} parent=15 // pred_check
        %p166 = pneg %p95
      $region26: #{glow_network.9} parent=15 // pred_check_branch
        %168 = sbr.rel (%p166) target = $region28
      $region27: #{glow_network.9} parent=15 // pred_region
        %p169 = scmp.lt.s32.totalorder %s16, 2
        %s170 = scalar_select %p169, %s16, 2
        %s171 = scalar_lea.vmem %s2, %s170
      $region28: #{glow_network.9} parent=15 // pred_fallthru
        _
    $region16: #{glow_network.9} parent=5 // pred_fallthru
      _
    %p172 = scmp.le.s32.totalorder 1, %s9
    %p173 = scmp.lt.s32.totalorder %s9, 7
    %p174 = pnand %p172, %p173
    %p175 = pneg %p174
    // Predicated region
    $region29: #{glow_network.9} parent=5 // pred_check
      _
    $region30: #{glow_network.9} parent=5 // pred_check_branch
      %177 = sbr.rel (%p174) target = $region32
    $region31: #{glow_network.9} parent=5 // pred_region
      %s178 = ssub.s32 %s9, 1
      %p179 = scmp.lt.s32.totalorder %s18, 2
      %s180 = scalar_select %p179, %s18, 2
      %p181 = scmp.lt.s32.totalorder %s19, 1
      %s182 = scalar_select %p181, %s19, 1
      %s183 = smul.addr %s180, 2
      %s184 = sadd.s32 %s182, %s183
      %s185 = smul.addr %s184, 2
      %s186 = scalar_lea.vmem %s0, %s185
      %p187 = pneg %p49
      %p188 = pneg %p46
      %p189 = scmp.lt.s32.totalorder %s18, 2
      %s190 = scalar_select %p189, %s18, 2
      %s191 = smul.addr %s190, 3
      %s192 = scalar_lea.vmem %s1, %s191
      %p193 = pneg %p75
      %p194 = pneg %p72
      %p195 = scmp.lt.s32.totalorder %s18, 2
      %s196 = scalar_select %p195, %s18, 2
      %s197 = scalar_lea.vmem %s2, %s196
      %p198 = pneg %p101
      %p199 = pneg %p98
      %p200 = pneg %p129
      %p201 = pneg %p126
      %p202 = scmp.lt.s32.totalorder %s18, 2
      %s203 = scalar_select %p202, %s18, 2
      %p204 = scmp.lt.s32.totalorder %s19, 1
      %s205 = scalar_select %p204, %s19, 1
      %s206 = smul.addr %s203, 2
      %s207 = sadd.s32 %s205, %s206
      %s208 = scalar_lea.vmem %s3, %s207
      %p209 = scmp.lt.s32.totalorder %s18, 2
      %s210 = scalar_select %p209, %s18, 2
      %p211 = scmp.lt.s32.totalorder %s19, 1
      %s212 = scalar_select %p211, %s19, 1
      %s213 = smul.addr %s210, 2
      %s214 = sadd.s32 %s212, %s213
      %s215 = smul.addr %s214, 2
      %s216 = scalar_lea.vmem %s0, %s215
      %p217 = scmp.lt.s32.totalorder %s18, 2
      %s218 = scalar_select %p217, %s18, 2
      %s219 = smul.addr %s218, 3
      %s220 = scalar_lea.vmem %s1, %s219
      %p221 = scmp.lt.s32.totalorder %s18, 2
      %s222 = scalar_select %p221, %s18, 2
      %s223 = scalar_lea.vmem %s2, %s222
      %p224 = scmp.lt.s32.totalorder %s18, 2
      %s225 = scalar_select %p224, %s18, 2
      %p226 = scmp.lt.s32.totalorder %s19, 1
      %s227 = scalar_select %p226, %s19, 1
      %s228 = smul.addr %s225, 2
      %s229 = sadd.s32 %s227, %s228
      %s230 = scalar_lea.vmem %s3, %s229
      %v232 = vld [vmem:[%s216] sm:$0x3]
      %v233 = vld [vmem:[%s220] sm:$0x1]
      %v234 = vld [vmem:[%s220 + $0x1] sm:$0x1]
      %v235 = vld [vmem:[%s220 + $0x2] sm:$0x1]
      %v236 = vld [vmem:[%s223] sm:$0x1]
      %v239 = vunpack.c.l.s4 1983009808
      %v240 = vunpack.c.0.s8 %v239
      %v241 = vlaneseq
      %v242 = vshrl.u32 %v241, 7
      %v243 = vsub.s32 %v240, %v242
      %v244 = vrot.slane %v232, %v243
      %245 = vrot.lane.b32.xlu0 %v244, 1
      %v246 = vpop.permute.xlu0 %245
      %vm247 = vcmask 7168
      %v250 = vsel %vm247, 0, %v246
      %vm251 = vcmask 23552
      %v253 = vsel %vm251, %v234, 0
      %vm255 = vcmask 1040384
      %vm256 = vcmask 1041408
      %v257 = vsel %vm255, 4294967295, 65535
      %v258 = vsel %vm256, %v257, 0
      %v260 = vand.u32 %v232, %v258
      %262 = vmatprep.subr.bf16.mxu0 0
      %263 = vmatpush1.bf16.msra.mxu0 0
      %264 = vmatprep.subr.bf16.mxu0 0
      %265 = vmatpush1.bf16.msra.mxu0 0
      %266 = vmatprep.subr.bf16.mxu0 0
      %267 = vmatpush1.bf16.msra.mxu0 0
      %268 = vmatprep.subr.bf16.mxu0 0
      %269 = vmatpush1.bf16.msra.mxu0 0
      %270 = vmatprep.subr.bf16.mxu0 0
      %271 = vmatpush1.bf16.msra.mxu0 0
      %272 = vmatprep.subr.bf16.mxu0 0
      %273 = vmatpush1.bf16.msra.mxu0 0
      %274 = vmatprep.subr.bf16.mxu0 0
      %275 = vmatpush1.bf16.msra.mxu0 0
      %276 = vmatprep.subr.bf16.mxu0 0
      %277 = vmatpush1.bf16.msra.mxu0 %v260
      %278 = vmatprep.subr.bf16.mxu0 0
      %279 = vmatpush2.bf16.msra.mxu0 0
      %280 = vmatprep.subr.bf16.mxu0 0
      %281 = vmatpush2.bf16.msra.mxu0 0
      %282 = vmatprep.subr.bf16.mxu0 0
      %283 = vmatpush2.bf16.msra.mxu0 0
      %284 = vmatprep.subr.bf16.mxu0 0
      %285 = vmatpush2.bf16.msra.mxu0 0
      %286 = vmatprep.subr.bf16.mxu0 0
      %287 = vmatpush2.bf16.msra.mxu0 0
      %288 = vmatprep.subr.bf16.mxu0 0
      %289 = vmatpush2.bf16.msra.mxu0 0
      %290 = vmatprep.subr.bf16.mxu0 0
      %291 = vmatpush2.bf16.msra.mxu0 0
      %292 = vmatprep.subr.bf16.mxu0 0
      %293 = vmatpush2.bf16.msra.mxu0 0
      %294 = vmatprep.mubr.bf16.mxu0 0
      %295 = vmatmul.mubr.bf16.gmra.mxu0 %v253
      %v296 = vpop.f32.mrf.mxu0
      %v297 = vadd.f32 0.0, %v296
      %v298 = vpop.f32.mrf.mxu0
      %v299 = vpop.f32.mrf.mxu0
      %v300 = vpop.f32.mrf.mxu0
      %301 = vdwg.mxu0
      %v303 = vsel %vm251, %v233, 0
      %v305 = vand.u32 %v250, %v258
      %307 = vmatprep.subr.bf16.mxu0 0
      %308 = vmatpush1.bf16.msra.mxu0 0
      %309 = vmatprep.subr.bf16.mxu0 0
      %310 = vmatpush1.bf16.msra.mxu0 0
      %311 = vmatprep.subr.bf16.mxu0 0
      %312 = vmatpush1.bf16.msra.mxu0 0
      %313 = vmatprep.subr.bf16.mxu0 0
      %314 = vmatpush1.bf16.msra.mxu0 0
      %315 = vmatprep.subr.bf16.mxu0 0
      %316 = vmatpush1.bf16.msra.mxu0 0
      %317 = vmatprep.subr.bf16.mxu0 0
      %318 = vmatpush1.bf16.msra.mxu0 0
      %319 = vmatprep.subr.bf16.mxu0 0
      %320 = vmatpush1.bf16.msra.mxu0 0
      %321 = vmatprep.subr.bf16.mxu0 0
      %322 = vmatpush1.bf16.msra.mxu0 %v305
      %323 = vmatprep.subr.bf16.mxu0 0
      %324 = vmatpush2.bf16.msra.mxu0 0
      %325 = vmatprep.subr.bf16.mxu0 0
      %326 = vmatpush2.bf16.msra.mxu0 0
      %327 = vmatprep.subr.bf16.mxu0 0
      %328 = vmatpush2.bf16.msra.mxu0 0
      %329 = vmatprep.subr.bf16.mxu0 0
      %330 = vmatpush2.bf16.msra.mxu0 0
      %331 = vmatprep.subr.bf16.mxu0 0
      %332 = vmatpush2.bf16.msra.mxu0 0
      %333 = vmatprep.subr.bf16.mxu0 0
      %334 = vmatpush2.bf16.msra.mxu0 0
      %335 = vmatprep.subr.bf16.mxu0 0
      %336 = vmatpush2.bf16.msra.mxu0 0
      %337 = vmatprep.subr.bf16.mxu0 0
      %338 = vmatpush2.bf16.msra.mxu0 0
      %339 = vmatprep.mubr.bf16.mxu0 0
      %340 = vmatmul.mubr.bf16.gmra.mxu0 %v303
      %v341 = vpop.f32.mrf.mxu0
      %v342 = vadd.f32 %v297, %v341
      %v343 = vpop.f32.mrf.mxu0
      %v344 = vpop.f32.mrf.mxu0
      %v345 = vpop.f32.mrf.mxu0
      %346 = vdwg.mxu0
      %347 = vrot.lane.b32.xlu0 %v244, 127
      %v348 = vpop.permute.xlu0 %347
      %vm349 = vcmask 121856
      %v351 = vsel %vm349, %v348, 0
      %v353 = vsel %vm251, %v235, 0
      %v355 = vand.u32 %v351, %v258
      %357 = vmatprep.subr.bf16.mxu0 0
      %358 = vmatpush1.bf16.msra.mxu0 0
      %359 = vmatprep.subr.bf16.mxu0 0
      %360 = vmatpush1.bf16.msra.mxu0 0
      %361 = vmatprep.subr.bf16.mxu0 0
      %362 = vmatpush1.bf16.msra.mxu0 0
      %363 = vmatprep.subr.bf16.mxu0 0
      %364 = vmatpush1.bf16.msra.mxu0 0
      %365 = vmatprep.subr.bf16.mxu0 0
      %366 = vmatpush1.bf16.msra.mxu0 0
      %367 = vmatprep.subr.bf16.mxu0 0
      %368 = vmatpush1.bf16.msra.mxu0 0
      %369 = vmatprep.subr.bf16.mxu0 0
      %370 = vmatpush1.bf16.msra.mxu0 0
      %371 = vmatprep.subr.bf16.mxu0 0
      %372 = vmatpush1.bf16.msra.mxu0 %v355
      %373 = vmatprep.subr.bf16.mxu0 0
      %374 = vmatpush2.bf16.msra.mxu0 0
      %375 = vmatprep.subr.bf16.mxu0 0
      %376 = vmatpush2.bf16.msra.mxu0 0
      %377 = vmatprep.subr.bf16.mxu0 0
      %378 = vmatpush2.bf16.msra.mxu0 0
      %379 = vmatprep.subr.bf16.mxu0 0
      %380 = vmatpush2.bf16.msra.mxu0 0
      %381 = vmatprep.subr.bf16.mxu0 0
      %382 = vmatpush2.bf16.msra.mxu0 0
      %383 = vmatprep.subr.bf16.mxu0 0
      %384 = vmatpush2.bf16.msra.mxu0 0
      %385 = vmatprep.subr.bf16.mxu0 0
      %386 = vmatpush2.bf16.msra.mxu0 0
      %387 = vmatprep.subr.bf16.mxu0 0
      %388 = vmatpush2.bf16.msra.mxu0 0
      %389 = vmatprep.mubr.bf16.mxu0 0
      %390 = vmatmul.mubr.bf16.gmra.mxu0 %v353
      %v391 = vpop.f32.mrf.mxu0
      %v392 = vadd.f32 0.0, %v391
      %v393 = vpop.f32.mrf.mxu0
      %v394 = vpop.f32.mrf.mxu0
      %v395 = vpop.f32.mrf.mxu0
      %396 = vdwg.mxu0
      %v397 = vadd.f32 %v342, %v392
      %399 = vset.pattern.permute.xlu0 0
      %400 = vperm.xlu0 %399, %v236
      %v401 = vpop.permute.xlu0 %400
      %v403 = vlaneseq
      %v404 = vshrl.u32 %v403, 7
      %v405 = vsub.s32 0, %v404
      %v406 = vrot.slane %v401, %v405
      %v407 = vadd.f32 %v397, %v406
      %vm408 = vcmask 122880
      %409 = vst.msk [vmem:[%s230] sm:$0x1] %vm408, %v407
      %p410 = scmp.lt.s32.totalorder %s18, 2
      %s411 = scalar_select %p410, %s18, 2
      %p412 = scmp.lt.s32.totalorder %s19, 1
      %s413 = scalar_select %p412, %s19, 1
      %s414 = smul.addr %s411, 2
      %s415 = sadd.s32 %s413, %s414
      %s416 = scalar_lea.vmem %s3, %s415
      // Predicated region
      $region33: #{glow_network.9} parent=31 // pred_check
        %p417 = pneg %p126
      $region34: #{glow_network.9} parent=31 // pred_check_branch
        %419 = sbr.rel (%p417) target = $region36
      $region35: #{glow_network.9} parent=31 // pred_region
        _
      $region36: #{glow_network.9} parent=31 // pred_fallthru
        _
    $region32: #{glow_network.9} parent=5 // pred_fallthru
      _
    %p420 = scmp.le.s32.totalorder 2, %s9
    // Predicated region
    $region37: #{glow_network.9} parent=5 // pred_check
      %p421 = pneg %p420
    $region38: #{glow_network.9} parent=5 // pred_check_branch
      %423 = sbr.rel (%p421) target = $region40
    $region39: #{glow_network.9} parent=5 // pred_region
      %s424 = ssub.s32 %s9, 2
      // Predicated region
      $region41: #{glow_network.9} parent=39 // pred_check
        %p425 = pneg %p132
      $region42: #{glow_network.9} parent=39 // pred_check_branch
        %427 = sbr.rel (%p425) target = $region44
      $region43: #{glow_network.9} parent=39 // pred_region
        %p428 = scmp.lt.s32.totalorder %s20, 2
        %s429 = scalar_select %p428, %s20, 2
        %p430 = scmp.lt.s32.totalorder %s21, 1
        %s431 = scalar_select %p430, %s21, 1
        %s432 = smul.addr %s429, 2
        %s433 = sadd.s32 %s431, %s432
        %s434 = scalar_lea.vmem %s3, %s433
      $region44: #{glow_network.9} parent=39 // pred_fallthru
        _
    $region40: #{glow_network.9} parent=5 // pred_fallthru
      _
  $region6: #{glow_network.9} parent=0 // loop_footer
    %s13 = sadd.s32 1, %s9
  $region7: #{glow_network.9} parent=0 // loop_footer_branch
    %8 = sbr.rel target = $region3
  $region8: #{glow_network.9} parent=0 // loop_exit
    _

</llo_original>
